<compile_context>
chip_gen: v7x
topology: tpu7x:2x2x1
jax: 0.10.0
libtpu: 0.0.40
codegen_flags: <defaults>
</compile_context>

<pallas_src>
import functools
import math

import jax
import jax.numpy as jnp
from jax.experimental import pallas as pl
from jax.experimental.pallas import tpu as pltpu


def _sigmoid(x):
    return 1.0 / (1.0 + jnp.exp(-x))


# ----------------------------------------------------------------------------
# HW-axis tile pickers
# ----------------------------------------------------------------------------
def _pick_pool_tile(hw, target=4096):
    """Largest multiple of 128 that divides hw, capped at `target`; else hw."""
    if hw <= target or hw % 128 != 0:
        return hw
    t = (target // 128) * 128
    while t >= 128:
        if hw % t == 0:
            return t
        t -= 128
    return hw


def _pick_out_tile(hw, w, target=2048):
    """Output HW tile: multiple of 128 and of w (conv rows never straddle a
    tile), dividing hw, capped at `target`; else hw (no tiling)."""
    if hw <= target:
        return hw
    align = 128 * w // math.gcd(128, w)          # lcm(128, w)
    if hw % align != 0:
        return hw
    t = max((target // align) * align, align)
    while t >= align:
        if hw % t == 0:
            return t
        t -= align
    return hw


# ----------------------------------------------------------------------------
# Kernel 1: global pooling statistics — one HW-tiled read of x.
#   x block (1, C, THW) ->
#     chstat (1, C, 2): [:, 0] = mean over HW, [:, 1] = max over HW
#                       (accumulated across HW tiles in the resident block)
#     spstat (1, 2, THW): [0, :] = mean over C, [1, :] = max over C (per tile)
# ----------------------------------------------------------------------------
def _pool_stats_kernel(x_ref, chstat_ref, spstat_ref, *, inv_c, inv_hw):
    k = pl.program_id(1)
    x = x_ref[0]                                                  # (C, THW)

    # Spatial stats for this HW tile (reduction over channels, fully local).
    spstat_ref[0, 0:1, :] = jnp.sum(x, axis=0, keepdims=True) * inv_c
    spstat_ref[0, 1:2, :] = jnp.max(x, axis=0, keepdims=True)

    # Channel stats accumulate across HW tiles in the resident output block.
    part_avg = jnp.sum(x, axis=1, keepdims=True) * inv_hw        # (C, 1)
    part_max = jnp.max(x, axis=1, keepdims=True)                 # (C, 1)

    @pl.when(k == 0)
    def _():
        chstat_ref[0, :, 0:1] = part_avg
        chstat_ref[0, :, 1:2] = part_max

    @pl.when(k > 0)
    def _():
        chstat_ref[0, :, 0:1] = chstat_ref[0, :, 0:1] + part_avg
        chstat_ref[0, :, 1:2] = jnp.maximum(chstat_ref[0, :, 1:2], part_max)


def pallas_pool_stats(x_nc_hw, pool_tile_target=4096):
    """x:(N, C, HW) -> chstat:(N, C, 2), spstat:(N, 2, HW)."""
    n, c, hw = x_nc_hw.shape
    thw = _pick_pool_tile(hw, pool_tile_target)
    return pl.pallas_call(
        functools.partial(_pool_stats_kernel, inv_c=1.0 / c, inv_hw=1.0 / hw),
        out_shape=(jax.ShapeDtypeStruct((n, c, 2), jnp.float32),
                   jax.ShapeDtypeStruct((n, 2, hw), jnp.float32)),
        grid=(n, hw // thw),
        in_specs=[pl.BlockSpec((1, c, thw), lambda i, k: (i, 0, k))],
        out_specs=(pl.BlockSpec((1, c, 2), lambda i, k: (i, 0, 0)),
                   pl.BlockSpec((1, 2, thw), lambda i, k: (i, 0, k))),
        compiler_params=pltpu.CompilerParams(
            dimension_semantics=("parallel", "arbitrary")),
    )(x_nc_hw)


# ----------------------------------------------------------------------------
# Kernel 2 (fused): channel-attention MLP + 7x7 spatial conv + sigmoid +
# final combine.  The spatial-attention map never leaves VMEM; the only HBM
# write is the lane-dense (C, THW) output tile.
# ----------------------------------------------------------------------------
def _fused_attention_kernel(chstat_ref, sppad_ref, w1_ref, w2_ref, wsa_ref,
                            o_ref, saflat_ref, sqca_ref, *, h, w, ks, thw):
    k = pl.program_id(1)

    @pl.when(k == 0)
    def _():
        # --- channel attention: ca = sigmoid(fc2(relu(fc1(avg))) + fc2(relu(fc1(max)))) ---
        p = chstat_ref[0]                                                 # (C, 2)
        hdn = jnp.maximum(
            jnp.dot(w1_ref[...], p, preferred_element_type=jnp.float32), 0.0)   # (Cr, 2)
        z = jnp.dot(w2_ref[...], hdn, preferred_element_type=jnp.float32)       # (C, 2)
        ca = _sigmoid(z[:, 0:1] + z[:, 1:2])                              # (C, 1)
        sqca_ref[...] = jnp.sqrt(ca)                                      # sqrt(ca), ca >= 0

        # --- spatial attention: k x k conv over the zero-padded [avg; max] maps ---
        acc = jnp.zeros((h, w), jnp.float32)
        for ch in range(2):
            for ki in range(ks):
                band = sppad_ref[0, ch, ki:ki + h, :]                     # (h, w+ks-1), hoisted
                for kj in range(ks):
                    wt = wsa_ref[ch * ks * ks + ki * ks + kj]             # SMEM scalar
                    acc = acc + wt * band[:, kj:kj + w]
        ssa = jnp.sqrt(_sigmoid(acc))                                     # sqrt(sa), (h, w)

        # Pack sqrt(sa) rows into the lane-dense flat tiles used by the output.
        for i in range(h):
            t, off = (i * w) // thw, (i * w) % thw
            saflat_ref[t, 0:1, off:off + w] = ssa[i:i + 1, :]

    # --- combine: sqrt(clamp(ca*sa, 1e-12)) == max(sqrt(ca)*sqrt(sa), 1e-6) ---
    o_ref[0] = jnp.maximum(sqca_ref[...] * saflat_ref[k], 1e-6)


def pallas_fused_attention(chstat, sp_pad, w1, w2, w_sa, h, w,
                           out_tile_target=2048):
    """chstat:(N,C,2), sp_pad:(N,2,H+2p,W+2p) zero-padded maps -> out:(N,C,HW)."""
    n, c, _ = chstat.shape
    cr = w1.shape[0]
    hw = h * w
    ks = w_sa.shape[-1]
    hp, wp = sp_pad.shape[2], sp_pad.shape[3]
    thw = _pick_out_tile(hw, w, out_tile_target)
    t_out = hw // thw
    return pl.pallas_call(
        functools.partial(_fused_attention_kernel, h=h, w=w, ks=ks, thw=thw),
        out_shape=jax.ShapeDtypeStruct((n, c, hw), jnp.float32),
        grid=(n, t_out),
        in_specs=[pl.BlockSpec((1, c, 2), lambda i, k: (i, 0, 0)),
                  pl.BlockSpec((1, 2, hp, wp), lambda i, k: (i, 0, 0, 0)),
                  pl.BlockSpec((cr, c), lambda i, k: (0, 0)),
                  pl.BlockSpec((c, cr), lambda i, k: (0, 0)),
                  pl.BlockSpec(memory_space=pltpu.MemorySpace.SMEM)],
        out_specs=pl.BlockSpec((1, c, thw), lambda i, k: (i, 0, k)),
        scratch_shapes=[pltpu.VMEM((t_out, 1, thw), jnp.float32),   # sqrt(sa) flat tiles
                        pltpu.VMEM((c, 1), jnp.float32)],           # sqrt(ca)
        compiler_params=pltpu.CompilerParams(
            dimension_semantics=("parallel", "arbitrary")),
    )(chstat, sp_pad, w1, w2, w_sa.reshape(-1))


# ----------------------------------------------------------------------------
# CBAM forward (NCHW in / NCHW out, eval semantics of the PyTorch module)
# ----------------------------------------------------------------------------
def cbam_forward(params, x_nchw, *, pool_tile_target=4096, out_tile_target=2048):
    w1, w2, w_sa = params["w1"], params["w2"], params["w_sa"]
    n, c, h, w = x_nchw.shape
    ks = w_sa.shape[-1]
    pad = (ks - 1) // 2
    hw = h * w

    x2 = x_nchw.reshape(n, c, hw)                        # free, contiguous reshape

    # Pass 1: one tiled read of x -> all four global reductions (lane-dense outs).
    chstat, spstat = pallas_pool_stats(x2, pool_tile_target)

    # KB-sized glue: layout + zero-pad of the 2-channel spatial-stat map.
    sp_pad = jnp.pad(spstat.reshape(n, 2, h, w),
                     ((0, 0), (0, 0), (pad, pad), (pad, pad)))

    # Pass 2 (fused): channel MLP + spatial conv + sigmoids + combine;
    # the spatial-attention map never round-trips through HBM.
    out = pallas_fused_attention(chstat, sp_pad, w1, w2, w_sa, h, w,
                                 out_tile_target)
    return out.reshape(n, c, h, w)                       # free reshape


# ----------------------------------------------------------------------------
# Deterministic parameter init (torch Conv2d-like layouts, bias-free)
# ----------------------------------------------------------------------------
def init_cbam_params(key, in_planes, ratio=16, kernel_size=7):
    assert kernel_size in (3, 7), "kernel size must be 3 or 7"
    assert in_planes % ratio == 0 and in_planes // ratio >= 1
    hidden = in_planes // ratio
    k1, k2, k3 = jax.random.split(key, 3)
    w1 = jax.random.normal(k1, (hidden, in_planes), jnp.float32) * jnp.sqrt(2.0 / in_planes)
    w2 = jax.random.normal(k2, (in_planes, hidden), jnp.float32) * jnp.sqrt(2.0 / hidden)
    w_sa = jax.random.normal(k3, (2, kernel_size, kernel_size), jnp.float32) * jnp.sqrt(
        2.0 / (2 * kernel_size * kernel_size))
    return {"w1": w1, "w2": w2, "w_sa": w_sa}


# ----------------------------------------------------------------------------
# Pure-JAX reference (mirrors the PyTorch module) for correctness checking
# ----------------------------------------------------------------------------
def cbam_reference(params, x):
    w1, w2, w_sa = params["w1"], params["w2"], params["w_sa"]
    hi = jax.lax.Precision.HIGHEST
    avg = jnp.mean(x, axis=(2, 3))                       # (N, C)
    mx = jnp.max(x, axis=(2, 3))

    def mlp(v):
        hdn = jnp.maximum(jnp.dot(v, w1.T, precision=hi), 0.0)
        return jnp.dot(hdn, w2.T, precision=hi)

    ca = jax.nn.sigmoid(mlp(avg) + mlp(mx))              # (N, C)
    sp = jnp.stack([jnp.mean(x, axis=1), jnp.max(x, axis=1)], axis=1)   # (N, 2, H, W)
    ks = w_sa.shape[-1]
    pad = (ks - 1) // 2
    conv = jax.lax.conv_general_dilated(
        sp, w_sa[None], (1, 1), ((pad, pad), (pad, pad)),
        dimension_numbers=("NCHW", "OIHW", "NCHW"), precision=hi)
    sa = jax.nn.sigmoid(conv)                            # (N, 1, H, W)
    return jnp.sqrt(jnp.maximum(ca[:, :, None, None] * sa, 1e-12))


if __name__ == "__main__":
    key = jax.random.PRNGKey(0)
    pkey, xkey = jax.random.split(key)
    in_planes, ratio, kernel_size = 64, 16, 7
    params = init_cbam_params(pkey, in_planes, ratio, kernel_size)
    x = jax.random.normal(xkey, (2, in_planes, 16, 16), jnp.float32)

    ref = cbam_reference(params, x)

    # Default tiling (single HW tile at this small size).
    fwd = jax.jit(cbam_forward)
    out = jax.block_until_ready(fwd(params, x))
    assert out.shape == x.shape, out.shape
    assert bool(jnp.all(jnp.isfinite(out)))
    err = float(jnp.max(jnp.abs(out - ref)))
    assert err < 1e-4, f"max abs error vs reference (untiled): {err}"

    # Force multi-tile grids to exercise the HW-tiled accumulator and the
    # per-tile combine paths used at production sizes.
    fwd_tiled = jax.jit(functools.partial(cbam_forward,
                                          pool_tile_target=128,
                                          out_tile_target=128))
    out_t = jax.block_until_ready(fwd_tiled(params, x))
    err_t = float(jnp.max(jnp.abs(out_t - ref)))
    assert err_t < 1e-4, f"max abs error vs reference (tiled): {err_t}"

    print("KERNEL_OK")
</pallas_src>

<mosaic_0001>
module attributes {stable_mosaic.version = 11 : i64} {
  func.func @_pool_stats_kernel(%arg0: i32, %arg1: i32, %arg2: memref<1x64x256xf32, #tpu.memory_space<vmem>>, %arg3: memref<1x64x2xf32, #tpu.memory_space<vmem>>, %arg4: memref<1x2x256xf32, #tpu.memory_space<vmem>>) attributes {dimension_semantics = [#tpu.dimension_semantics<parallel>, #tpu.dimension_semantics<arbitrary>], iteration_bounds = array<i64: 2, 1>, scalar_prefetch = 0 : i64, scratch_operands = 0 : i64, tpu.core_type = #tpu.core_type<tc>, window_params = [{transform_indices = @transform_0, window_bounds = array<i64: 1, 64, 256>}, {transform_indices = @transform_1, window_bounds = array<i64: 1, 64, 2>}, {transform_indices = @transform_2, window_bounds = array<i64: 1, 2, 256>}]} {
    %c0 = arith.constant 0 : index
    %c0_0 = arith.constant 0 : index
    %c0_1 = arith.constant 0 : index
    %0 = vector.load %arg2[%c0, %c0_0, %c0_1] : memref<1x64x256xf32, #tpu.memory_space<vmem>>, vector<1x64x256xf32>
    %1 = vector.shape_cast %0 : vector<1x64x256xf32> to vector<64x256xf32>
    %cst = arith.constant dense<0.000000e+00> : vector<256xf32>
    %2 = vector.multi_reduction <add>, %1, %cst [0] : vector<64x256xf32> to vector<256xf32>
    %3 = vector.shape_cast %2 : vector<256xf32> to vector<1x256xf32>
    %cst_2 = arith.constant 1.562500e-02 : f32
    %4 = vector.broadcast %cst_2 : f32 to vector<1x256xf32>
    %5 = arith.mulf %3, %4 : vector<1x256xf32>
    %c0_3 = arith.constant 0 : index
    %c0_4 = arith.constant 0 : index
    %c0_5 = arith.constant 0 : index
    %6 = vector.load %arg4[%c0_3, %c0_4, %c0_5] : memref<1x2x256xf32, #tpu.memory_space<vmem>>, vector<1x1x256xf32>
    %7 = vector.shape_cast %6 : vector<1x1x256xf32> to vector<1x256xf32>
    %8 = vector.shape_cast %5 : vector<1x256xf32> to vector<1x1x256xf32>
    tpu.vector_store %arg4[%c0_3, %c0_4, %c0_5], %8 {strides = array<i32>} : memref<1x2x256xf32, #tpu.memory_space<vmem>>, vector<1x1x256xf32>,
    %cst_6 = arith.constant dense<0xFF800000> : vector<256xf32>
    %9 = vector.multi_reduction <maximumf>, %1, %cst_6 [0] : vector<64x256xf32> to vector<256xf32>
    %10 = vector.shape_cast %9 : vector<256xf32> to vector<1x256xf32>
    %c0_7 = arith.constant 0 : index
    %c1 = arith.constant 1 : index
    %c0_8 = arith.constant 0 : index
    %11 = vector.load %arg4[%c0_7, %c1, %c0_8] : memref<1x2x256xf32, #tpu.memory_space<vmem>>, vector<1x1x256xf32>
    %12 = vector.shape_cast %11 : vector<1x1x256xf32> to vector<1x256xf32>
    %13 = vector.shape_cast %10 : vector<1x256xf32> to vector<1x1x256xf32>
    tpu.vector_store %arg4[%c0_7, %c1, %c0_8], %13 {strides = array<i32>} : memref<1x2x256xf32, #tpu.memory_space<vmem>>, vector<1x1x256xf32>,
    %cst_9 = arith.constant dense<0.000000e+00> : vector<64xf32>
    %14 = vector.multi_reduction <add>, %1, %cst_9 [1] : vector<64x256xf32> to vector<64xf32>
    %15 = vector.shape_cast %14 : vector<64xf32> to vector<64x1xf32>
    %cst_10 = arith.constant 3.906250e-03 : f32
    %16 = vector.broadcast %cst_10 : f32 to vector<64x1xf32>
    %17 = arith.mulf %15, %16 : vector<64x1xf32>
    %cst_11 = arith.constant dense<0xFF800000> : vector<64xf32>
    %18 = vector.multi_reduction <maximumf>, %1, %cst_11 [1] : vector<64x256xf32> to vector<64xf32>
    %19 = vector.shape_cast %18 : vector<64xf32> to vector<64x1xf32>
    %c0_i32 = arith.constant 0 : i32
    %20 = arith.cmpi eq, %arg1, %c0_i32 : i32
    %21 = arith.extui %20 : i1 to i32
    %c0_i32_12 = arith.constant 0 : i32
    %22 = arith.cmpi ne, %21, %c0_i32_12 : i32
    scf.if %22 {
      %c0_15 = arith.constant 0 : index
      %c0_16 = arith.constant 0 : index
      %c0_17 = arith.constant 0 : index
      %26 = vector.load %arg3[%c0_15, %c0_16, %c0_17] : memref<1x64x2xf32, #tpu.memory_space<vmem>>, vector<1x64x1xf32>
      %27 = vector.shape_cast %26 : vector<1x64x1xf32> to vector<64x1xf32>
      %28 = vector.shape_cast %17 : vector<64x1xf32> to vector<1x64x1xf32>
      tpu.vector_store %arg3[%c0_15, %c0_16, %c0_17], %28 {strides = array<i32>} : memref<1x64x2xf32, #tpu.memory_space<vmem>>, vector<1x64x1xf32>,
      %c0_18 = arith.constant 0 : index
      %c0_19 = arith.constant 0 : index
      %c1_20 = arith.constant 1 : index
      %29 = vector.load %arg3[%c0_18, %c0_19, %c1_20] : memref<1x64x2xf32, #tpu.memory_space<vmem>>, vector<1x64x1xf32>
      %30 = vector.shape_cast %29 : vector<1x64x1xf32> to vector<64x1xf32>
      %31 = vector.shape_cast %19 : vector<64x1xf32> to vector<1x64x1xf32>
      tpu.vector_store %arg3[%c0_18, %c0_19, %c1_20], %31 {strides = array<i32>} : memref<1x64x2xf32, #tpu.memory_space<vmem>>, vector<1x64x1xf32>,
    } else {
    }
    %c0_i32_13 = arith.constant 0 : i32
    %23 = arith.cmpi sgt, %arg1, %c0_i32_13 : i32
    %24 = arith.extui %23 : i1 to i32
    %c0_i32_14 = arith.constant 0 : i32
    %25 = arith.cmpi ne, %24, %c0_i32_14 : i32
    scf.if %25 {
      %c0_15 = arith.constant 0 : index
      %c0_16 = arith.constant 0 : index
      %c0_17 = arith.constant 0 : index
      %26 = vector.load %arg3[%c0_15, %c0_16, %c0_17] : memref<1x64x2xf32, #tpu.memory_space<vmem>>, vector<1x64x1xf32>
      %27 = vector.shape_cast %26 : vector<1x64x1xf32> to vector<64x1xf32>
      %28 = arith.addf %27, %17 : vector<64x1xf32>
      %c0_18 = arith.constant 0 : index
      %c0_19 = arith.constant 0 : index
      %c0_20 = arith.constant 0 : index
      %29 = vector.load %arg3[%c0_18, %c0_19, %c0_20] : memref<1x64x2xf32, #tpu.memory_space<vmem>>, vector<1x64x1xf32>
      %30 = vector.shape_cast %29 : vector<1x64x1xf32> to vector<64x1xf32>
      %31 = vector.shape_cast %28 : vector<64x1xf32> to vector<1x64x1xf32>
      tpu.vector_store %arg3[%c0_18, %c0_19, %c0_20], %31 {strides = array<i32>} : memref<1x64x2xf32, #tpu.memory_space<vmem>>, vector<1x64x1xf32>,
      %c0_21 = arith.constant 0 : index
      %c0_22 = arith.constant 0 : index
      %c1_23 = arith.constant 1 : index
      %32 = vector.load %arg3[%c0_21, %c0_22, %c1_23] : memref<1x64x2xf32, #tpu.memory_space<vmem>>, vector<1x64x1xf32>
      %33 = vector.shape_cast %32 : vector<1x64x1xf32> to vector<64x1xf32>
      %34 = arith.maximumf %33, %19 : vector<64x1xf32>
      %c0_24 = arith.constant 0 : index
      %c0_25 = arith.constant 0 : index
      %c1_26 = arith.constant 1 : index
      %35 = vector.load %arg3[%c0_24, %c0_25, %c1_26] : memref<1x64x2xf32, #tpu.memory_space<vmem>>, vector<1x64x1xf32>
      %36 = vector.shape_cast %35 : vector<1x64x1xf32> to vector<64x1xf32>
      %37 = vector.shape_cast %34 : vector<64x1xf32> to vector<1x64x1xf32>
      tpu.vector_store %arg3[%c0_24, %c0_25, %c1_26], %37 {strides = array<i32>} : memref<1x64x2xf32, #tpu.memory_space<vmem>>, vector<1x64x1xf32>,
    } else {
    }
    return
  }
  func.func @transform_0(%arg0: i32, %arg1: i32) -> (i32, i32, i32) {
    %c0_i32 = arith.constant 0 : i32
    %c0_i32_0 = arith.constant 0 : i32
    return %arg0, %c0_i32, %arg1 : i32, i32, i32
  }
  func.func @transform_1(%arg0: i32, %arg1: i32) -> (i32, i32, i32) {
    %c0_i32 = arith.constant 0 : i32
    %c0_i32_0 = arith.constant 0 : i32
    %c0_i32_1 = arith.constant 0 : i32
    return %arg0, %c0_i32, %c0_i32_0 : i32, i32, i32
  }
  func.func @transform_2(%arg0: i32, %arg1: i32) -> (i32, i32, i32) {
    %c0_i32 = arith.constant 0 : i32
    %c0_i32_0 = arith.constant 0 : i32
    return %arg0, %c0_i32, %arg1 : i32, i32, i32
  }
}

module attributes {stable_mosaic.version = 11 : i64} {
  func.func @_fused_attention_kernel(%arg0: i32, %arg1: i32, %arg2: memref<1x64x2xf32, #tpu.memory_space<vmem>>, %arg3: memref<1x2x22x22xf32, #tpu.memory_space<vmem>>, %arg4: memref<4x64xf32, #tpu.memory_space<vmem>>, %arg5: memref<64x4xf32, #tpu.memory_space<vmem>>, %arg6: memref<98xf32, #tpu.memory_space<smem>>, %arg7: memref<1x64x256xf32, #tpu.memory_space<vmem>>, %arg8: memref<1x1x256xf32, #tpu.memory_space<vmem>>, %arg9: memref<64x1xf32, #tpu.memory_space<vmem>>) attributes {dimension_semantics = [#tpu.dimension_semantics<parallel>, #tpu.dimension_semantics<arbitrary>], iteration_bounds = array<i64: 2, 1>, scalar_prefetch = 0 : i64, scratch_operands = 2 : i64, tpu.core_type = #tpu.core_type<tc>, window_params = [{transform_indices = @transform_0, window_bounds = array<i64: 1, 64, 2>}, {transform_indices = @transform_1, window_bounds = array<i64: 1, 2, 22, 22>}, {pipeline_mode = #tpu.pipeline_mode<synchronous>, transform_indices = @transform_2, window_bounds = array<i64: 4, 64>}, {pipeline_mode = #tpu.pipeline_mode<synchronous>, transform_indices = @transform_3, window_bounds = array<i64: 64, 4>}, {transform_indices = @transform_4, window_bounds = array<i64: 98>}, {transform_indices = @transform_5, window_bounds = array<i64: 1, 64, 256>}]} {
    %c0_i32 = arith.constant 0 : i32
    %0 = arith.cmpi eq, %arg1, %c0_i32 : i32
    %1 = arith.extui %0 : i1 to i32
    %c0_i32_0 = arith.constant 0 : i32
    %2 = arith.cmpi ne, %1, %c0_i32_0 : i32
    scf.if %2 {
      %c0_7 = arith.constant 0 : index
      %c0_8 = arith.constant 0 : index
      %c0_9 = arith.constant 0 : index
      %15 = vector.load %arg2[%c0_7, %c0_8, %c0_9] : memref<1x64x2xf32, #tpu.memory_space<vmem>>, vector<1x64x2xf32>
      %16 = vector.shape_cast %15 : vector<1x64x2xf32> to vector<64x2xf32>
      %c0_10 = arith.constant 0 : index
      %c0_11 = arith.constant 0 : index
      %17 = vector.load %arg4[%c0_10, %c0_11] : memref<4x64xf32, #tpu.memory_space<vmem>>, vector<4x64xf32>
      %cst_12 = arith.constant dense<0.000000e+00> : vector<4x2xf32>
      %18 = tpu.matmul %17, %16, %cst_12 {dimension_numbers = #tpu.dot_dimension_numbers<[1], [0], [0], [1], [0, 0, 1, 1], [], []>} : vector<4x64xf32>, vector<64x2xf32>, vector<4x2xf32> -> vector<4x2xf32>
      %cst_13 = arith.constant 0.000000e+00 : f32
      %19 = vector.broadcast %cst_13 : f32 to vector<4x2xf32>
      %20 = arith.maximumf %18, %19 : vector<4x2xf32>
      %c0_14 = arith.constant 0 : index
      %c0_15 = arith.constant 0 : index
      %21 = vector.load %arg5[%c0_14, %c0_15] : memref<64x4xf32, #tpu.memory_space<vmem>>, vector<64x4xf32>
      %cst_16 = arith.constant dense<0.000000e+00> : vector<64x2xf32>
      %22 = tpu.matmul %21, %20, %cst_16 {dimension_numbers = #tpu.dot_dimension_numbers<[1], [0], [0], [1], [0, 0, 1, 1], [], []>} : vector<64x4xf32>, vector<4x2xf32>, vector<64x2xf32> -> vector<64x2xf32>
      %23 = vector.extract_strided_slice %22 {offsets = [0, 0], sizes = [64, 1], strides = [1, 1]} : vector<64x2xf32> to vector<64x1xf32>
      %24 = vector.extract_strided_slice %22 {offsets = [0, 1], sizes = [64, 1], strides = [1, 1]} : vector<64x2xf32> to vector<64x1xf32>
      %25 = arith.addf %23, %24 : vector<64x1xf32>
      %cst_17 = arith.constant 0.000000e+00 : f32
      %26 = vector.broadcast %cst_17 : f32 to vector<64x1xf32>
      %27 = arith.subf %26, %25 : vector<64x1xf32>
      %28 = math.exp %27 : vector<64x1xf32>
      %cst_18 = arith.constant 1.000000e+00 : f32
      %29 = vector.broadcast %cst_18 : f32 to vector<64x1xf32>
      %30 = arith.addf %29, %28 : vector<64x1xf32>
      %cst_19 = arith.constant 1.000000e+00 : f32
      %31 = vector.broadcast %cst_19 : f32 to vector<64x1xf32>
      %32 = arith.divf %31, %30 : vector<64x1xf32>
      %33 = math.sqrt %32 : vector<64x1xf32>
      %c0_20 = arith.constant 0 : index
      %c0_21 = arith.constant 0 : index
      %34 = vector.load %arg9[%c0_20, %c0_21] : memref<64x1xf32, #tpu.memory_space<vmem>>, vector<64x1xf32>
      tpu.vector_store %arg9[%c0_20, %c0_21], %33 {strides = array<i32>} : memref<64x1xf32, #tpu.memory_space<vmem>>, vector<64x1xf32>,
      %cst_22 = arith.constant 0.000000e+00 : f32
      %35 = vector.broadcast %cst_22 : f32 to vector<16x16xf32>
      %c0_23 = arith.constant 0 : index
      %c0_24 = arith.constant 0 : index
      %c0_25 = arith.constant 0 : index
      %c0_26 = arith.constant 0 : index
      %36 = vector.load %arg3[%c0_23, %c0_24, %c0_25, %c0_26] : memref<1x2x22x22xf32, #tpu.memory_space<vmem>>, vector<1x1x16x22xf32>
      %37 = vector.shape_cast %36 : vector<1x1x16x22xf32> to vector<16x22xf32>
      %c0_27 = arith.constant 0 : index
      %38 = memref.load %arg6[%c0_27] : memref<98xf32, #tpu.memory_space<smem>>
      %39 = vector.extract_strided_slice %37 {offsets = [0, 0], sizes = [16, 16], strides = [1, 1]} : vector<16x22xf32> to vector<16x16xf32>
      %40 = vector.broadcast %38 : f32 to vector<16x16xf32>
      %41 = arith.mulf %40, %39 : vector<16x16xf32>
      %42 = arith.addf %35, %41 : vector<16x16xf32>
      %c1 = arith.constant 1 : index
      %43 = memref.load %arg6[%c1] : memref<98xf32, #tpu.memory_space<smem>>
      %44 = vector.extract_strided_slice %37 {offsets = [0, 1], sizes = [16, 16], strides = [1, 1]} : vector<16x22xf32> to vector<16x16xf32>
      %45 = vector.broadcast %43 : f32 to vector<16x16xf32>
      %46 = arith.mulf %45, %44 : vector<16x16xf32>
      %47 = arith.addf %42, %46 : vector<16x16xf32>
      %c2 = arith.constant 2 : index
      %48 = memref.load %arg6[%c2] : memref<98xf32, #tpu.memory_space<smem>>
      %49 = vector.extract_strided_slice %37 {offsets = [0, 2], sizes = [16, 16], strides = [1, 1]} : vector<16x22xf32> to vector<16x16xf32>
      %50 = vector.broadcast %48 : f32 to vector<16x16xf32>
      %51 = arith.mulf %50, %49 : vector<16x16xf32>
      %52 = arith.addf %47, %51 : vector<16x16xf32>
      %c3 = arith.constant 3 : index
      %53 = memref.load %arg6[%c3] : memref<98xf32, #tpu.memory_space<smem>>
      %54 = vector.extract_strided_slice %37 {offsets = [0, 3], sizes = [16, 16], strides = [1, 1]} : vector<16x22xf32> to vector<16x16xf32>
      %55 = vector.broadcast %53 : f32 to vector<16x16xf32>
      %56 = arith.mulf %55, %54 : vector<16x16xf32>
      %57 = arith.addf %52, %56 : vector<16x16xf32>
      %c4 = arith.constant 4 : index
      %58 = memref.load %arg6[%c4] : memref<98xf32, #tpu.memory_space<smem>>
      %59 = vector.extract_strided_slice %37 {offsets = [0, 4], sizes = [16, 16], strides = [1, 1]} : vector<16x22xf32> to vector<16x16xf32>
      %60 = vector.broadcast %58 : f32 to vector<16x16xf32>
      %61 = arith.mulf %60, %59 : vector<16x16xf32>
      %62 = arith.addf %57, %61 : vector<16x16xf32>
      %c5 = arith.constant 5 : index
      %63 = memref.load %arg6[%c5] : memref<98xf32, #tpu.memory_space<smem>>
      %64 = vector.extract_strided_slice %37 {offsets = [0, 5], sizes = [16, 16], strides = [1, 1]} : vector<16x22xf32> to vector<16x16xf32>
      %65 = vector.broadcast %63 : f32 to vector<16x16xf32>
      %66 = arith.mulf %65, %64 : vector<16x16xf32>
      %67 = arith.addf %62, %66 : vector<16x16xf32>
      %c6 = arith.constant 6 : index
      %68 = memref.load %arg6[%c6] : memref<98xf32, #tpu.memory_space<smem>>
      %69 = vector.extract_strided_slice %37 {offsets = [0, 6], sizes = [16, 16], strides = [1, 1]} : vector<16x22xf32> to vector<16x16xf32>
      %70 = vector.broadcast %68 : f32 to vector<16x16xf32>
      %71 = arith.mulf %70, %69 : vector<16x16xf32>
      %72 = arith.addf %67, %71 : vector<16x16xf32>
      %c0_28 = arith.constant 0 : index
      %c0_29 = arith.constant 0 : index
      %c1_30 = arith.constant 1 : index
      %c0_31 = arith.constant 0 : index
      %73 = vector.load %arg3[%c0_28, %c0_29, %c1_30, %c0_31] : memref<1x2x22x22xf32, #tpu.memory_space<vmem>>, vector<1x1x16x22xf32>
      %74 = vector.shape_cast %73 : vector<1x1x16x22xf32> to vector<16x22xf32>
      %c7 = arith.constant 7 : index
      %75 = memref.load %arg6[%c7] : memref<98xf32, #tpu.memory_space<smem>>
      %76 = vector.extract_strided_slice %74 {offsets = [0, 0], sizes = [16, 16], strides = [1, 1]} : vector<16x22xf32> to vector<16x16xf32>
      %77 = vector.broadcast %75 : f32 to vector<16x16xf32>
      %78 = arith.mulf %77, %76 : vector<16x16xf32>
      %79 = arith.addf %72, %78 : vector<16x16xf32>
      %c8 = arith.constant 8 : index
      %80 = memref.load %arg6[%c8] : memref<98xf32, #tpu.memory_space<smem>>
      %81 = vector.extract_strided_slice %74 {offsets = [0, 1], sizes = [16, 16], strides = [1, 1]} : vector<16x22xf32> to vector<16x16xf32>
      %82 = vector.broadcast %80 : f32 to vector<16x16xf32>
      %83 = arith.mulf %82, %81 : vector<16x16xf32>
      %84 = arith.addf %79, %83 : vector<16x16xf32>
      %c9 = arith.constant 9 : index
      %85 = memref.load %arg6[%c9] : memref<98xf32, #tpu.memory_space<smem>>
      %86 = vector.extract_strided_slice %74 {offsets = [0, 2], sizes = [16, 16], strides = [1, 1]} : vector<16x22xf32> to vector<16x16xf32>
      %87 = vector.broadcast %85 : f32 to vector<16x16xf32>
      %88 = arith.mulf %87, %86 : vector<16x16xf32>
      %89 = arith.addf %84, %88 : vector<16x16xf32>
      %c10 = arith.constant 10 : index
      %90 = memref.load %arg6[%c10] : memref<98xf32, #tpu.memory_space<smem>>
      %91 = vector.extract_strided_slice %74 {offsets = [0, 3], sizes = [16, 16], strides = [1, 1]} : vector<16x22xf32> to vector<16x16xf32>
      %92 = vector.broadcast %90 : f32 to vector<16x16xf32>
      %93 = arith.mulf %92, %91 : vector<16x16xf32>
      %94 = arith.addf %89, %93 : vector<16x16xf32>
      %c11 = arith.constant 11 : index
      %95 = memref.load %arg6[%c11] : memref<98xf32, #tpu.memory_space<smem>>
      %96 = vector.extract_strided_slice %74 {offsets = [0, 4], sizes = [16, 16], strides = [1, 1]} : vector<16x22xf32> to vector<16x16xf32>
      %97 = vector.broadcast %95 : f32 to vector<16x16xf32>
      %98 = arith.mulf %97, %96 : vector<16x16xf32>
      %99 = arith.addf %94, %98 : vector<16x16xf32>
      %c12 = arith.constant 12 : index
      %100 = memref.load %arg6[%c12] : memref<98xf32, #tpu.memory_space<smem>>
      %101 = vector.extract_strided_slice %74 {offsets = [0, 5], sizes = [16, 16], strides = [1, 1]} : vector<16x22xf32> to vector<16x16xf32>
      %102 = vector.broadcast %100 : f32 to vector<16x16xf32>
      %103 = arith.mulf %102, %101 : vector<16x16xf32>
      %104 = arith.addf %99, %103 : vector<16x16xf32>
      %c13 = arith.constant 13 : index
      %105 = memref.load %arg6[%c13] : memref<98xf32, #tpu.memory_space<smem>>
      %106 = vector.extract_strided_slice %74 {offsets = [0, 6], sizes = [16, 16], strides = [1, 1]} : vector<16x22xf32> to vector<16x16xf32>
      %107 = vector.broadcast %105 : f32 to vector<16x16xf32>
      %108 = arith.mulf %107, %106 : vector<16x16xf32>
      %109 = arith.addf %104, %108 : vector<16x16xf32>
      %c0_32 = arith.constant 0 : index
      %c0_33 = arith.constant 0 : index
      %c2_34 = arith.constant 2 : index
      %c0_35 = arith.constant 0 : index
      %110 = vector.load %arg3[%c0_32, %c0_33, %c2_34, %c0_35] : memref<1x2x22x22xf32, #tpu.memory_space<vmem>>, vector<1x1x16x22xf32>
      %111 = vector.shape_cast %110 : vector<1x1x16x22xf32> to vector<16x22xf32>
      %c14 = arith.constant 14 : index
      %112 = memref.load %arg6[%c14] : memref<98xf32, #tpu.memory_space<smem>>
      %113 = vector.extract_strided_slice %111 {offsets = [0, 0], sizes = [16, 16], strides = [1, 1]} : vector<16x22xf32> to vector<16x16xf32>
      %114 = vector.broadcast %112 : f32 to vector<16x16xf32>
      %115 = arith.mulf %114, %113 : vector<16x16xf32>
      %116 = arith.addf %109, %115 : vector<16x16xf32>
      %c15 = arith.constant 15 : index
      %117 = memref.load %arg6[%c15] : memref<98xf32, #tpu.memory_space<smem>>
      %118 = vector.extract_strided_slice %111 {offsets = [0, 1], sizes = [16, 16], strides = [1, 1]} : vector<16x22xf32> to vector<16x16xf32>
      %119 = vector.broadcast %117 : f32 to vector<16x16xf32>
      %120 = arith.mulf %119, %118 : vector<16x16xf32>
      %121 = arith.addf %116, %120 : vector<16x16xf32>
      %c16 = arith.constant 16 : index
      %122 = memref.load %arg6[%c16] : memref<98xf32, #tpu.memory_space<smem>>
      %123 = vector.extract_strided_slice %111 {offsets = [0, 2], sizes = [16, 16], strides = [1, 1]} : vector<16x22xf32> to vector<16x16xf32>
      %124 = vector.broadcast %122 : f32 to vector<16x16xf32>
      %125 = arith.mulf %124, %123 : vector<16x16xf32>
      %126 = arith.addf %121, %125 : vector<16x16xf32>
      %c17 = arith.constant 17 : index
      %127 = memref.load %arg6[%c17] : memref<98xf32, #tpu.memory_space<smem>>
      %128 = vector.extract_strided_slice %111 {offsets = [0, 3], sizes = [16, 16], strides = [1, 1]} : vector<16x22xf32> to vector<16x16xf32>
      %129 = vector.broadcast %127 : f32 to vector<16x16xf32>
      %130 = arith.mulf %129, %128 : vector<16x16xf32>
      %131 = arith.addf %126, %130 : vector<16x16xf32>
      %c18 = arith.constant 18 : index
      %132 = memref.load %arg6[%c18] : memref<98xf32, #tpu.memory_space<smem>>
      %133 = vector.extract_strided_slice %111 {offsets = [0, 4], sizes = [16, 16], strides = [1, 1]} : vector<16x22xf32> to vector<16x16xf32>
      %134 = vector.broadcast %132 : f32 to vector<16x16xf32>
      %135 = arith.mulf %134, %133 : vector<16x16xf32>
      %136 = arith.addf %131, %135 : vector<16x16xf32>
      %c19 = arith.constant 19 : index
      %137 = memref.load %arg6[%c19] : memref<98xf32, #tpu.memory_space<smem>>
      %138 = vector.extract_strided_slice %111 {offsets = [0, 5], sizes = [16, 16], strides = [1, 1]} : vector<16x22xf32> to vector<16x16xf32>
      %139 = vector.broadcast %137 : f32 to vector<16x16xf32>
      %140 = arith.mulf %139, %138 : vector<16x16xf32>
      %141 = arith.addf %136, %140 : vector<16x16xf32>
      %c20 = arith.constant 20 : index
      %142 = memref.load %arg6[%c20] : memref<98xf32, #tpu.memory_space<smem>>
      %143 = vector.extract_strided_slice %111 {offsets = [0, 6], sizes = [16, 16], strides = [1, 1]} : vector<16x22xf32> to vector<16x16xf32>
      %144 = vector.broadcast %142 : f32 to vector<16x16xf32>
      %145 = arith.mulf %144, %143 : vector<16x16xf32>
      %146 = arith.addf %141, %145 : vector<16x16xf32>
      %c0_36 = arith.constant 0 : index
      %c0_37 = arith.constant 0 : index
      %c3_38 = arith.constant 3 : index
      %c0_39 = arith.constant 0 : index
      %147 = vector.load %arg3[%c0_36, %c0_37, %c3_38, %c0_39] : memref<1x2x22x22xf32, #tpu.memory_space<vmem>>, vector<1x1x16x22xf32>
      %148 = vector.shape_cast %147 : vector<1x1x16x22xf32> to vector<16x22xf32>
      %c21 = arith.constant 21 : index
      %149 = memref.load %arg6[%c21] : memref<98xf32, #tpu.memory_space<smem>>
      %150 = vector.extract_strided_slice %148 {offsets = [0, 0], sizes = [16, 16], strides = [1, 1]} : vector<16x22xf32> to vector<16x16xf32>
      %151 = vector.broadcast %149 : f32 to vector<16x16xf32>
      %152 = arith.mulf %151, %150 : vector<16x16xf32>
      %153 = arith.addf %146, %152 : vector<16x16xf32>
      %c22 = arith.constant 22 : index
      %154 = memref.load %arg6[%c22] : memref<98xf32, #tpu.memory_space<smem>>
      %155 = vector.extract_strided_slice %148 {offsets = [0, 1], sizes = [16, 16], strides = [1, 1]} : vector<16x22xf32> to vector<16x16xf32>
      %156 = vector.broadcast %154 : f32 to vector<16x16xf32>
      %157 = arith.mulf %156, %155 : vector<16x16xf32>
      %158 = arith.addf %153, %157 : vector<16x16xf32>
      %c23 = arith.constant 23 : index
      %159 = memref.load %arg6[%c23] : memref<98xf32, #tpu.memory_space<smem>>
      %160 = vector.extract_strided_slice %148 {offsets = [0, 2], sizes = [16, 16], strides = [1, 1]} : vector<16x22xf32> to vector<16x16xf32>
      %161 = vector.broadcast %159 : f32 to vector<16x16xf32>
      %162 = arith.mulf %161, %160 : vector<16x16xf32>
      %163 = arith.addf %158, %162 : vector<16x16xf32>
      %c24 = arith.constant 24 : index
      %164 = memref.load %arg6[%c24] : memref<98xf32, #tpu.memory_space<smem>>
      %165 = vector.extract_strided_slice %148 {offsets = [0, 3], sizes = [16, 16], strides = [1, 1]} : vector<16x22xf32> to vector<16x16xf32>
      %166 = vector.broadcast %164 : f32 to vector<16x16xf32>
      %167 = arith.mulf %166, %165 : vector<16x16xf32>
      %168 = arith.addf %163, %167 : vector<16x16xf32>
      %c25 = arith.constant 25 : index
      %169 = memref.load %arg6[%c25] : memref<98xf32, #tpu.memory_space<smem>>
      %170 = vector.extract_strided_slice %148 {offsets = [0, 4], sizes = [16, 16], strides = [1, 1]} : vector<16x22xf32> to vector<16x16xf32>
      %171 = vector.broadcast %169 : f32 to vector<16x16xf32>
      %172 = arith.mulf %171, %170 : vector<16x16xf32>
      %173 = arith.addf %168, %172 : vector<16x16xf32>
      %c26 = arith.constant 26 : index
      %174 = memref.load %arg6[%c26] : memref<98xf32, #tpu.memory_space<smem>>
      %175 = vector.extract_strided_slice %148 {offsets = [0, 5], sizes = [16, 16], strides = [1, 1]} : vector<16x22xf32> to vector<16x16xf32>
      %176 = vector.broadcast %174 : f32 to vector<16x16xf32>
      %177 = arith.mulf %176, %175 : vector<16x16xf32>
      %178 = arith.addf %173, %177 : vector<16x16xf32>
      %c27 = arith.constant 27 : index
      %179 = memref.load %arg6[%c27] : memref<98xf32, #tpu.memory_space<smem>>
      %180 = vector.extract_strided_slice %148 {offsets = [0, 6], sizes = [16, 16], strides = [1, 1]} : vector<16x22xf32> to vector<16x16xf32>
      %181 = vector.broadcast %179 : f32 to vector<16x16xf32>
      %182 = arith.mulf %181, %180 : vector<16x16xf32>
      %183 = arith.addf %178, %182 : vector<16x16xf32>
      %c0_40 = arith.constant 0 : index
      %c0_41 = arith.constant 0 : index
      %c4_42 = arith.constant 4 : index
      %c0_43 = arith.constant 0 : index
      %184 = vector.load %arg3[%c0_40, %c0_41, %c4_42, %c0_43] : memref<1x2x22x22xf32, #tpu.memory_space<vmem>>, vector<1x1x16x22xf32>
      %185 = vector.shape_cast %184 : vector<1x1x16x22xf32> to vector<16x22xf32>
      %c28 = arith.constant 28 : index
      %186 = memref.load %arg6[%c28] : memref<98xf32, #tpu.memory_space<smem>>
      %187 = vector.extract_strided_slice %185 {offsets = [0, 0], sizes = [16, 16], strides = [1, 1]} : vector<16x22xf32> to vector<16x16xf32>
      %188 = vector.broadcast %186 : f32 to vector<16x16xf32>
      %189 = arith.mulf %188, %187 : vector<16x16xf32>
      %190 = arith.addf %183, %189 : vector<16x16xf32>
      %c29 = arith.constant 29 : index
      %191 = memref.load %arg6[%c29] : memref<98xf32, #tpu.memory_space<smem>>
      %192 = vector.extract_strided_slice %185 {offsets = [0, 1], sizes = [16, 16], strides = [1, 1]} : vector<16x22xf32> to vector<16x16xf32>
      %193 = vector.broadcast %191 : f32 to vector<16x16xf32>
      %194 = arith.mulf %193, %192 : vector<16x16xf32>
      %195 = arith.addf %190, %194 : vector<16x16xf32>
      %c30 = arith.constant 30 : index
      %196 = memref.load %arg6[%c30] : memref<98xf32, #tpu.memory_space<smem>>
      %197 = vector.extract_strided_slice %185 {offsets = [0, 2], sizes = [16, 16], strides = [1, 1]} : vector<16x22xf32> to vector<16x16xf32>
      %198 = vector.broadcast %196 : f32 to vector<16x16xf32>
      %199 = arith.mulf %198, %197 : vector<16x16xf32>
      %200 = arith.addf %195, %199 : vector<16x16xf32>
      %c31 = arith.constant 31 : index
      %201 = memref.load %arg6[%c31] : memref<98xf32, #tpu.memory_space<smem>>
      %202 = vector.extract_strided_slice %185 {offsets = [0, 3], sizes = [16, 16], strides = [1, 1]} : vector<16x22xf32> to vector<16x16xf32>
      %203 = vector.broadcast %201 : f32 to vector<16x16xf32>
      %204 = arith.mulf %203, %202 : vector<16x16xf32>
      %205 = arith.addf %200, %204 : vector<16x16xf32>
      %c32 = arith.constant 32 : index
      %206 = memref.load %arg6[%c32] : memref<98xf32, #tpu.memory_space<smem>>
      %207 = vector.extract_strided_slice %185 {offsets = [0, 4], sizes = [16, 16], strides = [1, 1]} : vector<16x22xf32> to vector<16x16xf32>
      %208 = vector.broadcast %206 : f32 to vector<16x16xf32>
      %209 = arith.mulf %208, %207 : vector<16x16xf32>
      %210 = arith.addf %205, %209 : vector<16x16xf32>
      %c33 = arith.constant 33 : index
      %211 = memref.load %arg6[%c33] : memref<98xf32, #tpu.memory_space<smem>>
      %212 = vector.extract_strided_slice %185 {offsets = [0, 5], sizes = [16, 16], strides = [1, 1]} : vector<16x22xf32> to vector<16x16xf32>
      %213 = vector.broadcast %211 : f32 to vector<16x16xf32>
      %214 = arith.mulf %213, %212 : vector<16x16xf32>
      %215 = arith.addf %210, %214 : vector<16x16xf32>
      %c34 = arith.constant 34 : index
      %216 = memref.load %arg6[%c34] : memref<98xf32, #tpu.memory_space<smem>>
      %217 = vector.extract_strided_slice %185 {offsets = [0, 6], sizes = [16, 16], strides = [1, 1]} : vector<16x22xf32> to vector<16x16xf32>
      %218 = vector.broadcast %216 : f32 to vector<16x16xf32>
      %219 = arith.mulf %218, %217 : vector<16x16xf32>
      %220 = arith.addf %215, %219 : vector<16x16xf32>
      %c0_44 = arith.constant 0 : index
      %c0_45 = arith.constant 0 : index
      %c5_46 = arith.constant 5 : index
      %c0_47 = arith.constant 0 : index
      %221 = vector.load %arg3[%c0_44, %c0_45, %c5_46, %c0_47] : memref<1x2x22x22xf32, #tpu.memory_space<vmem>>, vector<1x1x16x22xf32>
      %222 = vector.shape_cast %221 : vector<1x1x16x22xf32> to vector<16x22xf32>
      %c35 = arith.constant 35 : index
      %223 = memref.load %arg6[%c35] : memref<98xf32, #tpu.memory_space<smem>>
      %224 = vector.extract_strided_slice %222 {offsets = [0, 0], sizes = [16, 16], strides = [1, 1]} : vector<16x22xf32> to vector<16x16xf32>
      %225 = vector.broadcast %223 : f32 to vector<16x16xf32>
      %226 = arith.mulf %225, %224 : vector<16x16xf32>
      %227 = arith.addf %220, %226 : vector<16x16xf32>
      %c36 = arith.constant 36 : index
      %228 = memref.load %arg6[%c36] : memref<98xf32, #tpu.memory_space<smem>>
      %229 = vector.extract_strided_slice %222 {offsets = [0, 1], sizes = [16, 16], strides = [1, 1]} : vector<16x22xf32> to vector<16x16xf32>
      %230 = vector.broadcast %228 : f32 to vector<16x16xf32>
      %231 = arith.mulf %230, %229 : vector<16x16xf32>
      %232 = arith.addf %227, %231 : vector<16x16xf32>
      %c37 = arith.constant 37 : index
      %233 = memref.load %arg6[%c37] : memref<98xf32, #tpu.memory_space<smem>>
      %234 = vector.extract_strided_slice %222 {offsets = [0, 2], sizes = [16, 16], strides = [1, 1]} : vector<16x22xf32> to vector<16x16xf32>
      %235 = vector.broadcast %233 : f32 to vector<16x16xf32>
      %236 = arith.mulf %235, %234 : vector<16x16xf32>
      %237 = arith.addf %232, %236 : vector<16x16xf32>
      %c38 = arith.constant 38 : index
      %238 = memref.load %arg6[%c38] : memref<98xf32, #tpu.memory_space<smem>>
      %239 = vector.extract_strided_slice %222 {offsets = [0, 3], sizes = [16, 16], strides = [1, 1]} : vector<16x22xf32> to vector<16x16xf32>
      %240 = vector.broadcast %238 : f32 to vector<16x16xf32>
      %241 = arith.mulf %240, %239 : vector<16x16xf32>
      %242 = arith.addf %237, %241 : vector<16x16xf32>
      %c39 = arith.constant 39 : index
      %243 = memref.load %arg6[%c39] : memref<98xf32, #tpu.memory_space<smem>>
      %244 = vector.extract_strided_slice %222 {offsets = [0, 4], sizes = [16, 16], strides = [1, 1]} : vector<16x22xf32> to vector<16x16xf32>
      %245 = vector.broadcast %243 : f32 to vector<16x16xf32>
      %246 = arith.mulf %245, %244 : vector<16x16xf32>
      %247 = arith.addf %242, %246 : vector<16x16xf32>
      %c40 = arith.constant 40 : index
      %248 = memref.load %arg6[%c40] : memref<98xf32, #tpu.memory_space<smem>>
      %249 = vector.extract_strided_slice %222 {offsets = [0, 5], sizes = [16, 16], strides = [1, 1]} : vector<16x22xf32> to vector<16x16xf32>
      %250 = vector.broadcast %248 : f32 to vector<16x16xf32>
      %251 = arith.mulf %250, %249 : vector<16x16xf32>
      %252 = arith.addf %247, %251 : vector<16x16xf32>
      %c41 = arith.constant 41 : index
      %253 = memref.load %arg6[%c41] : memref<98xf32, #tpu.memory_space<smem>>
      %254 = vector.extract_strided_slice %222 {offsets = [0, 6], sizes = [16, 16], strides = [1, 1]} : vector<16x22xf32> to vector<16x16xf32>
      %255 = vector.broadcast %253 : f32 to vector<16x16xf32>
      %256 = arith.mulf %255, %254 : vector<16x16xf32>
      %257 = arith.addf %252, %256 : vector<16x16xf32>
      %c0_48 = arith.constant 0 : index
      %c0_49 = arith.constant 0 : index
      %c6_50 = arith.constant 6 : index
      %c0_51 = arith.constant 0 : index
      %258 = vector.load %arg3[%c0_48, %c0_49, %c6_50, %c0_51] : memref<1x2x22x22xf32, #tpu.memory_space<vmem>>, vector<1x1x16x22xf32>
      %259 = vector.shape_cast %258 : vector<1x1x16x22xf32> to vector<16x22xf32>
      %c42 = arith.constant 42 : index
      %260 = memref.load %arg6[%c42] : memref<98xf32, #tpu.memory_space<smem>>
      %261 = vector.extract_strided_slice %259 {offsets = [0, 0], sizes = [16, 16], strides = [1, 1]} : vector<16x22xf32> to vector<16x16xf32>
      %262 = vector.broadcast %260 : f32 to vector<16x16xf32>
      %263 = arith.mulf %262, %261 : vector<16x16xf32>
      %264 = arith.addf %257, %263 : vector<16x16xf32>
      %c43 = arith.constant 43 : index
      %265 = memref.load %arg6[%c43] : memref<98xf32, #tpu.memory_space<smem>>
      %266 = vector.extract_strided_slice %259 {offsets = [0, 1], sizes = [16, 16], strides = [1, 1]} : vector<16x22xf32> to vector<16x16xf32>
      %267 = vector.broadcast %265 : f32 to vector<16x16xf32>
      %268 = arith.mulf %267, %266 : vector<16x16xf32>
      %269 = arith.addf %264, %268 : vector<16x16xf32>
      %c44 = arith.constant 44 : index
      %270 = memref.load %arg6[%c44] : memref<98xf32, #tpu.memory_space<smem>>
      %271 = vector.extract_strided_slice %259 {offsets = [0, 2], sizes = [16, 16], strides = [1, 1]} : vector<16x22xf32> to vector<16x16xf32>
      %272 = vector.broadcast %270 : f32 to vector<16x16xf32>
      %273 = arith.mulf %272, %271 : vector<16x16xf32>
      %274 = arith.addf %269, %273 : vector<16x16xf32>
      %c45 = arith.constant 45 : index
      %275 = memref.load %arg6[%c45] : memref<98xf32, #tpu.memory_space<smem>>
      %276 = vector.extract_strided_slice %259 {offsets = [0, 3], sizes = [16, 16], strides = [1, 1]} : vector<16x22xf32> to vector<16x16xf32>
      %277 = vector.broadcast %275 : f32 to vector<16x16xf32>
      %278 = arith.mulf %277, %276 : vector<16x16xf32>
      %279 = arith.addf %274, %278 : vector<16x16xf32>
      %c46 = arith.constant 46 : index
      %280 = memref.load %arg6[%c46] : memref<98xf32, #tpu.memory_space<smem>>
      %281 = vector.extract_strided_slice %259 {offsets = [0, 4], sizes = [16, 16], strides = [1, 1]} : vector<16x22xf32> to vector<16x16xf32>
      %282 = vector.broadcast %280 : f32 to vector<16x16xf32>
      %283 = arith.mulf %282, %281 : vector<16x16xf32>
      %284 = arith.addf %279, %283 : vector<16x16xf32>
      %c47 = arith.constant 47 : index
      %285 = memref.load %arg6[%c47] : memref<98xf32, #tpu.memory_space<smem>>
      %286 = vector.extract_strided_slice %259 {offsets = [0, 5], sizes = [16, 16], strides = [1, 1]} : vector<16x22xf32> to vector<16x16xf32>
      %287 = vector.broadcast %285 : f32 to vector<16x16xf32>
      %288 = arith.mulf %287, %286 : vector<16x16xf32>
      %289 = arith.addf %284, %288 : vector<16x16xf32>
      %c48 = arith.constant 48 : index
      %290 = memref.load %arg6[%c48] : memref<98xf32, #tpu.memory_space<smem>>
      %291 = vector.extract_strided_slice %259 {offsets = [0, 6], sizes = [16, 16], strides = [1, 1]} : vector<16x22xf32> to vector<16x16xf32>
      %292 = vector.broadcast %290 : f32 to vector<16x16xf32>
      %293 = arith.mulf %292, %291 : vector<16x16xf32>
      %294 = arith.addf %289, %293 : vector<16x16xf32>
      %c0_52 = arith.constant 0 : index
      %c1_53 = arith.constant 1 : index
      %c0_54 = arith.constant 0 : index
      %c0_55 = arith.constant 0 : index
      %295 = vector.load %arg3[%c0_52, %c1_53, %c0_54, %c0_55] : memref<1x2x22x22xf32, #tpu.memory_space<vmem>>, vector<1x1x16x22xf32>
      %296 = vector.shape_cast %295 : vector<1x1x16x22xf32> to vector<16x22xf32>
      %c49 = arith.constant 49 : index
      %297 = memref.load %arg6[%c49] : memref<98xf32, #tpu.memory_space<smem>>
      %298 = vector.extract_strided_slice %296 {offsets = [0, 0], sizes = [16, 16], strides = [1, 1]} : vector<16x22xf32> to vector<16x16xf32>
      %299 = vector.broadcast %297 : f32 to vector<16x16xf32>
      %300 = arith.mulf %299, %298 : vector<16x16xf32>
      %301 = arith.addf %294, %300 : vector<16x16xf32>
      %c50 = arith.constant 50 : index
      %302 = memref.load %arg6[%c50] : memref<98xf32, #tpu.memory_space<smem>>
      %303 = vector.extract_strided_slice %296 {offsets = [0, 1], sizes = [16, 16], strides = [1, 1]} : vector<16x22xf32> to vector<16x16xf32>
      %304 = vector.broadcast %302 : f32 to vector<16x16xf32>
      %305 = arith.mulf %304, %303 : vector<16x16xf32>
      %306 = arith.addf %301, %305 : vector<16x16xf32>
      %c51 = arith.constant 51 : index
      %307 = memref.load %arg6[%c51] : memref<98xf32, #tpu.memory_space<smem>>
      %308 = vector.extract_strided_slice %296 {offsets = [0, 2], sizes = [16, 16], strides = [1, 1]} : vector<16x22xf32> to vector<16x16xf32>
      %309 = vector.broadcast %307 : f32 to vector<16x16xf32>
      %310 = arith.mulf %309, %308 : vector<16x16xf32>
      %311 = arith.addf %306, %310 : vector<16x16xf32>
      %c52 = arith.constant 52 : index
      %312 = memref.load %arg6[%c52] : memref<98xf32, #tpu.memory_space<smem>>
      %313 = vector.extract_strided_slice %296 {offsets = [0, 3], sizes = [16, 16], strides = [1, 1]} : vector<16x22xf32> to vector<16x16xf32>
      %314 = vector.broadcast %312 : f32 to vector<16x16xf32>
      %315 = arith.mulf %314, %313 : vector<16x16xf32>
      %316 = arith.addf %311, %315 : vector<16x16xf32>
      %c53 = arith.constant 53 : index
      %317 = memref.load %arg6[%c53] : memref<98xf32, #tpu.memory_space<smem>>
      %318 = vector.extract_strided_slice %296 {offsets = [0, 4], sizes = [16, 16], strides = [1, 1]} : vector<16x22xf32> to vector<16x16xf32>
      %319 = vector.broadcast %317 : f32 to vector<16x16xf32>
      %320 = arith.mulf %319, %318 : vector<16x16xf32>
      %321 = arith.addf %316, %320 : vector<16x16xf32>
      %c54 = arith.constant 54 : index
      %322 = memref.load %arg6[%c54] : memref<98xf32, #tpu.memory_space<smem>>
      %323 = vector.extract_strided_slice %296 {offsets = [0, 5], sizes = [16, 16], strides = [1, 1]} : vector<16x22xf32> to vector<16x16xf32>
      %324 = vector.broadcast %322 : f32 to vector<16x16xf32>
      %325 = arith.mulf %324, %323 : vector<16x16xf32>
      %326 = arith.addf %321, %325 : vector<16x16xf32>
      %c55 = arith.constant 55 : index
      %327 = memref.load %arg6[%c55] : memref<98xf32, #tpu.memory_space<smem>>
      %328 = vector.extract_strided_slice %296 {offsets = [0, 6], sizes = [16, 16], strides = [1, 1]} : vector<16x22xf32> to vector<16x16xf32>
      %329 = vector.broadcast %327 : f32 to vector<16x16xf32>
      %330 = arith.mulf %329, %328 : vector<16x16xf32>
      %331 = arith.addf %326, %330 : vector<16x16xf32>
      %c0_56 = arith.constant 0 : index
      %c1_57 = arith.constant 1 : index
      %c1_58 = arith.constant 1 : index
      %c0_59 = arith.constant 0 : index
      %332 = vector.load %arg3[%c0_56, %c1_57, %c1_58, %c0_59] : memref<1x2x22x22xf32, #tpu.memory_space<vmem>>, vector<1x1x16x22xf32>
      %333 = vector.shape_cast %332 : vector<1x1x16x22xf32> to vector<16x22xf32>
      %c56 = arith.constant 56 : index
      %334 = memref.load %arg6[%c56] : memref<98xf32, #tpu.memory_space<smem>>
      %335 = vector.extract_strided_slice %333 {offsets = [0, 0], sizes = [16, 16], strides = [1, 1]} : vector<16x22xf32> to vector<16x16xf32>
      %336 = vector.broadcast %334 : f32 to vector<16x16xf32>
      %337 = arith.mulf %336, %335 : vector<16x16xf32>
      %338 = arith.addf %331, %337 : vector<16x16xf32>
      %c57 = arith.constant 57 : index
      %339 = memref.load %arg6[%c57] : memref<98xf32, #tpu.memory_space<smem>>
      %340 = vector.extract_strided_slice %333 {offsets = [0, 1], sizes = [16, 16], strides = [1, 1]} : vector<16x22xf32> to vector<16x16xf32>
      %341 = vector.broadcast %339 : f32 to vector<16x16xf32>
      %342 = arith.mulf %341, %340 : vector<16x16xf32>
      %343 = arith.addf %338, %342 : vector<16x16xf32>
      %c58 = arith.constant 58 : index
      %344 = memref.load %arg6[%c58] : memref<98xf32, #tpu.memory_space<smem>>
      %345 = vector.extract_strided_slice %333 {offsets = [0, 2], sizes = [16, 16], strides = [1, 1]} : vector<16x22xf32> to vector<16x16xf32>
      %346 = vector.broadcast %344 : f32 to vector<16x16xf32>
      %347 = arith.mulf %346, %345 : vector<16x16xf32>
      %348 = arith.addf %343, %347 : vector<16x16xf32>
      %c59 = arith.constant 59 : index
      %349 = memref.load %arg6[%c59] : memref<98xf32, #tpu.memory_space<smem>>
      %350 = vector.extract_strided_slice %333 {offsets = [0, 3], sizes = [16, 16], strides = [1, 1]} : vector<16x22xf32> to vector<16x16xf32>
      %351 = vector.broadcast %349 : f32 to vector<16x16xf32>
      %352 = arith.mulf %351, %350 : vector<16x16xf32>
      %353 = arith.addf %348, %352 : vector<16x16xf32>
      %c60 = arith.constant 60 : index
      %354 = memref.load %arg6[%c60] : memref<98xf32, #tpu.memory_space<smem>>
      %355 = vector.extract_strided_slice %333 {offsets = [0, 4], sizes = [16, 16], strides = [1, 1]} : vector<16x22xf32> to vector<16x16xf32>
      %356 = vector.broadcast %354 : f32 to vector<16x16xf32>
      %357 = arith.mulf %356, %355 : vector<16x16xf32>
      %358 = arith.addf %353, %357 : vector<16x16xf32>
      %c61 = arith.constant 61 : index
      %359 = memref.load %arg6[%c61] : memref<98xf32, #tpu.memory_space<smem>>
      %360 = vector.extract_strided_slice %333 {offsets = [0, 5], sizes = [16, 16], strides = [1, 1]} : vector<16x22xf32> to vector<16x16xf32>
      %361 = vector.broadcast %359 : f32 to vector<16x16xf32>
      %362 = arith.mulf %361, %360 : vector<16x16xf32>
      %363 = arith.addf %358, %362 : vector<16x16xf32>
      %c62 = arith.constant 62 : index
      %364 = memref.load %arg6[%c62] : memref<98xf32, #tpu.memory_space<smem>>
      %365 = vector.extract_strided_slice %333 {offsets = [0, 6], sizes = [16, 16], strides = [1, 1]} : vector<16x22xf32> to vector<16x16xf32>
      %366 = vector.broadcast %364 : f32 to vector<16x16xf32>
      %367 = arith.mulf %366, %365 : vector<16x16xf32>
      %368 = arith.addf %363, %367 : vector<16x16xf32>
      %c0_60 = arith.constant 0 : index
      %c1_61 = arith.constant 1 : index
      %c2_62 = arith.constant 2 : index
      %c0_63 = arith.constant 0 : index
      %369 = vector.load %arg3[%c0_60, %c1_61, %c2_62, %c0_63] : memref<1x2x22x22xf32, #tpu.memory_space<vmem>>, vector<1x1x16x22xf32>
      %370 = vector.shape_cast %369 : vector<1x1x16x22xf32> to vector<16x22xf32>
      %c63 = arith.constant 63 : index
      %371 = memref.load %arg6[%c63] : memref<98xf32, #tpu.memory_space<smem>>
      %372 = vector.extract_strided_slice %370 {offsets = [0, 0], sizes = [16, 16], strides = [1, 1]} : vector<16x22xf32> to vector<16x16xf32>
      %373 = vector.broadcast %371 : f32 to vector<16x16xf32>
      %374 = arith.mulf %373, %372 : vector<16x16xf32>
      %375 = arith.addf %368, %374 : vector<16x16xf32>
      %c64 = arith.constant 64 : index
      %376 = memref.load %arg6[%c64] : memref<98xf32, #tpu.memory_space<smem>>
      %377 = vector.extract_strided_slice %370 {offsets = [0, 1], sizes = [16, 16], strides = [1, 1]} : vector<16x22xf32> to vector<16x16xf32>
      %378 = vector.broadcast %376 : f32 to vector<16x16xf32>
      %379 = arith.mulf %378, %377 : vector<16x16xf32>
      %380 = arith.addf %375, %379 : vector<16x16xf32>
      %c65 = arith.constant 65 : index
      %381 = memref.load %arg6[%c65] : memref<98xf32, #tpu.memory_space<smem>>
      %382 = vector.extract_strided_slice %370 {offsets = [0, 2], sizes = [16, 16], strides = [1, 1]} : vector<16x22xf32> to vector<16x16xf32>
      %383 = vector.broadcast %381 : f32 to vector<16x16xf32>
      %384 = arith.mulf %383, %382 : vector<16x16xf32>
      %385 = arith.addf %380, %384 : vector<16x16xf32>
      %c66 = arith.constant 66 : index
      %386 = memref.load %arg6[%c66] : memref<98xf32, #tpu.memory_space<smem>>
      %387 = vector.extract_strided_slice %370 {offsets = [0, 3], sizes = [16, 16], strides = [1, 1]} : vector<16x22xf32> to vector<16x16xf32>
      %388 = vector.broadcast %386 : f32 to vector<16x16xf32>
      %389 = arith.mulf %388, %387 : vector<16x16xf32>
      %390 = arith.addf %385, %389 : vector<16x16xf32>
      %c67 = arith.constant 67 : index
      %391 = memref.load %arg6[%c67] : memref<98xf32, #tpu.memory_space<smem>>
      %392 = vector.extract_strided_slice %370 {offsets = [0, 4], sizes = [16, 16], strides = [1, 1]} : vector<16x22xf32> to vector<16x16xf32>
      %393 = vector.broadcast %391 : f32 to vector<16x16xf32>
      %394 = arith.mulf %393, %392 : vector<16x16xf32>
      %395 = arith.addf %390, %394 : vector<16x16xf32>
      %c68 = arith.constant 68 : index
      %396 = memref.load %arg6[%c68] : memref<98xf32, #tpu.memory_space<smem>>
      %397 = vector.extract_strided_slice %370 {offsets = [0, 5], sizes = [16, 16], strides = [1, 1]} : vector<16x22xf32> to vector<16x16xf32>
      %398 = vector.broadcast %396 : f32 to vector<16x16xf32>
      %399 = arith.mulf %398, %397 : vector<16x16xf32>
      %400 = arith.addf %395, %399 : vector<16x16xf32>
      %c69 = arith.constant 69 : index
      %401 = memref.load %arg6[%c69] : memref<98xf32, #tpu.memory_space<smem>>
      %402 = vector.extract_strided_slice %370 {offsets = [0, 6], sizes = [16, 16], strides = [1, 1]} : vector<16x22xf32> to vector<16x16xf32>
      %403 = vector.broadcast %401 : f32 to vector<16x16xf32>
      %404 = arith.mulf %403, %402 : vector<16x16xf32>
      %405 = arith.addf %400, %404 : vector<16x16xf32>
      %c0_64 = arith.constant 0 : index
      %c1_65 = arith.constant 1 : index
      %c3_66 = arith.constant 3 : index
      %c0_67 = arith.constant 0 : index
      %406 = vector.load %arg3[%c0_64, %c1_65, %c3_66, %c0_67] : memref<1x2x22x22xf32, #tpu.memory_space<vmem>>, vector<1x1x16x22xf32>
      %407 = vector.shape_cast %406 : vector<1x1x16x22xf32> to vector<16x22xf32>
      %c70 = arith.constant 70 : index
      %408 = memref.load %arg6[%c70] : memref<98xf32, #tpu.memory_space<smem>>
      %409 = vector.extract_strided_slice %407 {offsets = [0, 0], sizes = [16, 16], strides = [1, 1]} : vector<16x22xf32> to vector<16x16xf32>
      %410 = vector.broadcast %408 : f32 to vector<16x16xf32>
      %411 = arith.mulf %410, %409 : vector<16x16xf32>
      %412 = arith.addf %405, %411 : vector<16x16xf32>
      %c71 = arith.constant 71 : index
      %413 = memref.load %arg6[%c71] : memref<98xf32, #tpu.memory_space<smem>>
      %414 = vector.extract_strided_slice %407 {offsets = [0, 1], sizes = [16, 16], strides = [1, 1]} : vector<16x22xf32> to vector<16x16xf32>
      %415 = vector.broadcast %413 : f32 to vector<16x16xf32>
      %416 = arith.mulf %415, %414 : vector<16x16xf32>
      %417 = arith.addf %412, %416 : vector<16x16xf32>
      %c72 = arith.constant 72 : index
      %418 = memref.load %arg6[%c72] : memref<98xf32, #tpu.memory_space<smem>>
      %419 = vector.extract_strided_slice %407 {offsets = [0, 2], sizes = [16, 16], strides = [1, 1]} : vector<16x22xf32> to vector<16x16xf32>
      %420 = vector.broadcast %418 : f32 to vector<16x16xf32>
      %421 = arith.mulf %420, %419 : vector<16x16xf32>
      %422 = arith.addf %417, %421 : vector<16x16xf32>
      %c73 = arith.constant 73 : index
      %423 = memref.load %arg6[%c73] : memref<98xf32, #tpu.memory_space<smem>>
      %424 = vector.extract_strided_slice %407 {offsets = [0, 3], sizes = [16, 16], strides = [1, 1]} : vector<16x22xf32> to vector<16x16xf32>
      %425 = vector.broadcast %423 : f32 to vector<16x16xf32>
      %426 = arith.mulf %425, %424 : vector<16x16xf32>
      %427 = arith.addf %422, %426 : vector<16x16xf32>
      %c74 = arith.constant 74 : index
      %428 = memref.load %arg6[%c74] : memref<98xf32, #tpu.memory_space<smem>>
      %429 = vector.extract_strided_slice %407 {offsets = [0, 4], sizes = [16, 16], strides = [1, 1]} : vector<16x22xf32> to vector<16x16xf32>
      %430 = vector.broadcast %428 : f32 to vector<16x16xf32>
      %431 = arith.mulf %430, %429 : vector<16x16xf32>
      %432 = arith.addf %427, %431 : vector<16x16xf32>
      %c75 = arith.constant 75 : index
      %433 = memref.load %arg6[%c75] : memref<98xf32, #tpu.memory_space<smem>>
      %434 = vector.extract_strided_slice %407 {offsets = [0, 5], sizes = [16, 16], strides = [1, 1]} : vector<16x22xf32> to vector<16x16xf32>
      %435 = vector.broadcast %433 : f32 to vector<16x16xf32>
      %436 = arith.mulf %435, %434 : vector<16x16xf32>
      %437 = arith.addf %432, %436 : vector<16x16xf32>
      %c76 = arith.constant 76 : index
      %438 = memref.load %arg6[%c76] : memref<98xf32, #tpu.memory_space<smem>>
      %439 = vector.extract_strided_slice %407 {offsets = [0, 6], sizes = [16, 16], strides = [1, 1]} : vector<16x22xf32> to vector<16x16xf32>
      %440 = vector.broadcast %438 : f32 to vector<16x16xf32>
      %441 = arith.mulf %440, %439 : vector<16x16xf32>
      %442 = arith.addf %437, %441 : vector<16x16xf32>
      %c0_68 = arith.constant 0 : index
      %c1_69 = arith.constant 1 : index
      %c4_70 = arith.constant 4 : index
      %c0_71 = arith.constant 0 : index
      %443 = vector.load %arg3[%c0_68, %c1_69, %c4_70, %c0_71] : memref<1x2x22x22xf32, #tpu.memory_space<vmem>>, vector<1x1x16x22xf32>
      %444 = vector.shape_cast %443 : vector<1x1x16x22xf32> to vector<16x22xf32>
      %c77 = arith.constant 77 : index
      %445 = memref.load %arg6[%c77] : memref<98xf32, #tpu.memory_space<smem>>
      %446 = vector.extract_strided_slice %444 {offsets = [0, 0], sizes = [16, 16], strides = [1, 1]} : vector<16x22xf32> to vector<16x16xf32>
      %447 = vector.broadcast %445 : f32 to vector<16x16xf32>
      %448 = arith.mulf %447, %446 : vector<16x16xf32>
      %449 = arith.addf %442, %448 : vector<16x16xf32>
      %c78 = arith.constant 78 : index
      %450 = memref.load %arg6[%c78] : memref<98xf32, #tpu.memory_space<smem>>
      %451 = vector.extract_strided_slice %444 {offsets = [0, 1], sizes = [16, 16], strides = [1, 1]} : vector<16x22xf32> to vector<16x16xf32>
      %452 = vector.broadcast %450 : f32 to vector<16x16xf32>
      %453 = arith.mulf %452, %451 : vector<16x16xf32>
      %454 = arith.addf %449, %453 : vector<16x16xf32>
      %c79 = arith.constant 79 : index
      %455 = memref.load %arg6[%c79] : memref<98xf32, #tpu.memory_space<smem>>
      %456 = vector.extract_strided_slice %444 {offsets = [0, 2], sizes = [16, 16], strides = [1, 1]} : vector<16x22xf32> to vector<16x16xf32>
      %457 = vector.broadcast %455 : f32 to vector<16x16xf32>
      %458 = arith.mulf %457, %456 : vector<16x16xf32>
      %459 = arith.addf %454, %458 : vector<16x16xf32>
      %c80 = arith.constant 80 : index
      %460 = memref.load %arg6[%c80] : memref<98xf32, #tpu.memory_space<smem>>
      %461 = vector.extract_strided_slice %444 {offsets = [0, 3], sizes = [16, 16], strides = [1, 1]} : vector<16x22xf32> to vector<16x16xf32>
      %462 = vector.broadcast %460 : f32 to vector<16x16xf32>
      %463 = arith.mulf %462, %461 : vector<16x16xf32>
      %464 = arith.addf %459, %463 : vector<16x16xf32>
      %c81 = arith.constant 81 : index
      %465 = memref.load %arg6[%c81] : memref<98xf32, #tpu.memory_space<smem>>
      %466 = vector.extract_strided_slice %444 {offsets = [0, 4], sizes = [16, 16], strides = [1, 1]} : vector<16x22xf32> to vector<16x16xf32>
      %467 = vector.broadcast %465 : f32 to vector<16x16xf32>
      %468 = arith.mulf %467, %466 : vector<16x16xf32>
      %469 = arith.addf %464, %468 : vector<16x16xf32>
      %c82 = arith.constant 82 : index
      %470 = memref.load %arg6[%c82] : memref<98xf32, #tpu.memory_space<smem>>
      %471 = vector.extract_strided_slice %444 {offsets = [0, 5], sizes = [16, 16], strides = [1, 1]} : vector<16x22xf32> to vector<16x16xf32>
      %472 = vector.broadcast %470 : f32 to vector<16x16xf32>
      %473 = arith.mulf %472, %471 : vector<16x16xf32>
      %474 = arith.addf %469, %473 : vector<16x16xf32>
      %c83 = arith.constant 83 : index
      %475 = memref.load %arg6[%c83] : memref<98xf32, #tpu.memory_space<smem>>
      %476 = vector.extract_strided_slice %444 {offsets = [0, 6], sizes = [16, 16], strides = [1, 1]} : vector<16x22xf32> to vector<16x16xf32>
      %477 = vector.broadcast %475 : f32 to vector<16x16xf32>
      %478 = arith.mulf %477, %476 : vector<16x16xf32>
      %479 = arith.addf %474, %478 : vector<16x16xf32>
      %c0_72 = arith.constant 0 : index
      %c1_73 = arith.constant 1 : index
      %c5_74 = arith.constant 5 : index
      %c0_75 = arith.constant 0 : index
      %480 = vector.load %arg3[%c0_72, %c1_73, %c5_74, %c0_75] : memref<1x2x22x22xf32, #tpu.memory_space<vmem>>, vector<1x1x16x22xf32>
      %481 = vector.shape_cast %480 : vector<1x1x16x22xf32> to vector<16x22xf32>
      %c84 = arith.constant 84 : index
      %482 = memref.load %arg6[%c84] : memref<98xf32, #tpu.memory_space<smem>>
      %483 = vector.extract_strided_slice %481 {offsets = [0, 0], sizes = [16, 16], strides = [1, 1]} : vector<16x22xf32> to vector<16x16xf32>
      %484 = vector.broadcast %482 : f32 to vector<16x16xf32>
      %485 = arith.mulf %484, %483 : vector<16x16xf32>
      %486 = arith.addf %479, %485 : vector<16x16xf32>
      %c85 = arith.constant 85 : index
      %487 = memref.load %arg6[%c85] : memref<98xf32, #tpu.memory_space<smem>>
      %488 = vector.extract_strided_slice %481 {offsets = [0, 1], sizes = [16, 16], strides = [1, 1]} : vector<16x22xf32> to vector<16x16xf32>
      %489 = vector.broadcast %487 : f32 to vector<16x16xf32>
      %490 = arith.mulf %489, %488 : vector<16x16xf32>
      %491 = arith.addf %486, %490 : vector<16x16xf32>
      %c86 = arith.constant 86 : index
      %492 = memref.load %arg6[%c86] : memref<98xf32, #tpu.memory_space<smem>>
      %493 = vector.extract_strided_slice %481 {offsets = [0, 2], sizes = [16, 16], strides = [1, 1]} : vector<16x22xf32> to vector<16x16xf32>
      %494 = vector.broadcast %492 : f32 to vector<16x16xf32>
      %495 = arith.mulf %494, %493 : vector<16x16xf32>
      %496 = arith.addf %491, %495 : vector<16x16xf32>
      %c87 = arith.constant 87 : index
      %497 = memref.load %arg6[%c87] : memref<98xf32, #tpu.memory_space<smem>>
      %498 = vector.extract_strided_slice %481 {offsets = [0, 3], sizes = [16, 16], strides = [1, 1]} : vector<16x22xf32> to vector<16x16xf32>
      %499 = vector.broadcast %497 : f32 to vector<16x16xf32>
      %500 = arith.mulf %499, %498 : vector<16x16xf32>
      %501 = arith.addf %496, %500 : vector<16x16xf32>
      %c88 = arith.constant 88 : index
      %502 = memref.load %arg6[%c88] : memref<98xf32, #tpu.memory_space<smem>>
      %503 = vector.extract_strided_slice %481 {offsets = [0, 4], sizes = [16, 16], strides = [1, 1]} : vector<16x22xf32> to vector<16x16xf32>
      %504 = vector.broadcast %502 : f32 to vector<16x16xf32>
      %505 = arith.mulf %504, %503 : vector<16x16xf32>
      %506 = arith.addf %501, %505 : vector<16x16xf32>
      %c89 = arith.constant 89 : index
      %507 = memref.load %arg6[%c89] : memref<98xf32, #tpu.memory_space<smem>>
      %508 = vector.extract_strided_slice %481 {offsets = [0, 5], sizes = [16, 16], strides = [1, 1]} : vector<16x22xf32> to vector<16x16xf32>
      %509 = vector.broadcast %507 : f32 to vector<16x16xf32>
      %510 = arith.mulf %509, %508 : vector<16x16xf32>
      %511 = arith.addf %506, %510 : vector<16x16xf32>
      %c90 = arith.constant 90 : index
      %512 = memref.load %arg6[%c90] : memref<98xf32, #tpu.memory_space<smem>>
      %513 = vector.extract_strided_slice %481 {offsets = [0, 6], sizes = [16, 16], strides = [1, 1]} : vector<16x22xf32> to vector<16x16xf32>
      %514 = vector.broadcast %512 : f32 to vector<16x16xf32>
      %515 = arith.mulf %514, %513 : vector<16x16xf32>
      %516 = arith.addf %511, %515 : vector<16x16xf32>
      %c0_76 = arith.constant 0 : index
      %c1_77 = arith.constant 1 : index
      %c6_78 = arith.constant 6 : index
      %c0_79 = arith.constant 0 : index
      %517 = vector.load %arg3[%c0_76, %c1_77, %c6_78, %c0_79] : memref<1x2x22x22xf32, #tpu.memory_space<vmem>>, vector<1x1x16x22xf32>
      %518 = vector.shape_cast %517 : vector<1x1x16x22xf32> to vector<16x22xf32>
      %c91 = arith.constant 91 : index
      %519 = memref.load %arg6[%c91] : memref<98xf32, #tpu.memory_space<smem>>
      %520 = vector.extract_strided_slice %518 {offsets = [0, 0], sizes = [16, 16], strides = [1, 1]} : vector<16x22xf32> to vector<16x16xf32>
      %521 = vector.broadcast %519 : f32 to vector<16x16xf32>
      %522 = arith.mulf %521, %520 : vector<16x16xf32>
      %523 = arith.addf %516, %522 : vector<16x16xf32>
      %c92 = arith.constant 92 : index
      %524 = memref.load %arg6[%c92] : memref<98xf32, #tpu.memory_space<smem>>
      %525 = vector.extract_strided_slice %518 {offsets = [0, 1], sizes = [16, 16], strides = [1, 1]} : vector<16x22xf32> to vector<16x16xf32>
      %526 = vector.broadcast %524 : f32 to vector<16x16xf32>
      %527 = arith.mulf %526, %525 : vector<16x16xf32>
      %528 = arith.addf %523, %527 : vector<16x16xf32>
      %c93 = arith.constant 93 : index
      %529 = memref.load %arg6[%c93] : memref<98xf32, #tpu.memory_space<smem>>
      %530 = vector.extract_strided_slice %518 {offsets = [0, 2], sizes = [16, 16], strides = [1, 1]} : vector<16x22xf32> to vector<16x16xf32>
      %531 = vector.broadcast %529 : f32 to vector<16x16xf32>
      %532 = arith.mulf %531, %530 : vector<16x16xf32>
      %533 = arith.addf %528, %532 : vector<16x16xf32>
      %c94 = arith.constant 94 : index
      %534 = memref.load %arg6[%c94] : memref<98xf32, #tpu.memory_space<smem>>
      %535 = vector.extract_strided_slice %518 {offsets = [0, 3], sizes = [16, 16], strides = [1, 1]} : vector<16x22xf32> to vector<16x16xf32>
      %536 = vector.broadcast %534 : f32 to vector<16x16xf32>
      %537 = arith.mulf %536, %535 : vector<16x16xf32>
      %538 = arith.addf %533, %537 : vector<16x16xf32>
      %c95 = arith.constant 95 : index
      %539 = memref.load %arg6[%c95] : memref<98xf32, #tpu.memory_space<smem>>
      %540 = vector.extract_strided_slice %518 {offsets = [0, 4], sizes = [16, 16], strides = [1, 1]} : vector<16x22xf32> to vector<16x16xf32>
      %541 = vector.broadcast %539 : f32 to vector<16x16xf32>
      %542 = arith.mulf %541, %540 : vector<16x16xf32>
      %543 = arith.addf %538, %542 : vector<16x16xf32>
      %c96 = arith.constant 96 : index
      %544 = memref.load %arg6[%c96] : memref<98xf32, #tpu.memory_space<smem>>
      %545 = vector.extract_strided_slice %518 {offsets = [0, 5], sizes = [16, 16], strides = [1, 1]} : vector<16x22xf32> to vector<16x16xf32>
      %546 = vector.broadcast %544 : f32 to vector<16x16xf32>
      %547 = arith.mulf %546, %545 : vector<16x16xf32>
      %548 = arith.addf %543, %547 : vector<16x16xf32>
      %c97 = arith.constant 97 : index
      %549 = memref.load %arg6[%c97] : memref<98xf32, #tpu.memory_space<smem>>
      %550 = vector.extract_strided_slice %518 {offsets = [0, 6], sizes = [16, 16], strides = [1, 1]} : vector<16x22xf32> to vector<16x16xf32>
      %551 = vector.broadcast %549 : f32 to vector<16x16xf32>
      %552 = arith.mulf %551, %550 : vector<16x16xf32>
      %553 = arith.addf %548, %552 : vector<16x16xf32>
      %cst_80 = arith.constant 0.000000e+00 : f32
      %554 = vector.broadcast %cst_80 : f32 to vector<16x16xf32>
      %555 = arith.subf %554, %553 : vector<16x16xf32>
      %556 = math.exp %555 : vector<16x16xf32>
      %cst_81 = arith.constant 1.000000e+00 : f32
      %557 = vector.broadcast %cst_81 : f32 to vector<16x16xf32>
      %558 = arith.addf %557, %556 : vector<16x16xf32>
      %cst_82 = arith.constant 1.000000e+00 : f32
      %559 = vector.broadcast %cst_82 : f32 to vector<16x16xf32>
      %560 = arith.divf %559, %558 : vector<16x16xf32>
      %561 = math.sqrt %560 : vector<16x16xf32>
      %562 = vector.extract_strided_slice %561 {offsets = [0, 0], sizes = [1, 16], strides = [1, 1]} : vector<16x16xf32> to vector<1x16xf32>
      %c0_83 = arith.constant 0 : index
      %c0_84 = arith.constant 0 : index
      %c0_85 = arith.constant 0 : index
      %563 = vector.load %arg8[%c0_83, %c0_84, %c0_85] : memref<1x1x256xf32, #tpu.memory_space<vmem>>, vector<1x1x16xf32>
      %564 = vector.shape_cast %563 : vector<1x1x16xf32> to vector<1x16xf32>
      %565 = vector.shape_cast %562 : vector<1x16xf32> to vector<1x1x16xf32>
      tpu.vector_store %arg8[%c0_83, %c0_84, %c0_85], %565 {strides = array<i32>} : memref<1x1x256xf32, #tpu.memory_space<vmem>>, vector<1x1x16xf32>,
      %566 = vector.extract_strided_slice %561 {offsets = [1, 0], sizes = [1, 16], strides = [1, 1]} : vector<16x16xf32> to vector<1x16xf32>
      %c0_86 = arith.constant 0 : index
      %c0_87 = arith.constant 0 : index
      %c16_88 = arith.constant 16 : index
      %567 = vector.load %arg8[%c0_86, %c0_87, %c16_88] : memref<1x1x256xf32, #tpu.memory_space<vmem>>, vector<1x1x16xf32>
      %568 = vector.shape_cast %567 : vector<1x1x16xf32> to vector<1x16xf32>
      %569 = vector.shape_cast %566 : vector<1x16xf32> to vector<1x1x16xf32>
      tpu.vector_store %arg8[%c0_86, %c0_87, %c16_88], %569 {strides = array<i32>} : memref<1x1x256xf32, #tpu.memory_space<vmem>>, vector<1x1x16xf32>,
      %570 = vector.extract_strided_slice %561 {offsets = [2, 0], sizes = [1, 16], strides = [1, 1]} : vector<16x16xf32> to vector<1x16xf32>
      %c0_89 = arith.constant 0 : index
      %c0_90 = arith.constant 0 : index
      %c32_91 = arith.constant 32 : index
      %571 = vector.load %arg8[%c0_89, %c0_90, %c32_91] : memref<1x1x256xf32, #tpu.memory_space<vmem>>, vector<1x1x16xf32>
      %572 = vector.shape_cast %571 : vector<1x1x16xf32> to vector<1x16xf32>
      %573 = vector.shape_cast %570 : vector<1x16xf32> to vector<1x1x16xf32>
      tpu.vector_store %arg8[%c0_89, %c0_90, %c32_91], %573 {strides = array<i32>} : memref<1x1x256xf32, #tpu.memory_space<vmem>>, vector<1x1x16xf32>,
      %574 = vector.extract_strided_slice %561 {offsets = [3, 0], sizes = [1, 16], strides = [1, 1]} : vector<16x16xf32> to vector<1x16xf32>
      %c0_92 = arith.constant 0 : index
      %c0_93 = arith.constant 0 : index
      %c48_94 = arith.constant 48 : index
      %575 = vector.load %arg8[%c0_92, %c0_93, %c48_94] : memref<1x1x256xf32, #tpu.memory_space<vmem>>, vector<1x1x16xf32>
      %576 = vector.shape_cast %575 : vector<1x1x16xf32> to vector<1x16xf32>
      %577 = vector.shape_cast %574 : vector<1x16xf32> to vector<1x1x16xf32>
      tpu.vector_store %arg8[%c0_92, %c0_93, %c48_94], %577 {strides = array<i32>} : memref<1x1x256xf32, #tpu.memory_space<vmem>>, vector<1x1x16xf32>,
      %578 = vector.extract_strided_slice %561 {offsets = [4, 0], sizes = [1, 16], strides = [1, 1]} : vector<16x16xf32> to vector<1x16xf32>
      %c0_95 = arith.constant 0 : index
      %c0_96 = arith.constant 0 : index
      %c64_97 = arith.constant 64 : index
      %579 = vector.load %arg8[%c0_95, %c0_96, %c64_97] : memref<1x1x256xf32, #tpu.memory_space<vmem>>, vector<1x1x16xf32>
      %580 = vector.shape_cast %579 : vector<1x1x16xf32> to vector<1x16xf32>
      %581 = vector.shape_cast %578 : vector<1x16xf32> to vector<1x1x16xf32>
      tpu.vector_store %arg8[%c0_95, %c0_96, %c64_97], %581 {strides = array<i32>} : memref<1x1x256xf32, #tpu.memory_space<vmem>>, vector<1x1x16xf32>,
      %582 = vector.extract_strided_slice %561 {offsets = [5, 0], sizes = [1, 16], strides = [1, 1]} : vector<16x16xf32> to vector<1x16xf32>
      %c0_98 = arith.constant 0 : index
      %c0_99 = arith.constant 0 : index
      %c80_100 = arith.constant 80 : index
      %583 = vector.load %arg8[%c0_98, %c0_99, %c80_100] : memref<1x1x256xf32, #tpu.memory_space<vmem>>, vector<1x1x16xf32>
      %584 = vector.shape_cast %583 : vector<1x1x16xf32> to vector<1x16xf32>
      %585 = vector.shape_cast %582 : vector<1x16xf32> to vector<1x1x16xf32>
      tpu.vector_store %arg8[%c0_98, %c0_99, %c80_100], %585 {strides = array<i32>} : memref<1x1x256xf32, #tpu.memory_space<vmem>>, vector<1x1x16xf32>,
      %586 = vector.extract_strided_slice %561 {offsets = [6, 0], sizes = [1, 16], strides = [1, 1]} : vector<16x16xf32> to vector<1x16xf32>
      %c0_101 = arith.constant 0 : index
      %c0_102 = arith.constant 0 : index
      %c96_103 = arith.constant 96 : index
      %587 = vector.load %arg8[%c0_101, %c0_102, %c96_103] : memref<1x1x256xf32, #tpu.memory_space<vmem>>, vector<1x1x16xf32>
      %588 = vector.shape_cast %587 : vector<1x1x16xf32> to vector<1x16xf32>
      %589 = vector.shape_cast %586 : vector<1x16xf32> to vector<1x1x16xf32>
      tpu.vector_store %arg8[%c0_101, %c0_102, %c96_103], %589 {strides = array<i32>} : memref<1x1x256xf32, #tpu.memory_space<vmem>>, vector<1x1x16xf32>,
      %590 = vector.extract_strided_slice %561 {offsets = [7, 0], sizes = [1, 16], strides = [1, 1]} : vector<16x16xf32> to vector<1x16xf32>
      %c0_104 = arith.constant 0 : index
      %c0_105 = arith.constant 0 : index
      %c112 = arith.constant 112 : index
      %591 = vector.load %arg8[%c0_104, %c0_105, %c112] : memref<1x1x256xf32, #tpu.memory_space<vmem>>, vector<1x1x16xf32>
      %592 = vector.shape_cast %591 : vector<1x1x16xf32> to vector<1x16xf32>
      %593 = vector.shape_cast %590 : vector<1x16xf32> to vector<1x1x16xf32>
      tpu.vector_store %arg8[%c0_104, %c0_105, %c112], %593 {strides = array<i32>} : memref<1x1x256xf32, #tpu.memory_space<vmem>>, vector<1x1x16xf32>,
      %594 = vector.extract_strided_slice %561 {offsets = [8, 0], sizes = [1, 16], strides = [1, 1]} : vector<16x16xf32> to vector<1x16xf32>
      %c0_106 = arith.constant 0 : index
      %c0_107 = arith.constant 0 : index
      %c128 = arith.constant 128 : index
      %595 = vector.load %arg8[%c0_106, %c0_107, %c128] : memref<1x1x256xf32, #tpu.memory_space<vmem>>, vector<1x1x16xf32>
      %596 = vector.shape_cast %595 : vector<1x1x16xf32> to vector<1x16xf32>
      %597 = vector.shape_cast %594 : vector<1x16xf32> to vector<1x1x16xf32>
      tpu.vector_store %arg8[%c0_106, %c0_107, %c128], %597 {strides = array<i32>} : memref<1x1x256xf32, #tpu.memory_space<vmem>>, vector<1x1x16xf32>,
      %598 = vector.extract_strided_slice %561 {offsets = [9, 0], sizes = [1, 16], strides = [1, 1]} : vector<16x16xf32> to vector<1x16xf32>
      %c0_108 = arith.constant 0 : index
      %c0_109 = arith.constant 0 : index
      %c144 = arith.constant 144 : index
      %599 = vector.load %arg8[%c0_108, %c0_109, %c144] : memref<1x1x256xf32, #tpu.memory_space<vmem>>, vector<1x1x16xf32>
      %600 = vector.shape_cast %599 : vector<1x1x16xf32> to vector<1x16xf32>
      %601 = vector.shape_cast %598 : vector<1x16xf32> to vector<1x1x16xf32>
      tpu.vector_store %arg8[%c0_108, %c0_109, %c144], %601 {strides = array<i32>} : memref<1x1x256xf32, #tpu.memory_space<vmem>>, vector<1x1x16xf32>,
      %602 = vector.extract_strided_slice %561 {offsets = [10, 0], sizes = [1, 16], strides = [1, 1]} : vector<16x16xf32> to vector<1x16xf32>
      %c0_110 = arith.constant 0 : index
      %c0_111 = arith.constant 0 : index
      %c160 = arith.constant 160 : index
      %603 = vector.load %arg8[%c0_110, %c0_111, %c160] : memref<1x1x256xf32, #tpu.memory_space<vmem>>, vector<1x1x16xf32>
      %604 = vector.shape_cast %603 : vector<1x1x16xf32> to vector<1x16xf32>
      %605 = vector.shape_cast %602 : vector<1x16xf32> to vector<1x1x16xf32>
      tpu.vector_store %arg8[%c0_110, %c0_111, %c160], %605 {strides = array<i32>} : memref<1x1x256xf32, #tpu.memory_space<vmem>>, vector<1x1x16xf32>,
      %606 = vector.extract_strided_slice %561 {offsets = [11, 0], sizes = [1, 16], strides = [1, 1]} : vector<16x16xf32> to vector<1x16xf32>
      %c0_112 = arith.constant 0 : index
      %c0_113 = arith.constant 0 : index
      %c176 = arith.constant 176 : index
      %607 = vector.load %arg8[%c0_112, %c0_113, %c176] : memref<1x1x256xf32, #tpu.memory_space<vmem>>, vector<1x1x16xf32>
      %608 = vector.shape_cast %607 : vector<1x1x16xf32> to vector<1x16xf32>
      %609 = vector.shape_cast %606 : vector<1x16xf32> to vector<1x1x16xf32>
      tpu.vector_store %arg8[%c0_112, %c0_113, %c176], %609 {strides = array<i32>} : memref<1x1x256xf32, #tpu.memory_space<vmem>>, vector<1x1x16xf32>,
      %610 = vector.extract_strided_slice %561 {offsets = [12, 0], sizes = [1, 16], strides = [1, 1]} : vector<16x16xf32> to vector<1x16xf32>
      %c0_114 = arith.constant 0 : index
      %c0_115 = arith.constant 0 : index
      %c192 = arith.constant 192 : index
      %611 = vector.load %arg8[%c0_114, %c0_115, %c192] : memref<1x1x256xf32, #tpu.memory_space<vmem>>, vector<1x1x16xf32>
      %612 = vector.shape_cast %611 : vector<1x1x16xf32> to vector<1x16xf32>
      %613 = vector.shape_cast %610 : vector<1x16xf32> to vector<1x1x16xf32>
      tpu.vector_store %arg8[%c0_114, %c0_115, %c192], %613 {strides = array<i32>} : memref<1x1x256xf32, #tpu.memory_space<vmem>>, vector<1x1x16xf32>,
      %614 = vector.extract_strided_slice %561 {offsets = [13, 0], sizes = [1, 16], strides = [1, 1]} : vector<16x16xf32> to vector<1x16xf32>
      %c0_116 = arith.constant 0 : index
      %c0_117 = arith.constant 0 : index
      %c208 = arith.constant 208 : index
      %615 = vector.load %arg8[%c0_116, %c0_117, %c208] : memref<1x1x256xf32, #tpu.memory_space<vmem>>, vector<1x1x16xf32>
      %616 = vector.shape_cast %615 : vector<1x1x16xf32> to vector<1x16xf32>
      %617 = vector.shape_cast %614 : vector<1x16xf32> to vector<1x1x16xf32>
      tpu.vector_store %arg8[%c0_116, %c0_117, %c208], %617 {strides = array<i32>} : memref<1x1x256xf32, #tpu.memory_space<vmem>>, vector<1x1x16xf32>,
      %618 = vector.extract_strided_slice %561 {offsets = [14, 0], sizes = [1, 16], strides = [1, 1]} : vector<16x16xf32> to vector<1x16xf32>
      %c0_118 = arith.constant 0 : index
      %c0_119 = arith.constant 0 : index
      %c224 = arith.constant 224 : index
      %619 = vector.load %arg8[%c0_118, %c0_119, %c224] : memref<1x1x256xf32, #tpu.memory_space<vmem>>, vector<1x1x16xf32>
      %620 = vector.shape_cast %619 : vector<1x1x16xf32> to vector<1x16xf32>
      %621 = vector.shape_cast %618 : vector<1x16xf32> to vector<1x1x16xf32>
      tpu.vector_store %arg8[%c0_118, %c0_119, %c224], %621 {strides = array<i32>} : memref<1x1x256xf32, #tpu.memory_space<vmem>>, vector<1x1x16xf32>,
      %622 = vector.extract_strided_slice %561 {offsets = [15, 0], sizes = [1, 16], strides = [1, 1]} : vector<16x16xf32> to vector<1x16xf32>
      %c0_120 = arith.constant 0 : index
      %c0_121 = arith.constant 0 : index
      %c240 = arith.constant 240 : index
      %623 = vector.load %arg8[%c0_120, %c0_121, %c240] : memref<1x1x256xf32, #tpu.memory_space<vmem>>, vector<1x1x16xf32>
      %624 = vector.shape_cast %623 : vector<1x1x16xf32> to vector<1x16xf32>
      %625 = vector.shape_cast %622 : vector<1x16xf32> to vector<1x1x16xf32>
      tpu.vector_store %arg8[%c0_120, %c0_121, %c240], %625 {strides = array<i32>} : memref<1x1x256xf32, #tpu.memory_space<vmem>>, vector<1x1x16xf32>,
    } else {
    }
    %c0 = arith.constant 0 : index
    %c0_1 = arith.constant 0 : index
    %3 = vector.load %arg9[%c0, %c0_1] : memref<64x1xf32, #tpu.memory_space<vmem>>, vector<64x1xf32>
    %4 = arith.index_cast %arg1 : i32 to index
    %c0_2 = arith.constant 0 : index
    %c0_3 = arith.constant 0 : index
    %5 = vector.load %arg8[%4, %c0_2, %c0_3] : memref<1x1x256xf32, #tpu.memory_space<vmem>>, vector<1x1x256xf32>
    %6 = vector.shape_cast %5 : vector<1x1x256xf32> to vector<1x256xf32>
    %7 = vector.broadcast %3 : vector<64x1xf32> to vector<64x256xf32>
    %8 = vector.broadcast %6 : vector<1x256xf32> to vector<64x256xf32>
    %9 = arith.mulf %7, %8 : vector<64x256xf32>
    %cst = arith.constant 9.99999997E-7 : f32
    %10 = vector.broadcast %cst : f32 to vector<64x256xf32>
    %11 = arith.maximumf %9, %10 : vector<64x256xf32>
    %c0_4 = arith.constant 0 : index
    %c0_5 = arith.constant 0 : index
    %c0_6 = arith.constant 0 : index
    %12 = vector.load %arg7[%c0_4, %c0_5, %c0_6] : memref<1x64x256xf32, #tpu.memory_space<vmem>>, vector<1x64x256xf32>
    %13 = vector.shape_cast %12 : vector<1x64x256xf32> to vector<64x256xf32>
    %14 = vector.shape_cast %11 : vector<64x256xf32> to vector<1x64x256xf32>
    tpu.vector_store %arg7[%c0_4, %c0_5, %c0_6], %14 {strides = array<i32>} : memref<1x64x256xf32, #tpu.memory_space<vmem>>, vector<1x64x256xf32>,
    return
  }
  func.func @transform_0(%arg0: i32, %arg1: i32) -> (i32, i32, i32) {
    %c0_i32 = arith.constant 0 : i32
    %c0_i32_0 = arith.constant 0 : i32
    %c0_i32_1 = arith.constant 0 : i32
    return %arg0, %c0_i32, %c0_i32_0 : i32, i32, i32
  }
  func.func @transform_1(%arg0: i32, %arg1: i32) -> (i32, i32, i32, i32) {
    %c0_i32 = arith.constant 0 : i32
    %c0_i32_0 = arith.constant 0 : i32
    %c0_i32_1 = arith.constant 0 : i32
    %c0_i32_2 = arith.constant 0 : i32
    return %arg0, %c0_i32, %c0_i32_0, %c0_i32_1 : i32, i32, i32, i32
  }
  func.func @transform_2(%arg0: i32, %arg1: i32) -> (i32, i32) {
    %c0_i32 = arith.constant 0 : i32
    %c0_i32_0 = arith.constant 0 : i32
    %c0_i32_1 = arith.constant 0 : i32
    return %c0_i32, %c0_i32_0 : i32, i32
  }
  func.func @transform_3(%arg0: i32, %arg1: i32) -> (i32, i32) {
    %c0_i32 = arith.constant 0 : i32
    %c0_i32_0 = arith.constant 0 : i32
    %c0_i32_1 = arith.constant 0 : i32
    return %c0_i32, %c0_i32_0 : i32, i32
  }
  func.func @transform_4(%arg0: i32, %arg1: i32) -> i32 {
    %c0_i32 = arith.constant 0 : i32
    %c0_i32_0 = arith.constant 0 : i32
    return %c0_i32 : i32
  }
  func.func @transform_5(%arg0: i32, %arg1: i32) -> (i32, i32, i32) {
    %c0_i32 = arith.constant 0 : i32
    %c0_i32_0 = arith.constant 0 : i32
    return %arg0, %c0_i32, %arg1 : i32, i32, i32
  }
}

</mosaic_0001>

<llo_original>
// kernel: cbam_forward.2
$region0: #{cbam_forward.2}
  #allocation0 [shape = 'u32[]', space=smem, size = 0x4, offset = 0x4, fixed_abs, tag = 'smem constant byte address 0x4 - core index']
  #allocation1 [shape = 'u32[144,128]{1,0:T(1,128)}', space=vmem, size = 0x12000, scoped, tag = 'internal scratch']
  %s0 = inlined_call_operand.vmem [shape: f32[2,64,256], index: 0, kind: input, shape index: {}]
  %s1 = inlined_call_operand.vmem [shape: f32[2,64,2], index: 1, kind: output, shape index: {0}]
  %s2 = inlined_call_operand.vmem [shape: f32[2,2,256], index: 2, kind: output, shape index: {1}]
  %3 = xla_tuple %s1, %s2
  %s4 = sld [smem:[#allocation0]]
  $region53: #{cbam_forward.2} parent=0
    _
  %s6 = ssub.s32 1, %s4
  %s7 = scalar_select 0, %s6, %s4
  loop: start=0, step=1, limit=4
  $region2: #{cbam_forward.2} parent=0 // loop_pre_header
    _
  $region3: #{cbam_forward.2} parent=0 // loop_header
    %s9 = sphi 0, %s13
    %p10 = scmp.ge.s32.totalorder %s9, 4
    %s16 = sphi 0, %s28
    %s17 = sphi 0, %s24
    %s18 = sphi 0, %s16
    %s19 = sphi 0, %s17
    %s20 = sphi 0, %s18
    %s21 = sphi 0, %s19
    %s33 = sphi 0, %s35
    %s36 = sphi 0, %s33
    %s37 = sphi 0, %s36
    %s53 = sphi 0, %s37
    %s59 = sphi 0, %s61
    %s62 = sphi 0, %s59
    %s63 = sphi 0, %s62
    %s79 = sphi 0, %s63
    %s87 = sphi 0, %s89
    %s90 = sphi 0, %s87
    %s91 = sphi 0, %s90
    %s107 = sphi 0, %s91
  $region4: #{cbam_forward.2} parent=0 // loop_header_branch
    %12 = sbr.rel (%p10) target = $region8
  $region5: #{cbam_forward.2} parent=0 // loop_body
    %s14 = ssub.s32 %s9, 1
    %s15 = ssub.s32 %s9, 2
    %s22 = sadd.s32 1, %s17
    %p23 = scmp.ge.s32.totalorder %s22, 1
    %s24 = scalar_select %p23, 0, %s22
    %s25 = sadd.s32 1, %s16
    %s26 = scalar_select %p23, %s25, %s16
    %p27 = scmp.ge.s32.totalorder %s26, 2
    %s28 = scalar_select %p27, 0, %s26
    %s29 = ssub.s32 %s16, %s28
    %s30 = ssub.s32 %s17, %s24
    %s31 = sor.u32 %s29, %s30
    %p32 = scmp.eq.s32.totalorder %s31, 0
    %s34 = sadd.s32 %s33, 1
    %s35 = scalar_select %p32, %s33, %s34
    %p38 = pneg %p32
    %p39 = scmp.eq.s32.totalorder %s9, 1
    %p40 = por %p38, %p39
    %p41 = scmp.ne.s32.totalorder %s33, %s36
    %p42 = scmp.eq.s32.totalorder %s9, 0
    %p43 = por %p41, %p42
    %p44 = scmp.ne.s32.totalorder %s33, %s36
    %p45 = scmp.eq.s32.totalorder %s14, 1
    %p46 = por %p44, %p45
    %p47 = scmp.ne.s32.totalorder %s36, %s37
    %p48 = scmp.eq.s32.totalorder %s14, 0
    %p49 = por %p47, %p48
    %p50 = scmp.ne.s32.totalorder %s36, %s37
    %p51 = scmp.eq.s32.totalorder %s15, 1
    %p52 = por %p50, %p51
    %p54 = scmp.ne.s32.totalorder %s37, %s53
    %p55 = scmp.eq.s32.totalorder %s15, 0
    %p56 = por %p54, %p55
    %s57 = ssub.s32 %s16, %s28
    %p58 = scmp.eq.s32.totalorder %s57, 0
    %s60 = sadd.s32 %s59, 1
    %s61 = scalar_select %p58, %s59, %s60
    %p64 = pneg %p58
    %p65 = scmp.eq.s32.totalorder %s9, 1
    %p66 = por %p64, %p65
    %p67 = scmp.ne.s32.totalorder %s59, %s62
    %p68 = scmp.eq.s32.totalorder %s9, 0
    %p69 = por %p67, %p68
    %p70 = scmp.ne.s32.totalorder %s59, %s62
    %p71 = scmp.eq.s32.totalorder %s14, 1
    %p72 = por %p70, %p71
    %p73 = scmp.ne.s32.totalorder %s62, %s63
    %p74 = scmp.eq.s32.totalorder %s14, 0
    %p75 = por %p73, %p74
    %p76 = scmp.ne.s32.totalorder %s62, %s63
    %p77 = scmp.eq.s32.totalorder %s15, 1
    %p78 = por %p76, %p77
    %p80 = scmp.ne.s32.totalorder %s63, %s79
    %p81 = scmp.eq.s32.totalorder %s15, 0
    %p82 = por %p80, %p81
    %s83 = ssub.s32 %s16, %s28
    %s84 = ssub.s32 %s17, %s24
    %s85 = sor.u32 %s83, %s84
    %p86 = scmp.eq.s32.totalorder %s85, 0
    %s88 = sadd.s32 %s87, 1
    %s89 = scalar_select %p86, %s87, %s88
    %p92 = pneg %p86
    %p93 = scmp.eq.s32.totalorder %s9, 1
    %p94 = por %p92, %p93
    %p95 = scmp.ne.s32.totalorder %s87, %s90
    %p96 = scmp.eq.s32.totalorder %s9, 0
    %p97 = por %p95, %p96
    %p98 = scmp.ne.s32.totalorder %s87, %s90
    %p99 = scmp.eq.s32.totalorder %s14, 1
    %p100 = por %p98, %p99
    %p101 = scmp.ne.s32.totalorder %s90, %s91
    %p102 = scmp.eq.s32.totalorder %s14, 0
    %p103 = por %p101, %p102
    %p104 = scmp.ne.s32.totalorder %s90, %s91
    %p105 = scmp.eq.s32.totalorder %s15, 1
    %p106 = por %p104, %p105
    %p108 = scmp.ne.s32.totalorder %s91, %s107
    %p109 = scmp.eq.s32.totalorder %s15, 0
    %p110 = por %p108, %p109
    %p111 = scmp.le.s32.totalorder 1, %s9
    %p112 = scmp.lt.s32.totalorder %s9, 3
    %p113 = pnand %p111, %p112
    %p114 = pneg %p113
    // Predicated region
    $region9: #{cbam_forward.2} parent=5 // pred_check
      _
    $region10: #{cbam_forward.2} parent=5 // pred_check_branch
      %116 = sbr.rel (%p113) target = $region12
    $region11: #{cbam_forward.2} parent=5 // pred_region
      %s117 = ssub.s32 %s9, 1
    $region12: #{cbam_forward.2} parent=5 // pred_fallthru
      _
    %p118 = scmp.lt.s32.totalorder %s9, 2
    // Predicated region
    $region13: #{cbam_forward.2} parent=5 // pred_check
      %p119 = pneg %p118
    $region14: #{cbam_forward.2} parent=5 // pred_check_branch
      %121 = sbr.rel (%p119) target = $region16
    $region15: #{cbam_forward.2} parent=5 // pred_region
      // Predicated region
      $region17: #{cbam_forward.2} parent=15 // pred_check
        %p122 = pneg %p43
      $region18: #{cbam_forward.2} parent=15 // pred_check_branch
        %124 = sbr.rel (%p122) target = $region20
      $region19: #{cbam_forward.2} parent=15 // pred_region
        %s125 = smul.u32 2, %s17
        %p126 = scmp.lt.s32.totalorder %s16, 1
        %s127 = scalar_select %p126, %s16, 1
        %p128 = scmp.lt.s32.totalorder %s125, 1
        %s129 = scalar_select %p128, %s125, 1
        %s130 = smul.addr %s127, 16
        %s131 = sadd.s32 %s129, %s130
        %s132 = smul.addr %s131, 8
        %s133 = scalar_lea.vmem %s0, %s132
        %s134 = smul.u32 2, %s17
      $region20: #{cbam_forward.2} parent=15 // pred_fallthru
        _
    $region16: #{cbam_forward.2} parent=5 // pred_fallthru
      _
    %p135 = scmp.le.s32.totalorder 1, %s9
    %p136 = scmp.lt.s32.totalorder %s9, 3
    %p137 = pnand %p135, %p136
    %p138 = pneg %p137
    // Predicated region
    $region21: #{cbam_forward.2} parent=5 // pred_check
      _
    $region22: #{cbam_forward.2} parent=5 // pred_check_branch
      %140 = sbr.rel (%p137) target = $region24
    $region23: #{cbam_forward.2} parent=5 // pred_region
      %s141 = ssub.s32 %s9, 1
      %s142 = smul.u32 2, %s19
      %p143 = scmp.lt.s32.totalorder %s18, 1
      %s144 = scalar_select %p143, %s18, 1
      %p145 = scmp.lt.s32.totalorder %s142, 1
      %s146 = scalar_select %p145, %s142, 1
      %s147 = smul.addr %s144, 16
      %s148 = sadd.s32 %s146, %s147
      %s149 = smul.addr %s148, 8
      %s150 = scalar_lea.vmem %s0, %s149
      %p151 = pneg %p49
      %p152 = pneg %p46
      %p153 = pneg %p75
      %p154 = pneg %p72
      %p155 = scmp.lt.s32.totalorder %s18, 1
      %s156 = scalar_select %p155, %s18, 1
      %s157 = smul.addr %s156, 8
      %s158 = smul.addr %s157, 8
      %s159 = scalar_lea.vmem %s1, %s158
      %p160 = pneg %p103
      %p161 = pneg %p100
      %s162 = smul.u32 2, %s19
      %p163 = scmp.lt.s32.totalorder %s18, 1
      %s164 = scalar_select %p163, %s18, 1
      %p165 = scmp.lt.s32.totalorder %s162, 1
      %s166 = scalar_select %p165, %s162, 1
      %s167 = smul.addr %s164, 2
      %s168 = sadd.s32 %s166, %s167
      %s169 = smul.addr %s168, 2
      %s170 = scalar_lea.vmem %s2, %s169
      %s171 = smul.u32 2, %s19
      %p172 = scmp.lt.s32.totalorder %s18, 1
      %s173 = scalar_select %p172, %s18, 1
      %p174 = scmp.lt.s32.totalorder %s171, 1
      %s175 = scalar_select %p174, %s171, 1
      %s176 = smul.addr %s173, 16
      %s177 = sadd.s32 %s175, %s176
      %s178 = smul.addr %s177, 8
      %s179 = scalar_lea.vmem %s0, %s178
      %s180 = smul.u32 2, %s19
      %p181 = scmp.lt.s32.totalorder %s18, 1
      %s182 = scalar_select %p181, %s18, 1
      %s183 = smul.addr %s182, 8
      %s184 = smul.addr %s183, 8
      %s185 = scalar_lea.vmem %s1, %s184
      %s186 = smul.u32 2, %s19
      %p187 = scmp.lt.s32.totalorder %s18, 1
      %s188 = scalar_select %p187, %s18, 1
      %p189 = scmp.lt.s32.totalorder %s186, 1
      %s190 = scalar_select %p189, %s186, 1
      %s191 = smul.addr %s188, 2
      %s192 = sadd.s32 %s190, %s191
      %s193 = smul.addr %s192, 2
      %s194 = scalar_lea.vmem %s2, %s193
      %s195 = smul.u32 2, %s19
      %v196 = vld [vmem:[%s179] sm:$0xff]
      %v197 = vld [vmem:[%s179 + $0x8] sm:$0xff]
      %v198 = vld [vmem:[%s179 + $0x10] sm:$0xff]
      %v199 = vld [vmem:[%s179 + $0x18] sm:$0xff]
      %v200 = vld [vmem:[%s179 + $0x20] sm:$0xff]
      %v201 = vld [vmem:[%s179 + $0x28] sm:$0xff]
      %v202 = vld [vmem:[%s179 + $0x30] sm:$0xff]
      %v203 = vld [vmem:[%s179 + $0x38] sm:$0xff]
      %v204 = vld [vmem:[%s179 + $0x40] sm:$0xff]
      %v205 = vld [vmem:[%s179 + $0x48] sm:$0xff]
      %v206 = vld [vmem:[%s179 + $0x50] sm:$0xff]
      %v207 = vld [vmem:[%s179 + $0x58] sm:$0xff]
      %v208 = vld [vmem:[%s179 + $0x60] sm:$0xff]
      %v209 = vld [vmem:[%s179 + $0x68] sm:$0xff]
      %v210 = vld [vmem:[%s179 + $0x70] sm:$0xff]
      %v211 = vld [vmem:[%s179 + $0x78] sm:$0xff]
      %v212 = vadd.f32 %v196, %v198
      %v213 = vadd.f32 %v212, %v200
      %v214 = vadd.f32 %v213, %v202
      %v215 = vadd.f32 %v214, %v204
      %v216 = vadd.f32 %v215, %v206
      %v217 = vadd.f32 %v216, %v208
      %v218 = vadd.f32 %v217, %v210
      %v219 = vrot.slane %v218, 4
      %v220 = vadd.f32 %v218, %v219
      %v221 = vrot.slane %v220, 2
      %v222 = vadd.f32 %v220, %v221
      %v223 = vrot.slane %v222, 1
      %v224 = vadd.f32 %v222, %v223
      %v225 = vadd.f32 %v197, %v199
      %v226 = vadd.f32 %v225, %v201
      %v227 = vadd.f32 %v226, %v203
      %v228 = vadd.f32 %v227, %v205
      %v229 = vadd.f32 %v228, %v207
      %v230 = vadd.f32 %v229, %v209
      %v231 = vadd.f32 %v230, %v211
      %v232 = vrot.slane %v231, 4
      %v233 = vadd.f32 %v231, %v232
      %v234 = vrot.slane %v233, 2
      %v235 = vadd.f32 %v233, %v234
      %v236 = vrot.slane %v235, 1
      %v237 = vadd.f32 %v235, %v236
      %v238 = vmul.f32 %v224, 0.015625
      %v239 = vmul.f32 %v237, 0.015625
      %v242 = vcombine.low %v238, %v239
      %v244 = vunpack.c.l.s4 1966171168
      %v245 = vunpack.c.0.s8 %v244
      %v246 = vlaneseq
      %v247 = vshrl.u32 %v246, 7
      %v248 = vsub.s32 %v245, %v247
      %v249 = vrot.slane %v242, %v248
      %v251 = vunpack.c.l.s4 1966171168
      %v252 = vunpack.c.0.s8 %v251
      %v253 = vlaneseq
      %v254 = vshrl.u32 %v253, 7
      %v255 = vsub.s32 %v252, %v254
      %v256 = vrot.slane %v249, %v255
      %v258 = vlaneseq
      %vm259 = vcmp.ge.s32.totalorder %v258, 0
      %vm260 = vcmp.lt.s32.totalorder %v258, 256
      %vm261 = vmand %vm259, %vm260
      %262 = vst.msk [vmem:[%s194] ss:$2 sm:$0x3] %vm261, %v256
      %v263 = vmax.f32 %v196, %v200
      %v264 = vmax.f32 %v198, %v202
      %v265 = vmax.f32 %v263, %v204
      %v266 = vmax.f32 %v264, %v206
      %v267 = vmax.f32 %v265, %v208
      %v268 = vmax.f32 %v266, %v210
      %v269 = vmax.f32 %v267, %v268
      %v270 = vrot.slane %v269, 4
      %v271 = vmax.f32 %v269, %v270
      %v272 = vrot.slane %v271, 2
      %v273 = vmax.f32 %v271, %v272
      %v274 = vrot.slane %v273, 1
      %v275 = vmax.f32 %v273, %v274
      %v276 = vmax.f32 %v197, %v201
      %v277 = vmax.f32 %v199, %v203
      %v278 = vmax.f32 %v276, %v205
      %v279 = vmax.f32 %v277, %v207
      %v280 = vmax.f32 %v278, %v209
      %v281 = vmax.f32 %v279, %v211
      %v282 = vmax.f32 %v280, %v281
      %v283 = vrot.slane %v282, 4
      %v284 = vmax.f32 %v282, %v283
      %v285 = vrot.slane %v284, 2
      %v286 = vmax.f32 %v284, %v285
      %v287 = vrot.slane %v286, 1
      %v288 = vmax.f32 %v286, %v287
      %v291 = vcombine.low %v275, %v288
      %v293 = vunpack.c.l.s4 1966171168
      %v294 = vunpack.c.0.s8 %v293
      %v295 = vlaneseq
      %v296 = vshrl.u32 %v295, 7
      %v297 = vsub.s32 %v294, %v296
      %v298 = vrot.slane %v291, %v297
      %v300 = vunpack.c.l.s4 1966171168
      %v301 = vunpack.c.0.s8 %v300
      %v302 = vlaneseq
      %v303 = vshrl.u32 %v302, 7
      %v304 = vsub.s32 %v301, %v303
      %v305 = vrot.slane %v298, %v304
      %s307 = scalar_lea.vmem %s194, 1
      %308 = vst.msk [vmem:[%s307] ss:$2 sm:$0x3] %vm261, %v305
      %v309 = vadd.f32 %v196, %v197
      %310 = vadd.xlane.f32.xlu0 %v309
      %v311 = vpop.xlane.xlu0 %310
      %v312 = vadd.f32 %v198, %v199
      %313 = vadd.xlane.f32.xlu0 %v312
      %v314 = vpop.xlane.xlu0 %313
      %v315 = vadd.f32 %v200, %v201
      %316 = vadd.xlane.f32.xlu0 %v315
      %v317 = vpop.xlane.xlu0 %316
      %v318 = vadd.f32 %v202, %v203
      %319 = vadd.xlane.f32.xlu0 %v318
      %v320 = vpop.xlane.xlu0 %319
      %v321 = vadd.f32 %v204, %v205
      %322 = vadd.xlane.f32.xlu0 %v321
      %v323 = vpop.xlane.xlu0 %322
      %v324 = vadd.f32 %v206, %v207
      %325 = vadd.xlane.f32.xlu0 %v324
      %v326 = vpop.xlane.xlu0 %325
      %v327 = vadd.f32 %v208, %v209
      %328 = vadd.xlane.f32.xlu0 %v327
      %v329 = vpop.xlane.xlu0 %328
      %v330 = vadd.f32 %v210, %v211
      %331 = vadd.xlane.f32.xlu0 %v330
      %v332 = vpop.xlane.xlu0 %331
      %v333 = vmul.f32 %v311, 0.00390625
      %v334 = vmul.f32 %v314, 0.00390625
      %v335 = vmul.f32 %v317, 0.00390625
      %v336 = vmul.f32 %v320, 0.00390625
      %v337 = vmul.f32 %v323, 0.00390625
      %v338 = vmul.f32 %v326, 0.00390625
      %v339 = vmul.f32 %v329, 0.00390625
      %v340 = vmul.f32 %v332, 0.00390625
      %v341 = vmax.f32 %v196, %v197
      %342 = vmax.xlane.f32.xlu0 %v341
      %v343 = vpop.xlane.xlu0 %342
      %v344 = vmax.f32 %v198, %v199
      %345 = vmax.xlane.f32.xlu0 %v344
      %v346 = vpop.xlane.xlu0 %345
      %v347 = vmax.f32 %v200, %v201
      %348 = vmax.xlane.f32.xlu0 %v347
      %v349 = vpop.xlane.xlu0 %348
      %v350 = vmax.f32 %v202, %v203
      %351 = vmax.xlane.f32.xlu0 %v350
      %v352 = vpop.xlane.xlu0 %351
      %v353 = vmax.f32 %v204, %v205
      %354 = vmax.xlane.f32.xlu0 %v353
      %v355 = vpop.xlane.xlu0 %354
      %v356 = vmax.f32 %v206, %v207
      %357 = vmax.xlane.f32.xlu0 %v356
      %v358 = vpop.xlane.xlu0 %357
      %v359 = vmax.f32 %v208, %v209
      %360 = vmax.xlane.f32.xlu0 %v359
      %v361 = vpop.xlane.xlu0 %360
      %v362 = vmax.f32 %v210, %v211
      %363 = vmax.xlane.f32.xlu0 %v362
      %v364 = vpop.xlane.xlu0 %363
      %p365 = scmp.eq.s32.totalorder %s19, 0
      // Predicated region
      $region25: #{cbam_forward.2} parent=23 // pred_check
        %p366 = pneg %p365
      $region26: #{cbam_forward.2} parent=23 // pred_check_branch
        %368 = sbr.rel (%p366) target = $region28
      $region27: #{cbam_forward.2} parent=23 // pred_region
        %vm369 = vcmask 7168
        %370 = vst.msk [vmem:[%s185] sm:$0xff] %vm369, %v333
        %371 = vst.msk [vmem:[%s185 + $0x8] sm:$0xff] %vm369, %v334
        %372 = vst.msk [vmem:[%s185 + $0x10] sm:$0xff] %vm369, %v335
        %373 = vst.msk [vmem:[%s185 + $0x18] sm:$0xff] %vm369, %v336
        %374 = vst.msk [vmem:[%s185 + $0x20] sm:$0xff] %vm369, %v337
        %375 = vst.msk [vmem:[%s185 + $0x28] sm:$0xff] %vm369, %v338
        %376 = vst.msk [vmem:[%s185 + $0x30] sm:$0xff] %vm369, %v339
        %377 = vst.msk [vmem:[%s185 + $0x38] sm:$0xff] %vm369, %v340
        %vm378 = vcmask 15368
        %379 = vst.msk [vmem:[%s185] sm:$0xff] %vm378, %v343
        %380 = vst.msk [vmem:[%s185 + $0x8] sm:$0xff] %vm378, %v346
        %381 = vst.msk [vmem:[%s185 + $0x10] sm:$0xff] %vm378, %v349
        %382 = vst.msk [vmem:[%s185 + $0x18] sm:$0xff] %vm378, %v352
        %383 = vst.msk [vmem:[%s185 + $0x20] sm:$0xff] %vm378, %v355
        %384 = vst.msk [vmem:[%s185 + $0x28] sm:$0xff] %vm378, %v358
        %385 = vst.msk [vmem:[%s185 + $0x30] sm:$0xff] %vm378, %v361
        %386 = vst.msk [vmem:[%s185 + $0x38] sm:$0xff] %vm378, %v364
      $region28: #{cbam_forward.2} parent=23 // pred_fallthru
        _
      %p387 = scmp.gt.s32.totalorder %s19, 0
      // Predicated region
      $region29: #{cbam_forward.2} parent=23 // pred_check
        %p388 = pneg %p387
      $region30: #{cbam_forward.2} parent=23 // pred_check_branch
        %390 = sbr.rel (%p388) target = $region32
      $region31: #{cbam_forward.2} parent=23 // pred_region
        %v391 = vld [vmem:[%s185] sm:$0xff]
        %v392 = vld [vmem:[%s185 + $0x8] sm:$0xff]
        %v393 = vld [vmem:[%s185 + $0x10] sm:$0xff]
        %v394 = vld [vmem:[%s185 + $0x18] sm:$0xff]
        %v395 = vld [vmem:[%s185 + $0x20] sm:$0xff]
        %v396 = vld [vmem:[%s185 + $0x28] sm:$0xff]
        %v397 = vld [vmem:[%s185 + $0x30] sm:$0xff]
        %v398 = vld [vmem:[%s185 + $0x38] sm:$0xff]
        %v399 = vadd.f32 %v391, %v333
        %v400 = vadd.f32 %v392, %v334
        %v401 = vadd.f32 %v393, %v335
        %v402 = vadd.f32 %v394, %v336
        %v403 = vadd.f32 %v395, %v337
        %v404 = vadd.f32 %v396, %v338
        %v405 = vadd.f32 %v397, %v339
        %v406 = vadd.f32 %v398, %v340
        %vm407 = vcmask 7168
        %408 = vst.msk [vmem:[%s185] sm:$0xff] %vm407, %v399
        %409 = vst.msk [vmem:[%s185 + $0x8] sm:$0xff] %vm407, %v400
        %410 = vst.msk [vmem:[%s185 + $0x10] sm:$0xff] %vm407, %v401
        %411 = vst.msk [vmem:[%s185 + $0x18] sm:$0xff] %vm407, %v402
        %412 = vst.msk [vmem:[%s185 + $0x20] sm:$0xff] %vm407, %v403
        %413 = vst.msk [vmem:[%s185 + $0x28] sm:$0xff] %vm407, %v404
        %414 = vst.msk [vmem:[%s185 + $0x30] sm:$0xff] %vm407, %v405
        %415 = vst.msk [vmem:[%s185 + $0x38] sm:$0xff] %vm407, %v406
        %v416 = vld [vmem:[%s185] sm:$0xff]
        %v417 = vld [vmem:[%s185 + $0x8] sm:$0xff]
        %v418 = vld [vmem:[%s185 + $0x10] sm:$0xff]
        %v419 = vld [vmem:[%s185 + $0x18] sm:$0xff]
        %v420 = vld [vmem:[%s185 + $0x20] sm:$0xff]
        %v421 = vld [vmem:[%s185 + $0x28] sm:$0xff]
        %v422 = vld [vmem:[%s185 + $0x30] sm:$0xff]
        %v423 = vld [vmem:[%s185 + $0x38] sm:$0xff]
        %v424 = vmax.f32 %v416, %v343
        %v425 = vmax.f32 %v417, %v346
        %v426 = vmax.f32 %v418, %v349
        %v427 = vmax.f32 %v419, %v352
        %v428 = vmax.f32 %v420, %v355
        %v429 = vmax.f32 %v421, %v358
        %v430 = vmax.f32 %v422, %v361
        %v431 = vmax.f32 %v423, %v364
        %vm432 = vcmask 15368
        %433 = vst.msk [vmem:[%s185] sm:$0xff] %vm432, %v424
        %434 = vst.msk [vmem:[%s185 + $0x8] sm:$0xff] %vm432, %v425
        %435 = vst.msk [vmem:[%s185 + $0x10] sm:$0xff] %vm432, %v426
        %436 = vst.msk [vmem:[%s185 + $0x18] sm:$0xff] %vm432, %v427
        %437 = vst.msk [vmem:[%s185 + $0x20] sm:$0xff] %vm432, %v428
        %438 = vst.msk [vmem:[%s185 + $0x28] sm:$0xff] %vm432, %v429
        %439 = vst.msk [vmem:[%s185 + $0x30] sm:$0xff] %vm432, %v430
        %440 = vst.msk [vmem:[%s185 + $0x38] sm:$0xff] %vm432, %v431
      $region32: #{cbam_forward.2} parent=23 // pred_fallthru
        _
      %p441 = scmp.lt.s32.totalorder %s18, 1
      %s442 = scalar_select %p441, %s18, 1
      %s443 = smul.addr %s442, 8
      %s444 = smul.addr %s443, 8
      %s445 = scalar_lea.vmem %s1, %s444
      %s446 = smul.u32 2, %s19
      %p447 = scmp.lt.s32.totalorder %s18, 1
      %s448 = scalar_select %p447, %s18, 1
      %p449 = scmp.lt.s32.totalorder %s446, 1
      %s450 = scalar_select %p449, %s446, 1
      %s451 = smul.addr %s448, 2
      %s452 = sadd.s32 %s450, %s451
      %s453 = smul.addr %s452, 2
      %s454 = scalar_lea.vmem %s2, %s453
      // Predicated region
      $region33: #{cbam_forward.2} parent=23 // pred_check
        %p455 = pneg %p72
      $region34: #{cbam_forward.2} parent=23 // pred_check_branch
        %457 = sbr.rel (%p455) target = $region36
      $region35: #{cbam_forward.2} parent=23 // pred_region
        _
      $region36: #{cbam_forward.2} parent=23 // pred_fallthru
        _
      // Predicated region
      $region37: #{cbam_forward.2} parent=23 // pred_check
        %p458 = pneg %p100
      $region38: #{cbam_forward.2} parent=23 // pred_check_branch
        %460 = sbr.rel (%p458) target = $region40
      $region39: #{cbam_forward.2} parent=23 // pred_region
        %s461 = smul.u32 2, %s19
      $region40: #{cbam_forward.2} parent=23 // pred_fallthru
        _
    $region24: #{cbam_forward.2} parent=5 // pred_fallthru
      _
    %p462 = scmp.le.s32.totalorder 2, %s9
    // Predicated region
    $region41: #{cbam_forward.2} parent=5 // pred_check
      %p463 = pneg %p462
    $region42: #{cbam_forward.2} parent=5 // pred_check_branch
      %465 = sbr.rel (%p463) target = $region44
    $region43: #{cbam_forward.2} parent=5 // pred_region
      %s466 = ssub.s32 %s9, 2
      // Predicated region
      $region45: #{cbam_forward.2} parent=43 // pred_check
        %p467 = pneg %p78
      $region46: #{cbam_forward.2} parent=43 // pred_check_branch
        %469 = sbr.rel (%p467) target = $region48
      $region47: #{cbam_forward.2} parent=43 // pred_region
        %p470 = scmp.lt.s32.totalorder %s20, 1
        %s471 = scalar_select %p470, %s20, 1
        %s472 = smul.addr %s471, 8
        %s473 = smul.addr %s472, 8
        %s474 = scalar_lea.vmem %s1, %s473
      $region48: #{cbam_forward.2} parent=43 // pred_fallthru
        _
      // Predicated region
      $region49: #{cbam_forward.2} parent=43 // pred_check
        %p475 = pneg %p106
      $region50: #{cbam_forward.2} parent=43 // pred_check_branch
        %477 = sbr.rel (%p475) target = $region52
      $region51: #{cbam_forward.2} parent=43 // pred_region
        %s478 = smul.u32 2, %s21
        %p479 = scmp.lt.s32.totalorder %s20, 1
        %s480 = scalar_select %p479, %s20, 1
        %p481 = scmp.lt.s32.totalorder %s478, 1
        %s482 = scalar_select %p481, %s478, 1
        %s483 = smul.addr %s480, 2
        %s484 = sadd.s32 %s482, %s483
        %s485 = smul.addr %s484, 2
        %s486 = scalar_lea.vmem %s2, %s485
      $region52: #{cbam_forward.2} parent=43 // pred_fallthru
        _
    $region44: #{cbam_forward.2} parent=5 // pred_fallthru
      _
  $region6: #{cbam_forward.2} parent=0 // loop_footer
    %s13 = sadd.s32 1, %s9
  $region7: #{cbam_forward.2} parent=0 // loop_footer_branch
    %8 = sbr.rel target = $region3
  $region8: #{cbam_forward.2} parent=0 // loop_exit
    _

// kernel: cbam_forward.3
$region0: #{cbam_forward.3}
  #allocation0 [shape = 'u32[]', space=smem, size = 0x4, offset = 0x4, fixed_abs, tag = 'smem constant byte address 0x4 - core index']
  #allocation1 [shape = 'u32[144,128]{1,0:T(1,128)}', space=vmem, size = 0x12000, scoped, tag = 'internal scratch']
  #allocation2 [shape = 'f32[1,1,256]{2,1,0:T(1,128)}', space=vmem, size = 0x400, scoped, tag = 'scratch operand']
  #allocation3 [shape = 'f32[64,1]{1,0:T(8,128)}', space=vmem, size = 0x8000, scoped, tag = 'scratch operand']
  %s0 = inlined_call_operand.vmem [shape: f32[2,64,2], index: 0, kind: input, shape index: {}]
  %s1 = inlined_call_operand.vmem [shape: f32[2,2,22,22], index: 1, kind: input, shape index: {}]
  %s2 = inlined_call_operand.vmem [shape: f32[4,64], index: 2, kind: input, shape index: {}]
  %s3 = inlined_call_operand.vmem [shape: f32[64,4], index: 3, kind: input, shape index: {}]
  %s4 = inlined_call_operand.vmem [shape: f32[98], index: 4, kind: input, shape index: {}]
  %s5 = inlined_call_operand.vmem [shape: f32[2,64,256], index: 5, kind: output, shape index: {}]
  %s6 = sld [smem:[#allocation0]]
  $region61: #{cbam_forward.3} parent=0
    _
  %s8 = ssub.s32 1, %s6
  %s9 = scalar_select 0, %s8, %s6
  $region1: #{cbam_forward.3} parent=0
    #allocation4 [shape = 'u8[512]{0}', space=smem, size = 0x200, scoped, tag = 'input window, operand 4, single buffered']
    #allocation5 [shape = 's32[2]{0}', space=sflag, size = 0x8, scoped, tag = 'scoped memory for cbam_forward.3']
    %10 = vsyncpa [#allocation5], 0
    loop: start=0, step=1, limit=4
    $region2: #{cbam_forward.3} parent=1 // loop_pre_header
      _
    $region3: #{cbam_forward.3} parent=1 // loop_header
      %s12 = sphi 0, %s16
      %p13 = scmp.ge.s32.totalorder %s12, 4
      %s19 = sphi 0, %s31
      %s20 = sphi 0, %s27
      %s21 = sphi 0, %s19
      %s22 = sphi 0, %s20
      %s23 = sphi 0, %s21
      %s24 = sphi 0, %s22
      %s34 = sphi 0, %s36
      %s37 = sphi 0, %s34
      %s38 = sphi 0, %s37
      %s54 = sphi 0, %s38
      %s60 = sphi 0, %s62
      %s63 = sphi 0, %s60
      %s64 = sphi 0, %s63
      %s80 = sphi 0, %s64
      %s84 = sphi 0, %s84
      %s86 = sphi 0, %s84
      %s87 = sphi 0, %s86
      %s101 = sphi 0, %s87
      %s105 = sphi 0, %s105
      %s107 = sphi 0, %s105
      %s108 = sphi 0, %s107
      %s122 = sphi 0, %s108
      %s126 = sphi 0, %s126
      %s128 = sphi 0, %s126
      %s129 = sphi 0, %s128
      %s143 = sphi 0, %s129
      %s151 = sphi 0, %s153
      %s154 = sphi 0, %s151
      %s155 = sphi 0, %s154
      %s171 = sphi 0, %s155
    $region4: #{cbam_forward.3} parent=1 // loop_header_branch
      %15 = sbr.rel (%p13) target = $region8
    $region5: #{cbam_forward.3} parent=1 // loop_body
      %s17 = ssub.s32 %s12, 1
      %s18 = ssub.s32 %s12, 2
      %s25 = sadd.s32 1, %s20
      %p26 = scmp.ge.s32.totalorder %s25, 1
      %s27 = scalar_select %p26, 0, %s25
      %s28 = sadd.s32 1, %s19
      %s29 = scalar_select %p26, %s28, %s19
      %p30 = scmp.ge.s32.totalorder %s29, 2
      %s31 = scalar_select %p30, 0, %s29
      %s32 = ssub.s32 %s19, %s31
      %p33 = scmp.eq.s32.totalorder %s32, 0
      %s35 = sadd.s32 %s34, 1
      %s36 = scalar_select %p33, %s34, %s35
      %p39 = pneg %p33
      %p40 = scmp.eq.s32.totalorder %s12, 1
      %p41 = por %p39, %p40
      %p42 = scmp.ne.s32.totalorder %s34, %s37
      %p43 = scmp.eq.s32.totalorder %s12, 0
      %p44 = por %p42, %p43
      %p45 = scmp.ne.s32.totalorder %s34, %s37
      %p46 = scmp.eq.s32.totalorder %s17, 1
      %p47 = por %p45, %p46
      %p48 = scmp.ne.s32.totalorder %s37, %s38
      %p49 = scmp.eq.s32.totalorder %s17, 0
      %p50 = por %p48, %p49
      %p51 = scmp.ne.s32.totalorder %s37, %s38
      %p52 = scmp.eq.s32.totalorder %s18, 1
      %p53 = por %p51, %p52
      %p55 = scmp.ne.s32.totalorder %s38, %s54
      %p56 = scmp.eq.s32.totalorder %s18, 0
      %p57 = por %p55, %p56
      %s58 = ssub.s32 %s19, %s31
      %p59 = scmp.eq.s32.totalorder %s58, 0
      %s61 = sadd.s32 %s60, 1
      %s62 = scalar_select %p59, %s60, %s61
      %p65 = pneg %p59
      %p66 = scmp.eq.s32.totalorder %s12, 1
      %p67 = por %p65, %p66
      %p68 = scmp.ne.s32.totalorder %s60, %s63
      %p69 = scmp.eq.s32.totalorder %s12, 0
      %p70 = por %p68, %p69
      %p71 = scmp.ne.s32.totalorder %s60, %s63
      %p72 = scmp.eq.s32.totalorder %s17, 1
      %p73 = por %p71, %p72
      %p74 = scmp.ne.s32.totalorder %s63, %s64
      %p75 = scmp.eq.s32.totalorder %s17, 0
      %p76 = por %p74, %p75
      %p77 = scmp.ne.s32.totalorder %s63, %s64
      %p78 = scmp.eq.s32.totalorder %s18, 1
      %p79 = por %p77, %p78
      %p81 = scmp.ne.s32.totalorder %s64, %s80
      %p82 = scmp.eq.s32.totalorder %s18, 0
      %p83 = por %p81, %p82
      %s85 = sadd.s32 %s84, 1
      %p88 = scmp.eq.s32.totalorder %s12, 1
      %p89 = scmp.ne.s32.totalorder %s84, %s86
      %p90 = scmp.eq.s32.totalorder %s12, 0
      %p91 = por %p89, %p90
      %p92 = scmp.ne.s32.totalorder %s84, %s86
      %p93 = scmp.eq.s32.totalorder %s17, 1
      %p94 = por %p92, %p93
      %p95 = scmp.ne.s32.totalorder %s86, %s87
      %p96 = scmp.eq.s32.totalorder %s17, 0
      %p97 = por %p95, %p96
      %p98 = scmp.ne.s32.totalorder %s86, %s87
      %p99 = scmp.eq.s32.totalorder %s18, 1
      %p100 = por %p98, %p99
      %p102 = scmp.ne.s32.totalorder %s87, %s101
      %p103 = scmp.eq.s32.totalorder %s18, 0
      %p104 = por %p102, %p103
      %s106 = sadd.s32 %s105, 1
      %p109 = scmp.eq.s32.totalorder %s12, 1
      %p110 = scmp.ne.s32.totalorder %s105, %s107
      %p111 = scmp.eq.s32.totalorder %s12, 0
      %p112 = por %p110, %p111
      %p113 = scmp.ne.s32.totalorder %s105, %s107
      %p114 = scmp.eq.s32.totalorder %s17, 1
      %p115 = por %p113, %p114
      %p116 = scmp.ne.s32.totalorder %s107, %s108
      %p117 = scmp.eq.s32.totalorder %s17, 0
      %p118 = por %p116, %p117
      %p119 = scmp.ne.s32.totalorder %s107, %s108
      %p120 = scmp.eq.s32.totalorder %s18, 1
      %p121 = por %p119, %p120
      %p123 = scmp.ne.s32.totalorder %s108, %s122
      %p124 = scmp.eq.s32.totalorder %s18, 0
      %p125 = por %p123, %p124
      %s127 = sadd.s32 %s126, 1
      %p130 = scmp.eq.s32.totalorder %s12, 1
      %p131 = scmp.ne.s32.totalorder %s126, %s128
      %p132 = scmp.eq.s32.totalorder %s12, 0
      %p133 = por %p131, %p132
      %p134 = scmp.ne.s32.totalorder %s126, %s128
      %p135 = scmp.eq.s32.totalorder %s17, 1
      %p136 = por %p134, %p135
      %p137 = scmp.ne.s32.totalorder %s128, %s129
      %p138 = scmp.eq.s32.totalorder %s17, 0
      %p139 = por %p137, %p138
      %p140 = scmp.ne.s32.totalorder %s128, %s129
      %p141 = scmp.eq.s32.totalorder %s18, 1
      %p142 = por %p140, %p141
      %p144 = scmp.ne.s32.totalorder %s129, %s143
      %p145 = scmp.eq.s32.totalorder %s18, 0
      %p146 = por %p144, %p145
      %s147 = ssub.s32 %s19, %s31
      %s148 = ssub.s32 %s20, %s27
      %s149 = sor.u32 %s147, %s148
      %p150 = scmp.eq.s32.totalorder %s149, 0
      %s152 = sadd.s32 %s151, 1
      %s153 = scalar_select %p150, %s151, %s152
      %p156 = pneg %p150
      %p157 = scmp.eq.s32.totalorder %s12, 1
      %p158 = por %p156, %p157
      %p159 = scmp.ne.s32.totalorder %s151, %s154
      %p160 = scmp.eq.s32.totalorder %s12, 0
      %p161 = por %p159, %p160
      %p162 = scmp.ne.s32.totalorder %s151, %s154
      %p163 = scmp.eq.s32.totalorder %s17, 1
      %p164 = por %p162, %p163
      %p165 = scmp.ne.s32.totalorder %s154, %s155
      %p166 = scmp.eq.s32.totalorder %s17, 0
      %p167 = por %p165, %p166
      %p168 = scmp.ne.s32.totalorder %s154, %s155
      %p169 = scmp.eq.s32.totalorder %s18, 1
      %p170 = por %p168, %p169
      %p172 = scmp.ne.s32.totalorder %s155, %s171
      %p173 = scmp.eq.s32.totalorder %s18, 0
      %p174 = por %p172, %p173
      %p175 = scmp.le.s32.totalorder 1, %s12
      %p176 = scmp.lt.s32.totalorder %s12, 3
      %p177 = pnand %p175, %p176
      %p178 = pneg %p177
      // Predicated region
      $region9: #{cbam_forward.3} parent=5 // pred_check
        _
      $region10: #{cbam_forward.3} parent=5 // pred_check_branch
        %180 = sbr.rel (%p177) target = $region12
      $region11: #{cbam_forward.3} parent=5 // pred_region
        %s181 = ssub.s32 %s12, 1
        // Predicated region
        $region13: #{cbam_forward.3} parent=11 // pred_check
          %p182 = pneg %p97
        $region14: #{cbam_forward.3} parent=11 // pred_check_branch
          %184 = sbr.rel (%p182) target = $region16
        $region15: #{cbam_forward.3} parent=11 // pred_region
          _
        $region16: #{cbam_forward.3} parent=11 // pred_fallthru
          _
        // Predicated region
        $region17: #{cbam_forward.3} parent=11 // pred_check
          %p185 = pneg %p118
        $region18: #{cbam_forward.3} parent=11 // pred_check_branch
          %187 = sbr.rel (%p185) target = $region20
        $region19: #{cbam_forward.3} parent=11 // pred_region
          _
        $region20: #{cbam_forward.3} parent=11 // pred_fallthru
          _
        // Predicated region
        $region21: #{cbam_forward.3} parent=11 // pred_check
          %p188 = pneg %p139
        $region22: #{cbam_forward.3} parent=11 // pred_check_branch
          %190 = sbr.rel (%p188) target = $region24
        $region23: #{cbam_forward.3} parent=11 // pred_region
          %s192 = ssub.s32 16, 16
          %193 = vsyncadd [#allocation5], %s192
          %s195 = sshll.u32 %s4, 4
          %s196 = int_to_ptr.vmem [resolvable:$true] %s195
          %198 = dma.vmem_to_smem %s196, 16, [#allocation4], [#allocation5]
        $region24: #{cbam_forward.3} parent=11 // pred_fallthru
          _
      $region12: #{cbam_forward.3} parent=5 // pred_fallthru
        _
      %p199 = scmp.lt.s32.totalorder %s12, 2
      // Predicated region
      $region25: #{cbam_forward.3} parent=5 // pred_check
        %p200 = pneg %p199
      $region26: #{cbam_forward.3} parent=5 // pred_check_branch
        %202 = sbr.rel (%p200) target = $region28
      $region27: #{cbam_forward.3} parent=5 // pred_region
        // Predicated region
        $region29: #{cbam_forward.3} parent=27 // pred_check
          %p203 = pneg %p44
        $region30: #{cbam_forward.3} parent=27 // pred_check_branch
          %205 = sbr.rel (%p203) target = $region32
        $region31: #{cbam_forward.3} parent=27 // pred_region
          %p206 = scmp.lt.s32.totalorder %s19, 1
          %s207 = scalar_select %p206, %s19, 1
          %s208 = smul.addr %s207, 8
          %s209 = smul.addr %s208, 8
          %s210 = scalar_lea.vmem %s0, %s209
        $region32: #{cbam_forward.3} parent=27 // pred_fallthru
          _
        // Predicated region
        $region33: #{cbam_forward.3} parent=27 // pred_check
          %p211 = pneg %p70
        $region34: #{cbam_forward.3} parent=27 // pred_check_branch
          %213 = sbr.rel (%p211) target = $region36
        $region35: #{cbam_forward.3} parent=27 // pred_region
          %p214 = scmp.lt.s32.totalorder %s19, 1
          %s215 = scalar_select %p214, %s19, 1
          %s216 = smul.addr %s215, 6
          %s217 = smul.addr %s216, 8
          %s218 = scalar_lea.vmem %s1, %s217
        $region36: #{cbam_forward.3} parent=27 // pred_fallthru
          _
      $region28: #{cbam_forward.3} parent=5 // pred_fallthru
        _
      %p219 = scmp.le.s32.totalorder 1, %s12
      %p220 = scmp.lt.s32.totalorder %s12, 3
      %p221 = pnand %p219, %p220
      %p222 = pneg %p221
      // Predicated region
      $region37: #{cbam_forward.3} parent=5 // pred_check
        _
      $region38: #{cbam_forward.3} parent=5 // pred_check_branch
        %224 = sbr.rel (%p221) target = $region40
      $region39: #{cbam_forward.3} parent=5 // pred_region
        %s225 = ssub.s32 %s12, 1
        // Predicated region
        $region41: #{cbam_forward.3} parent=39 // pred_check
          %p226 = pneg %p139
        $region42: #{cbam_forward.3} parent=39 // pred_check_branch
          %228 = sbr.rel (%p226) target = $region44
        $region43: #{cbam_forward.3} parent=39 // pred_region
          %229 = dma.done [#allocation5], 16
        $region44: #{cbam_forward.3} parent=39 // pred_fallthru
          _
        %230 = sfence
        %p231 = scmp.lt.s32.totalorder %s21, 1
        %s232 = scalar_select %p231, %s21, 1
        %s233 = smul.addr %s232, 8
        %s234 = smul.addr %s233, 8
        %s235 = scalar_lea.vmem %s0, %s234
        %p236 = pneg %p50
        %p237 = pneg %p47
        %p238 = scmp.lt.s32.totalorder %s21, 1
        %s239 = scalar_select %p238, %s21, 1
        %s240 = smul.addr %s239, 6
        %s241 = smul.addr %s240, 8
        %s242 = scalar_lea.vmem %s1, %s241
        %p243 = pneg %p76
        %p244 = pneg %p73
        %p245 = pneg %p97
        %p246 = pneg %p94
        %p247 = pneg %p118
        %p248 = pneg %p115
        %p249 = pneg %p139
        %p250 = pneg %p136
        %p251 = pneg %p167
        %p252 = pneg %p164
        %s253 = smul.u32 2, %s22
        %p254 = scmp.lt.s32.totalorder %s21, 1
        %s255 = scalar_select %p254, %s21, 1
        %p256 = scmp.lt.s32.totalorder %s253, 1
        %s257 = scalar_select %p256, %s253, 1
        %s258 = smul.addr %s255, 16
        %s259 = sadd.s32 %s257, %s258
        %s260 = smul.addr %s259, 8
        %s261 = scalar_lea.vmem %s5, %s260
        %p262 = scmp.lt.s32.totalorder %s21, 1
        %s263 = scalar_select %p262, %s21, 1
        %s264 = smul.addr %s263, 8
        %s265 = smul.addr %s264, 8
        %s266 = scalar_lea.vmem %s0, %s265
        %p267 = scmp.lt.s32.totalorder %s21, 1
        %s268 = scalar_select %p267, %s21, 1
        %s269 = smul.addr %s268, 6
        %s270 = smul.addr %s269, 8
        %s271 = scalar_lea.vmem %s1, %s270
        %s272 = smul.u32 2, %s22
        %p273 = scmp.lt.s32.totalorder %s21, 1
        %s274 = scalar_select %p273, %s21, 1
        %p275 = scmp.lt.s32.totalorder %s272, 1
        %s276 = scalar_select %p275, %s272, 1
        %s277 = smul.addr %s274, 16
        %s278 = sadd.s32 %s276, %s277
        %s279 = smul.addr %s278, 8
        %s280 = scalar_lea.vmem %s5, %s279
        %s281 = smul.u32 2, %s22
        %p282 = scmp.eq.s32.totalorder %s22, 0
        // Predicated region
        $region45: #{cbam_forward.3} parent=39 // pred_check
          %p283 = pneg %p282
        $region46: #{cbam_forward.3} parent=39 // pred_check_branch
          %285 = sbr.rel (%p283) target = $region48
        $region47: #{cbam_forward.3} parent=39 // pred_region
          %v286 = vld [vmem:[%s266] sm:$0xff]
          %v287 = vld [vmem:[%s266 + $0x8] sm:$0xff]
          %v288 = vld [vmem:[%s266 + $0x10] sm:$0xff]
          %v289 = vld [vmem:[%s266 + $0x18] sm:$0xff]
          %v290 = vld [vmem:[%s266 + $0x20] sm:$0xff]
          %v291 = vld [vmem:[%s266 + $0x28] sm:$0xff]
          %v292 = vld [vmem:[%s266 + $0x30] sm:$0xff]
          %v293 = vld [vmem:[%s266 + $0x38] sm:$0xff]
          %v294 = vld [vmem:[%s2] sm:$0xf]
          %vm295 = vcmask 523264
          %v297 = vsel %vm295, %v294, 0
          %299 = vmatprep.subr.mxu0 0.0
          %300 = vmatpush1.msra.mxu0 %v286
          %301 = vmatprep.subr.mxu0 0.0
          %302 = vmatpush1.msra.mxu0 %v287
          %303 = vmatprep.subr.mxu0 0.0
          %304 = vmatpush1.msra.mxu0 %v288
          %305 = vmatprep.subr.mxu0 0.0
          %306 = vmatpush1.msra.mxu0 %v289
          %307 = vmatprep.subr.mxu0 0.0
          %308 = vmatpush1.msra.mxu0 %v290
          %309 = vmatprep.subr.mxu0 0.0
          %310 = vmatpush1.msra.mxu0 %v291
          %311 = vmatprep.subr.mxu0 0.0
          %312 = vmatpush1.msra.mxu0 %v292
          %313 = vmatprep.subr.mxu0 0.0
          %314 = vmatpush1.msra.mxu0 %v293
          %315 = vmatprep.subr.mxu0 0.0
          %316 = vmatpush1.msra.mxu0 0.0
          %317 = vmatprep.subr.mxu0 0.0
          %318 = vmatpush1.msra.mxu0 0.0
          %319 = vmatprep.subr.mxu0 0.0
          %320 = vmatpush1.msra.mxu0 0.0
          %321 = vmatprep.subr.mxu0 0.0
          %322 = vmatpush1.msra.mxu0 0.0
          %323 = vmatprep.subr.mxu0 0.0
          %324 = vmatpush1.msra.mxu0 0.0
          %325 = vmatprep.subr.mxu0 0.0
          %326 = vmatpush1.msra.mxu0 0.0
          %327 = vmatprep.subr.mxu0 0.0
          %328 = vmatpush1.msra.mxu0 0.0
          %329 = vmatprep.subr.mxu0 0.0
          %330 = vmatpush1.msra.mxu0 0.0
          %331 = vmatprep.subr.mxu0 0.0
          %332 = vmatpush1.msra.mxu0 0.0
          %333 = vmatprep.subr.mxu0 0.0
          %334 = vmatpush1.msra.mxu0 0.0
          %335 = vmatprep.subr.mxu0 0.0
          %336 = vmatpush1.msra.mxu0 0.0
          %337 = vmatprep.subr.mxu0 0.0
          %338 = vmatpush1.msra.mxu0 0.0
          %339 = vmatprep.subr.mxu0 0.0
          %340 = vmatpush1.msra.mxu0 0.0
          %341 = vmatprep.subr.mxu0 0.0
          %342 = vmatpush1.msra.mxu0 0.0
          %343 = vmatprep.subr.mxu0 0.0
          %344 = vmatpush1.msra.mxu0 0.0
          %345 = vmatprep.subr.mxu0 0.0
          %346 = vmatpush1.msra.mxu0 0.0
          %347 = vmatprep.subr.mxu0 0.0
          %348 = vmatpush1.msra.mxu0 0.0
          %349 = vmatprep.subr.mxu0 0.0
          %350 = vmatpush1.msra.mxu0 0.0
          %351 = vmatprep.subr.mxu0 0.0
          %352 = vmatpush1.msra.mxu0 0.0
          %353 = vmatprep.subr.mxu0 0.0
          %354 = vmatpush1.msra.mxu0 0.0
          %355 = vmatprep.subr.mxu0 0.0
          %356 = vmatpush1.msra.mxu0 0.0
          %357 = vmatprep.subr.mxu0 0.0
          %358 = vmatpush1.msra.mxu0 0.0
          %359 = vmatprep.subr.mxu0 0.0
          %360 = vmatpush1.msra.mxu0 0.0
          %361 = vmatprep.subr.mxu0 0.0
          %362 = vmatpush1.msra.mxu0 0.0
          %363 = vmatprep.mubr.f32.mxu0 0.0
          %364 = vmatmul.mubr.f32.gmra.mrb[0].mxu0 %v297
          %v365 = vpop.f32.mrb[0].mxu0
          %v366 = vadd.f32 0.0, %v365
          %v367 = vpop.f32.mrb[0].mxu0
          %368 = vdwg.mxu0
          %v369 = vmax.f32 %v366, 0.0
          %v370 = vld [vmem:[%s3] sm:$0xff]
          %v371 = vld [vmem:[%s3 + $0x8] sm:$0xff]
          %v372 = vld [vmem:[%s3 + $0x10] sm:$0xff]
          %v373 = vld [vmem:[%s3 + $0x18] sm:$0xff]
          %v374 = vld [vmem:[%s3 + $0x20] sm:$0xff]
          %v375 = vld [vmem:[%s3 + $0x28] sm:$0xff]
          %v376 = vld [vmem:[%s3 + $0x30] sm:$0xff]
          %v377 = vld [vmem:[%s3 + $0x38] sm:$0xff]
          %vm378 = vcmask 31744
          %v380 = vsel %vm378, %v370, 0
          %v383 = vsel %vm378, %v371, 0
          %v386 = vsel %vm378, %v372, 0
          %v389 = vsel %vm378, %v373, 0
          %v392 = vsel %vm378, %v374, 0
          %v395 = vsel %vm378, %v375, 0
          %v398 = vsel %vm378, %v376, 0
          %v401 = vsel %vm378, %v377, 0
          %vm403 = vcmask 1043456
          %v405 = vsel %vm403, %v369, 0
          %407 = vmatprep.subr.mxu0 0.0
          %408 = vmatpush1.msra.mxu0 %v405
          %409 = vmatprep.subr.mxu0 0.0
          %410 = vmatpush1.msra.mxu0 0.0
          %411 = vmatprep.subr.mxu0 0.0
          %412 = vmatpush1.msra.mxu0 0.0
          %413 = vmatprep.subr.mxu0 0.0
          %414 = vmatpush1.msra.mxu0 0.0
          %415 = vmatprep.subr.mxu0 0.0
          %416 = vmatpush1.msra.mxu0 0.0
          %417 = vmatprep.subr.mxu0 0.0
          %418 = vmatpush1.msra.mxu0 0.0
          %419 = vmatprep.subr.mxu0 0.0
          %420 = vmatpush1.msra.mxu0 0.0
          %421 = vmatprep.subr.mxu0 0.0
          %422 = vmatpush1.msra.mxu0 0.0
          %423 = vmatprep.subr.mxu0 0.0
          %424 = vmatpush1.msra.mxu0 0.0
          %425 = vmatprep.subr.mxu0 0.0
          %426 = vmatpush1.msra.mxu0 0.0
          %427 = vmatprep.subr.mxu0 0.0
          %428 = vmatpush1.msra.mxu0 0.0
          %429 = vmatprep.subr.mxu0 0.0
          %430 = vmatpush1.msra.mxu0 0.0
          %431 = vmatprep.subr.mxu0 0.0
          %432 = vmatpush1.msra.mxu0 0.0
          %433 = vmatprep.subr.mxu0 0.0
          %434 = vmatpush1.msra.mxu0 0.0
          %435 = vmatprep.subr.mxu0 0.0
          %436 = vmatpush1.msra.mxu0 0.0
          %437 = vmatprep.subr.mxu0 0.0
          %438 = vmatpush1.msra.mxu0 0.0
          %439 = vmatprep.subr.mxu0 0.0
          %440 = vmatpush1.msra.mxu0 0.0
          %441 = vmatprep.subr.mxu0 0.0
          %442 = vmatpush1.msra.mxu0 0.0
          %443 = vmatprep.subr.mxu0 0.0
          %444 = vmatpush1.msra.mxu0 0.0
          %445 = vmatprep.subr.mxu0 0.0
          %446 = vmatpush1.msra.mxu0 0.0
          %447 = vmatprep.subr.mxu0 0.0
          %448 = vmatpush1.msra.mxu0 0.0
          %449 = vmatprep.subr.mxu0 0.0
          %450 = vmatpush1.msra.mxu0 0.0
          %451 = vmatprep.subr.mxu0 0.0
          %452 = vmatpush1.msra.mxu0 0.0
          %453 = vmatprep.subr.mxu0 0.0
          %454 = vmatpush1.msra.mxu0 0.0
          %455 = vmatprep.subr.mxu0 0.0
          %456 = vmatpush1.msra.mxu0 0.0
          %457 = vmatprep.subr.mxu0 0.0
          %458 = vmatpush1.msra.mxu0 0.0
          %459 = vmatprep.subr.mxu0 0.0
          %460 = vmatpush1.msra.mxu0 0.0
          %461 = vmatprep.subr.mxu0 0.0
          %462 = vmatpush1.msra.mxu0 0.0
          %463 = vmatprep.subr.mxu0 0.0
          %464 = vmatpush1.msra.mxu0 0.0
          %465 = vmatprep.subr.mxu0 0.0
          %466 = vmatpush1.msra.mxu0 0.0
          %467 = vmatprep.subr.mxu0 0.0
          %468 = vmatpush1.msra.mxu0 0.0
          %469 = vmatprep.subr.mxu0 0.0
          %470 = vmatpush1.msra.mxu0 0.0
          %471 = vmatprep.mubr.f32.mxu0 0.0
          %472 = vmatmul.mubr.f32.gmra.mrb[0].mxu0 %v380
          %v473 = vpop.f32.mrb[0].mxu0
          %v474 = vadd.f32 0.0, %v473
          %v475 = vpop.f32.mrb[0].mxu0
          %476 = vmatprep.mubr.f32.mxu0 0.0
          %477 = vmatmul.mubr.f32.gmra.mrb[0].mxu0 %v383
          %v478 = vpop.f32.mrb[0].mxu0
          %v479 = vadd.f32 0.0, %v478
          %v480 = vpop.f32.mrb[0].mxu0
          %481 = vmatprep.mubr.f32.mxu0 0.0
          %482 = vmatmul.mubr.f32.gmra.mrb[0].mxu0 %v386
          %v483 = vpop.f32.mrb[0].mxu0
          %v484 = vadd.f32 0.0, %v483
          %v485 = vpop.f32.mrb[0].mxu0
          %486 = vmatprep.mubr.f32.mxu0 0.0
          %487 = vmatmul.mubr.f32.gmra.mrb[0].mxu0 %v389
          %v488 = vpop.f32.mrb[0].mxu0
          %v489 = vadd.f32 0.0, %v488
          %v490 = vpop.f32.mrb[0].mxu0
          %491 = vmatprep.mubr.f32.mxu0 0.0
          %492 = vmatmul.mubr.f32.gmra.mrb[0].mxu0 %v392
          %v493 = vpop.f32.mrb[0].mxu0
          %v494 = vadd.f32 0.0, %v493
          %v495 = vpop.f32.mrb[0].mxu0
          %496 = vmatprep.mubr.f32.mxu0 0.0
          %497 = vmatmul.mubr.f32.gmra.mrb[0].mxu0 %v395
          %v498 = vpop.f32.mrb[0].mxu0
          %v499 = vadd.f32 0.0, %v498
          %v500 = vpop.f32.mrb[0].mxu0
          %501 = vmatprep.mubr.f32.mxu0 0.0
          %502 = vmatmul.mubr.f32.gmra.mrb[0].mxu0 %v398
          %v503 = vpop.f32.mrb[0].mxu0
          %v504 = vadd.f32 0.0, %v503
          %v505 = vpop.f32.mrb[0].mxu0
          %506 = vmatprep.mubr.f32.mxu0 0.0
          %507 = vmatmul.mubr.f32.gmra.mrb[0].mxu0 %v401
          %v508 = vpop.f32.mrb[0].mxu0
          %v509 = vadd.f32 0.0, %v508
          %v510 = vpop.f32.mrb[0].mxu0
          %511 = vdwg.mxu0
          %520 = vrot.lane.b32.xlu0 %v474, 127
          %v521 = vpop.permute.xlu0 %520
          %522 = vrot.lane.b32.xlu0 %v479, 127
          %v523 = vpop.permute.xlu0 %522
          %524 = vrot.lane.b32.xlu0 %v484, 127
          %v525 = vpop.permute.xlu0 %524
          %526 = vrot.lane.b32.xlu0 %v489, 127
          %v527 = vpop.permute.xlu0 %526
          %528 = vrot.lane.b32.xlu0 %v494, 127
          %v529 = vpop.permute.xlu0 %528
          %530 = vrot.lane.b32.xlu0 %v499, 127
          %v531 = vpop.permute.xlu0 %530
          %532 = vrot.lane.b32.xlu0 %v504, 127
          %v533 = vpop.permute.xlu0 %532
          %534 = vrot.lane.b32.xlu0 %v509, 127
          %v535 = vpop.permute.xlu0 %534
          %v544 = vadd.f32 %v474, %v521
          %v545 = vadd.f32 %v479, %v523
          %v546 = vadd.f32 %v484, %v525
          %v547 = vadd.f32 %v489, %v527
          %v548 = vadd.f32 %v494, %v529
          %v549 = vadd.f32 %v499, %v531
          %v550 = vadd.f32 %v504, %v533
          %v551 = vadd.f32 %v509, %v535
          %v552 = vsub.f32 0.0, %v544
          %v553 = vsub.f32 0.0, %v545
          %v554 = vsub.f32 0.0, %v546
          %v555 = vsub.f32 0.0, %v547
          %v556 = vsub.f32 0.0, %v548
          %v557 = vsub.f32 0.0, %v549
          %v558 = vsub.f32 0.0, %v550
          %v559 = vsub.f32 0.0, %v551
          %v560 = vmul.f32 %v552, 1.442695
          %v561 = vpow.pop %v560
          %v562 = vmul.f32 %v553, 1.442695
          %v563 = vpow.pop %v562
          %v564 = vmul.f32 %v554, 1.442695
          %v565 = vpow.pop %v564
          %v566 = vmul.f32 %v555, 1.442695
          %v567 = vpow.pop %v566
          %v568 = vmul.f32 %v556, 1.442695
          %v569 = vpow.pop %v568
          %v570 = vmul.f32 %v557, 1.442695
          %v571 = vpow.pop %v570
          %v572 = vmul.f32 %v558, 1.442695
          %v573 = vpow.pop %v572
          %v574 = vmul.f32 %v559, 1.442695
          %v575 = vpow.pop %v574
          %v576 = vadd.f32 %v561, 1.0
          %v577 = vadd.f32 %v563, 1.0
          %v578 = vadd.f32 %v565, 1.0
          %v579 = vadd.f32 %v567, 1.0
          %v580 = vadd.f32 %v569, 1.0
          %v581 = vadd.f32 %v571, 1.0
          %v582 = vadd.f32 %v573, 1.0
          %v583 = vadd.f32 %v575, 1.0
          %v584 = vrcp.pop %v576
          %v585 = vmul.f32 1.0, %v584
          %v586 = vrcp.pop %v577
          %v587 = vmul.f32 1.0, %v586
          %v588 = vrcp.pop %v578
          %v589 = vmul.f32 1.0, %v588
          %v590 = vrcp.pop %v579
          %v591 = vmul.f32 1.0, %v590
          %v592 = vrcp.pop %v580
          %v593 = vmul.f32 1.0, %v592
          %v594 = vrcp.pop %v581
          %v595 = vmul.f32 1.0, %v594
          %v596 = vrcp.pop %v582
          %v597 = vmul.f32 1.0, %v596
          %v598 = vrcp.pop %v583
          %v599 = vmul.f32 1.0, %v598
          %v600 = vrsqrt.pop %v585
          %v601 = vmul.f32 %v585, %v600
          %vm602 = vcmp.eq.f32.partialorder %v585, inf
          %v603 = vsel %vm602, %v585, %v601
          %vm604 = vcmp.eq.f32.partialorder %v585, 0.0
          %v605 = vand.u32 %v585, 2147483648
          %v606 = vsel %vm604, %v605, %v603
          %v607 = vrsqrt.pop %v587
          %v608 = vmul.f32 %v587, %v607
          %vm609 = vcmp.eq.f32.partialorder %v587, inf
          %v610 = vsel %vm609, %v587, %v608
          %vm611 = vcmp.eq.f32.partialorder %v587, 0.0
          %v612 = vand.u32 %v587, 2147483648
          %v613 = vsel %vm611, %v612, %v610
          %v614 = vrsqrt.pop %v589
          %v615 = vmul.f32 %v589, %v614
          %vm616 = vcmp.eq.f32.partialorder %v589, inf
          %v617 = vsel %vm616, %v589, %v615
          %vm618 = vcmp.eq.f32.partialorder %v589, 0.0
          %v619 = vand.u32 %v589, 2147483648
          %v620 = vsel %vm618, %v619, %v617
          %v621 = vrsqrt.pop %v591
          %v622 = vmul.f32 %v591, %v621
          %vm623 = vcmp.eq.f32.partialorder %v591, inf
          %v624 = vsel %vm623, %v591, %v622
          %vm625 = vcmp.eq.f32.partialorder %v591, 0.0
          %v626 = vand.u32 %v591, 2147483648
          %v627 = vsel %vm625, %v626, %v624
          %v628 = vrsqrt.pop %v593
          %v629 = vmul.f32 %v593, %v628
          %vm630 = vcmp.eq.f32.partialorder %v593, inf
          %v631 = vsel %vm630, %v593, %v629
          %vm632 = vcmp.eq.f32.partialorder %v593, 0.0
          %v633 = vand.u32 %v593, 2147483648
          %v634 = vsel %vm632, %v633, %v631
          %v635 = vrsqrt.pop %v595
          %v636 = vmul.f32 %v595, %v635
          %vm637 = vcmp.eq.f32.partialorder %v595, inf
          %v638 = vsel %vm637, %v595, %v636
          %vm639 = vcmp.eq.f32.partialorder %v595, 0.0
          %v640 = vand.u32 %v595, 2147483648
          %v641 = vsel %vm639, %v640, %v638
          %v642 = vrsqrt.pop %v597
          %v643 = vmul.f32 %v597, %v642
          %vm644 = vcmp.eq.f32.partialorder %v597, inf
          %v645 = vsel %vm644, %v597, %v643
          %vm646 = vcmp.eq.f32.partialorder %v597, 0.0
          %v647 = vand.u32 %v597, 2147483648
          %v648 = vsel %vm646, %v647, %v645
          %v649 = vrsqrt.pop %v599
          %v650 = vmul.f32 %v599, %v649
          %vm651 = vcmp.eq.f32.partialorder %v599, inf
          %v652 = vsel %vm651, %v599, %v650
          %vm653 = vcmp.eq.f32.partialorder %v599, 0.0
          %v654 = vand.u32 %v599, 2147483648
          %v655 = vsel %vm653, %v654, %v652
          %vm656 = vcmask 7168
          %657 = vst.msk [vmem:[#allocation3] sm:$0xff] %vm656, %v606
          %658 = vst.msk [vmem:[#allocation3 + $0x8] sm:$0xff] %vm656, %v613
          %659 = vst.msk [vmem:[#allocation3 + $0x10] sm:$0xff] %vm656, %v620
          %660 = vst.msk [vmem:[#allocation3 + $0x18] sm:$0xff] %vm656, %v627
          %661 = vst.msk [vmem:[#allocation3 + $0x20] sm:$0xff] %vm656, %v634
          %662 = vst.msk [vmem:[#allocation3 + $0x28] sm:$0xff] %vm656, %v641
          %663 = vst.msk [vmem:[#allocation3 + $0x30] sm:$0xff] %vm656, %v648
          %664 = vst.msk [vmem:[#allocation3 + $0x38] sm:$0xff] %vm656, %v655
          %v665 = vld [vmem:[%s271] sm:$0xff]
          %v666 = vld [vmem:[%s271 + $0x8] sm:$0xff]
          %s667 = sld [smem:[#allocation4]]
          %v668 = vstv %s667
          %v669 = vmul.f32 %v668, %v665
          %v670 = vmul.f32 %v668, %v666
          %v671 = vadd.f32 %v669, 0.0
          %v672 = vadd.f32 %v670, 0.0
          %s673 = sld [smem:[#allocation4 + $0x1]]
          %v674 = vstv %s673
          %v675 = vmul.f32 %v674, %v665
          %v676 = vmul.f32 %v674, %v666
          %679 = vrot.lane.b32.xlu0 %v675, 127
          %v680 = vpop.permute.xlu0 %679
          %681 = vrot.lane.b32.xlu0 %v676, 127
          %v682 = vpop.permute.xlu0 %681
          %v685 = vadd.f32 %v671, %v680
          %v686 = vadd.f32 %v672, %v682
          %s687 = sld [smem:[#allocation4 + $0x2]]
          %v688 = vstv %s687
          %v689 = vmul.f32 %v688, %v665
          %v690 = vmul.f32 %v688, %v666
          %693 = vrot.lane.b32.xlu0 %v689, 126
          %v694 = vpop.permute.xlu0 %693
          %695 = vrot.lane.b32.xlu0 %v690, 126
          %v696 = vpop.permute.xlu0 %695
          %v699 = vadd.f32 %v685, %v694
          %v700 = vadd.f32 %v686, %v696
          %s701 = sld [smem:[#allocation4 + $0x3]]
          %v702 = vstv %s701
          %v703 = vmul.f32 %v702, %v665
          %v704 = vmul.f32 %v702, %v666
          %707 = vrot.lane.b32.xlu0 %v703, 125
          %v708 = vpop.permute.xlu0 %707
          %709 = vrot.lane.b32.xlu0 %v704, 125
          %v710 = vpop.permute.xlu0 %709
          %v713 = vadd.f32 %v699, %v708
          %v714 = vadd.f32 %v700, %v710
          %s715 = sld [smem:[#allocation4 + $0x4]]
          %v716 = vstv %s715
          %v717 = vmul.f32 %v716, %v665
          %v718 = vmul.f32 %v716, %v666
          %721 = vrot.lane.b32.xlu0 %v717, 124
          %v722 = vpop.permute.xlu0 %721
          %723 = vrot.lane.b32.xlu0 %v718, 124
          %v724 = vpop.permute.xlu0 %723
          %v727 = vadd.f32 %v713, %v722
          %v728 = vadd.f32 %v714, %v724
          %s729 = sld [smem:[#allocation4 + $0x5]]
          %v730 = vstv %s729
          %v731 = vmul.f32 %v730, %v665
          %v732 = vmul.f32 %v730, %v666
          %735 = vrot.lane.b32.xlu0 %v731, 123
          %v736 = vpop.permute.xlu0 %735
          %737 = vrot.lane.b32.xlu0 %v732, 123
          %v738 = vpop.permute.xlu0 %737
          %v741 = vadd.f32 %v727, %v736
          %v742 = vadd.f32 %v728, %v738
          %s743 = sld [smem:[#allocation4 + $0x6]]
          %v744 = vstv %s743
          %v745 = vmul.f32 %v744, %v665
          %v746 = vmul.f32 %v744, %v666
          %749 = vrot.lane.b32.xlu0 %v745, 122
          %v750 = vpop.permute.xlu0 %749
          %751 = vrot.lane.b32.xlu0 %v746, 122
          %v752 = vpop.permute.xlu0 %751
          %v755 = vadd.f32 %v741, %v750
          %v756 = vadd.f32 %v742, %v752
          %v757 = vld [vmem:[%s271 + $0x1] sm:$0xff]
          %v758 = vld [vmem:[%s271 + $0x9] sm:$0xff]
          %s759 = sld [smem:[#allocation4 + $0x7]]
          %v760 = vstv %s759
          %v761 = vmul.f32 %v760, %v757
          %v762 = vmul.f32 %v760, %v758
          %v763 = vadd.f32 %v755, %v761
          %v764 = vadd.f32 %v756, %v762
          %s765 = sld [smem:[#allocation4 + $0x8]]
          %v766 = vstv %s765
          %v767 = vmul.f32 %v766, %v757
          %v768 = vmul.f32 %v766, %v758
          %771 = vrot.lane.b32.xlu0 %v767, 127
          %v772 = vpop.permute.xlu0 %771
          %773 = vrot.lane.b32.xlu0 %v768, 127
          %v774 = vpop.permute.xlu0 %773
          %v777 = vadd.f32 %v763, %v772
          %v778 = vadd.f32 %v764, %v774
          %s779 = sld [smem:[#allocation4 + $0x9]]
          %v780 = vstv %s779
          %v781 = vmul.f32 %v780, %v757
          %v782 = vmul.f32 %v780, %v758
          %785 = vrot.lane.b32.xlu0 %v781, 126
          %v786 = vpop.permute.xlu0 %785
          %787 = vrot.lane.b32.xlu0 %v782, 126
          %v788 = vpop.permute.xlu0 %787
          %v791 = vadd.f32 %v777, %v786
          %v792 = vadd.f32 %v778, %v788
          %s793 = sld [smem:[#allocation4 + $0xa]]
          %v794 = vstv %s793
          %v795 = vmul.f32 %v794, %v757
          %v796 = vmul.f32 %v794, %v758
          %799 = vrot.lane.b32.xlu0 %v795, 125
          %v800 = vpop.permute.xlu0 %799
          %801 = vrot.lane.b32.xlu0 %v796, 125
          %v802 = vpop.permute.xlu0 %801
          %v805 = vadd.f32 %v791, %v800
          %v806 = vadd.f32 %v792, %v802
          %s807 = sld [smem:[#allocation4 + $0xb]]
          %v808 = vstv %s807
          %v809 = vmul.f32 %v808, %v757
          %v810 = vmul.f32 %v808, %v758
          %813 = vrot.lane.b32.xlu0 %v809, 124
          %v814 = vpop.permute.xlu0 %813
          %815 = vrot.lane.b32.xlu0 %v810, 124
          %v816 = vpop.permute.xlu0 %815
          %v819 = vadd.f32 %v805, %v814
          %v820 = vadd.f32 %v806, %v816
          %s821 = sld [smem:[#allocation4 + $0xc]]
          %v822 = vstv %s821
          %v823 = vmul.f32 %v822, %v757
          %v824 = vmul.f32 %v822, %v758
          %827 = vrot.lane.b32.xlu0 %v823, 123
          %v828 = vpop.permute.xlu0 %827
          %829 = vrot.lane.b32.xlu0 %v824, 123
          %v830 = vpop.permute.xlu0 %829
          %v833 = vadd.f32 %v819, %v828
          %v834 = vadd.f32 %v820, %v830
          %s835 = sld [smem:[#allocation4 + $0xd]]
          %v836 = vstv %s835
          %v837 = vmul.f32 %v836, %v757
          %v838 = vmul.f32 %v836, %v758
          %841 = vrot.lane.b32.xlu0 %v837, 122
          %v842 = vpop.permute.xlu0 %841
          %843 = vrot.lane.b32.xlu0 %v838, 122
          %v844 = vpop.permute.xlu0 %843
          %v847 = vadd.f32 %v833, %v842
          %v848 = vadd.f32 %v834, %v844
          %v849 = vld [vmem:[%s271 + $0x2] sm:$0xff]
          %v850 = vld [vmem:[%s271 + $0xa] sm:$0xff]
          %s851 = sld [smem:[#allocation4 + $0xe]]
          %v852 = vstv %s851
          %v853 = vmul.f32 %v852, %v849
          %v854 = vmul.f32 %v852, %v850
          %v855 = vadd.f32 %v847, %v853
          %v856 = vadd.f32 %v848, %v854
          %s857 = sld [smem:[#allocation4 + $0xf]]
          %v858 = vstv %s857
          %v859 = vmul.f32 %v858, %v849
          %v860 = vmul.f32 %v858, %v850
          %863 = vrot.lane.b32.xlu0 %v859, 127
          %v864 = vpop.permute.xlu0 %863
          %865 = vrot.lane.b32.xlu0 %v860, 127
          %v866 = vpop.permute.xlu0 %865
          %v869 = vadd.f32 %v855, %v864
          %v870 = vadd.f32 %v856, %v866
          %s871 = sld [smem:[#allocation4 + $0x10]]
          %v872 = vstv %s871
          %v873 = vmul.f32 %v872, %v849
          %v874 = vmul.f32 %v872, %v850
          %877 = vrot.lane.b32.xlu0 %v873, 126
          %v878 = vpop.permute.xlu0 %877
          %879 = vrot.lane.b32.xlu0 %v874, 126
          %v880 = vpop.permute.xlu0 %879
          %v883 = vadd.f32 %v869, %v878
          %v884 = vadd.f32 %v870, %v880
          %s885 = sld [smem:[#allocation4 + $0x11]]
          %v886 = vstv %s885
          %v887 = vmul.f32 %v886, %v849
          %v888 = vmul.f32 %v886, %v850
          %891 = vrot.lane.b32.xlu0 %v887, 125
          %v892 = vpop.permute.xlu0 %891
          %893 = vrot.lane.b32.xlu0 %v888, 125
          %v894 = vpop.permute.xlu0 %893
          %v897 = vadd.f32 %v883, %v892
          %v898 = vadd.f32 %v884, %v894
          %s899 = sld [smem:[#allocation4 + $0x12]]
          %v900 = vstv %s899
          %v901 = vmul.f32 %v900, %v849
          %v902 = vmul.f32 %v900, %v850
          %905 = vrot.lane.b32.xlu0 %v901, 124
          %v906 = vpop.permute.xlu0 %905
          %907 = vrot.lane.b32.xlu0 %v902, 124
          %v908 = vpop.permute.xlu0 %907
          %v911 = vadd.f32 %v897, %v906
          %v912 = vadd.f32 %v898, %v908
          %s913 = sld [smem:[#allocation4 + $0x13]]
          %v914 = vstv %s913
          %v915 = vmul.f32 %v914, %v849
          %v916 = vmul.f32 %v914, %v850
          %919 = vrot.lane.b32.xlu0 %v915, 123
          %v920 = vpop.permute.xlu0 %919
          %921 = vrot.lane.b32.xlu0 %v916, 123
          %v922 = vpop.permute.xlu0 %921
          %v925 = vadd.f32 %v911, %v920
          %v926 = vadd.f32 %v912, %v922
          %s927 = sld [smem:[#allocation4 + $0x14]]
          %v928 = vstv %s927
          %v929 = vmul.f32 %v928, %v849
          %v930 = vmul.f32 %v928, %v850
          %933 = vrot.lane.b32.xlu0 %v929, 122
          %v934 = vpop.permute.xlu0 %933
          %935 = vrot.lane.b32.xlu0 %v930, 122
          %v936 = vpop.permute.xlu0 %935
          %v939 = vadd.f32 %v925, %v934
          %v940 = vadd.f32 %v926, %v936
          %v941 = vld [vmem:[%s271 + $0x3] sm:$0xff]
          %v942 = vld [vmem:[%s271 + $0xb] sm:$0xff]
          %s943 = sld [smem:[#allocation4 + $0x15]]
          %v944 = vstv %s943
          %v945 = vmul.f32 %v944, %v941
          %v946 = vmul.f32 %v944, %v942
          %v947 = vadd.f32 %v939, %v945
          %v948 = vadd.f32 %v940, %v946
          %s949 = sld [smem:[#allocation4 + $0x16]]
          %v950 = vstv %s949
          %v951 = vmul.f32 %v950, %v941
          %v952 = vmul.f32 %v950, %v942
          %955 = vrot.lane.b32.xlu0 %v951, 127
          %v956 = vpop.permute.xlu0 %955
          %957 = vrot.lane.b32.xlu0 %v952, 127
          %v958 = vpop.permute.xlu0 %957
          %v961 = vadd.f32 %v947, %v956
          %v962 = vadd.f32 %v948, %v958
          %s963 = sld [smem:[#allocation4 + $0x17]]
          %v964 = vstv %s963
          %v965 = vmul.f32 %v964, %v941
          %v966 = vmul.f32 %v964, %v942
          %969 = vrot.lane.b32.xlu0 %v965, 126
          %v970 = vpop.permute.xlu0 %969
          %971 = vrot.lane.b32.xlu0 %v966, 126
          %v972 = vpop.permute.xlu0 %971
          %v975 = vadd.f32 %v961, %v970
          %v976 = vadd.f32 %v962, %v972
          %s977 = sld [smem:[#allocation4 + $0x18]]
          %v978 = vstv %s977
          %v979 = vmul.f32 %v978, %v941
          %v980 = vmul.f32 %v978, %v942
          %983 = vrot.lane.b32.xlu0 %v979, 125
          %v984 = vpop.permute.xlu0 %983
          %985 = vrot.lane.b32.xlu0 %v980, 125
          %v986 = vpop.permute.xlu0 %985
          %v989 = vadd.f32 %v975, %v984
          %v990 = vadd.f32 %v976, %v986
          %s991 = sld [smem:[#allocation4 + $0x19]]
          %v992 = vstv %s991
          %v993 = vmul.f32 %v992, %v941
          %v994 = vmul.f32 %v992, %v942
          %997 = vrot.lane.b32.xlu0 %v993, 124
          %v998 = vpop.permute.xlu0 %997
          %999 = vrot.lane.b32.xlu0 %v994, 124
          %v1000 = vpop.permute.xlu0 %999
          %v1003 = vadd.f32 %v989, %v998
          %v1004 = vadd.f32 %v990, %v1000
          %s1005 = sld [smem:[#allocation4 + $0x1a]]
          %v1006 = vstv %s1005
          %v1007 = vmul.f32 %v1006, %v941
          %v1008 = vmul.f32 %v1006, %v942
          %1011 = vrot.lane.b32.xlu0 %v1007, 123
          %v1012 = vpop.permute.xlu0 %1011
          %1013 = vrot.lane.b32.xlu0 %v1008, 123
          %v1014 = vpop.permute.xlu0 %1013
          %v1017 = vadd.f32 %v1003, %v1012
          %v1018 = vadd.f32 %v1004, %v1014
          %s1019 = sld [smem:[#allocation4 + $0x1b]]
          %v1020 = vstv %s1019
          %v1021 = vmul.f32 %v1020, %v941
          %v1022 = vmul.f32 %v1020, %v942
          %1025 = vrot.lane.b32.xlu0 %v1021, 122
          %v1026 = vpop.permute.xlu0 %1025
          %1027 = vrot.lane.b32.xlu0 %v1022, 122
          %v1028 = vpop.permute.xlu0 %1027
          %v1031 = vadd.f32 %v1017, %v1026
          %v1032 = vadd.f32 %v1018, %v1028
          %v1033 = vld [vmem:[%s271 + $0x4] sm:$0xff]
          %v1034 = vld [vmem:[%s271 + $0xc] sm:$0xff]
          %s1035 = sld [smem:[#allocation4 + $0x1c]]
          %v1036 = vstv %s1035
          %v1037 = vmul.f32 %v1036, %v1033
          %v1038 = vmul.f32 %v1036, %v1034
          %v1039 = vadd.f32 %v1031, %v1037
          %v1040 = vadd.f32 %v1032, %v1038
          %s1041 = sld [smem:[#allocation4 + $0x1d]]
          %v1042 = vstv %s1041
          %v1043 = vmul.f32 %v1042, %v1033
          %v1044 = vmul.f32 %v1042, %v1034
          %1047 = vrot.lane.b32.xlu0 %v1043, 127
          %v1048 = vpop.permute.xlu0 %1047
          %1049 = vrot.lane.b32.xlu0 %v1044, 127
          %v1050 = vpop.permute.xlu0 %1049
          %v1053 = vadd.f32 %v1039, %v1048
          %v1054 = vadd.f32 %v1040, %v1050
          %s1055 = sld [smem:[#allocation4 + $0x1e]]
          %v1056 = vstv %s1055
          %v1057 = vmul.f32 %v1056, %v1033
          %v1058 = vmul.f32 %v1056, %v1034
          %1061 = vrot.lane.b32.xlu0 %v1057, 126
          %v1062 = vpop.permute.xlu0 %1061
          %1063 = vrot.lane.b32.xlu0 %v1058, 126
          %v1064 = vpop.permute.xlu0 %1063
          %v1067 = vadd.f32 %v1053, %v1062
          %v1068 = vadd.f32 %v1054, %v1064
          %s1069 = sld [smem:[#allocation4 + $0x1f]]
          %v1070 = vstv %s1069
          %v1071 = vmul.f32 %v1070, %v1033
          %v1072 = vmul.f32 %v1070, %v1034
          %1075 = vrot.lane.b32.xlu0 %v1071, 125
          %v1076 = vpop.permute.xlu0 %1075
          %1077 = vrot.lane.b32.xlu0 %v1072, 125
          %v1078 = vpop.permute.xlu0 %1077
          %v1081 = vadd.f32 %v1067, %v1076
          %v1082 = vadd.f32 %v1068, %v1078
          %s1083 = sld [smem:[#allocation4 + $0x20]]
          %v1084 = vstv %s1083
          %v1085 = vmul.f32 %v1084, %v1033
          %v1086 = vmul.f32 %v1084, %v1034
          %1089 = vrot.lane.b32.xlu0 %v1085, 124
          %v1090 = vpop.permute.xlu0 %1089
          %1091 = vrot.lane.b32.xlu0 %v1086, 124
          %v1092 = vpop.permute.xlu0 %1091
          %v1095 = vadd.f32 %v1081, %v1090
          %v1096 = vadd.f32 %v1082, %v1092
          %s1097 = sld [smem:[#allocation4 + $0x21]]
          %v1098 = vstv %s1097
          %v1099 = vmul.f32 %v1098, %v1033
          %v1100 = vmul.f32 %v1098, %v1034
          %1103 = vrot.lane.b32.xlu0 %v1099, 123
          %v1104 = vpop.permute.xlu0 %1103
          %1105 = vrot.lane.b32.xlu0 %v1100, 123
          %v1106 = vpop.permute.xlu0 %1105
          %v1109 = vadd.f32 %v1095, %v1104
          %v1110 = vadd.f32 %v1096, %v1106
          %s1111 = sld [smem:[#allocation4 + $0x22]]
          %v1112 = vstv %s1111
          %v1113 = vmul.f32 %v1112, %v1033
          %v1114 = vmul.f32 %v1112, %v1034
          %1117 = vrot.lane.b32.xlu0 %v1113, 122
          %v1118 = vpop.permute.xlu0 %1117
          %1119 = vrot.lane.b32.xlu0 %v1114, 122
          %v1120 = vpop.permute.xlu0 %1119
          %v1123 = vadd.f32 %v1109, %v1118
          %v1124 = vadd.f32 %v1110, %v1120
          %v1125 = vld [vmem:[%s271 + $0x5] sm:$0xff]
          %v1126 = vld [vmem:[%s271 + $0xd] sm:$0xff]
          %s1127 = sld [smem:[#allocation4 + $0x23]]
          %v1128 = vstv %s1127
          %v1129 = vmul.f32 %v1128, %v1125
          %v1130 = vmul.f32 %v1128, %v1126
          %v1131 = vadd.f32 %v1123, %v1129
          %v1132 = vadd.f32 %v1124, %v1130
          %s1133 = sld [smem:[#allocation4 + $0x24]]
          %v1134 = vstv %s1133
          %v1135 = vmul.f32 %v1134, %v1125
          %v1136 = vmul.f32 %v1134, %v1126
          %1139 = vrot.lane.b32.xlu0 %v1135, 127
          %v1140 = vpop.permute.xlu0 %1139
          %1141 = vrot.lane.b32.xlu0 %v1136, 127
          %v1142 = vpop.permute.xlu0 %1141
          %v1145 = vadd.f32 %v1131, %v1140
          %v1146 = vadd.f32 %v1132, %v1142
          %s1147 = sld [smem:[#allocation4 + $0x25]]
          %v1148 = vstv %s1147
          %v1149 = vmul.f32 %v1148, %v1125
          %v1150 = vmul.f32 %v1148, %v1126
          %1153 = vrot.lane.b32.xlu0 %v1149, 126
          %v1154 = vpop.permute.xlu0 %1153
          %1155 = vrot.lane.b32.xlu0 %v1150, 126
          %v1156 = vpop.permute.xlu0 %1155
          %v1159 = vadd.f32 %v1145, %v1154
          %v1160 = vadd.f32 %v1146, %v1156
          %s1161 = sld [smem:[#allocation4 + $0x26]]
          %v1162 = vstv %s1161
          %v1163 = vmul.f32 %v1162, %v1125
          %v1164 = vmul.f32 %v1162, %v1126
          %1167 = vrot.lane.b32.xlu0 %v1163, 125
          %v1168 = vpop.permute.xlu0 %1167
          %1169 = vrot.lane.b32.xlu0 %v1164, 125
          %v1170 = vpop.permute.xlu0 %1169
          %v1173 = vadd.f32 %v1159, %v1168
          %v1174 = vadd.f32 %v1160, %v1170
          %s1175 = sld [smem:[#allocation4 + $0x27]]
          %v1176 = vstv %s1175
          %v1177 = vmul.f32 %v1176, %v1125
          %v1178 = vmul.f32 %v1176, %v1126
          %1181 = vrot.lane.b32.xlu0 %v1177, 124
          %v1182 = vpop.permute.xlu0 %1181
          %1183 = vrot.lane.b32.xlu0 %v1178, 124
          %v1184 = vpop.permute.xlu0 %1183
          %v1187 = vadd.f32 %v1173, %v1182
          %v1188 = vadd.f32 %v1174, %v1184
          %s1189 = sld [smem:[#allocation4 + $0x28]]
          %v1190 = vstv %s1189
          %v1191 = vmul.f32 %v1190, %v1125
          %v1192 = vmul.f32 %v1190, %v1126
          %1195 = vrot.lane.b32.xlu0 %v1191, 123
          %v1196 = vpop.permute.xlu0 %1195
          %1197 = vrot.lane.b32.xlu0 %v1192, 123
          %v1198 = vpop.permute.xlu0 %1197
          %v1201 = vadd.f32 %v1187, %v1196
          %v1202 = vadd.f32 %v1188, %v1198
          %s1203 = sld [smem:[#allocation4 + $0x29]]
          %v1204 = vstv %s1203
          %v1205 = vmul.f32 %v1204, %v1125
          %v1206 = vmul.f32 %v1204, %v1126
          %1209 = vrot.lane.b32.xlu0 %v1205, 122
          %v1210 = vpop.permute.xlu0 %1209
          %1211 = vrot.lane.b32.xlu0 %v1206, 122
          %v1212 = vpop.permute.xlu0 %1211
          %v1215 = vadd.f32 %v1201, %v1210
          %v1216 = vadd.f32 %v1202, %v1212
          %v1217 = vld [vmem:[%s271 + $0x6] sm:$0xff]
          %v1218 = vld [vmem:[%s271 + $0xe] sm:$0xff]
          %s1219 = sld [smem:[#allocation4 + $0x2a]]
          %v1220 = vstv %s1219
          %v1221 = vmul.f32 %v1220, %v1217
          %v1222 = vmul.f32 %v1220, %v1218
          %v1223 = vadd.f32 %v1215, %v1221
          %v1224 = vadd.f32 %v1216, %v1222
          %s1225 = sld [smem:[#allocation4 + $0x2b]]
          %v1226 = vstv %s1225
          %v1227 = vmul.f32 %v1226, %v1217
          %v1228 = vmul.f32 %v1226, %v1218
          %1231 = vrot.lane.b32.xlu0 %v1227, 127
          %v1232 = vpop.permute.xlu0 %1231
          %1233 = vrot.lane.b32.xlu0 %v1228, 127
          %v1234 = vpop.permute.xlu0 %1233
          %v1237 = vadd.f32 %v1223, %v1232
          %v1238 = vadd.f32 %v1224, %v1234
          %s1239 = sld [smem:[#allocation4 + $0x2c]]
          %v1240 = vstv %s1239
          %v1241 = vmul.f32 %v1240, %v1217
          %v1242 = vmul.f32 %v1240, %v1218
          %1245 = vrot.lane.b32.xlu0 %v1241, 126
          %v1246 = vpop.permute.xlu0 %1245
          %1247 = vrot.lane.b32.xlu0 %v1242, 126
          %v1248 = vpop.permute.xlu0 %1247
          %v1251 = vadd.f32 %v1237, %v1246
          %v1252 = vadd.f32 %v1238, %v1248
          %s1253 = sld [smem:[#allocation4 + $0x2d]]
          %v1254 = vstv %s1253
          %v1255 = vmul.f32 %v1254, %v1217
          %v1256 = vmul.f32 %v1254, %v1218
          %1259 = vrot.lane.b32.xlu0 %v1255, 125
          %v1260 = vpop.permute.xlu0 %1259
          %1261 = vrot.lane.b32.xlu0 %v1256, 125
          %v1262 = vpop.permute.xlu0 %1261
          %v1265 = vadd.f32 %v1251, %v1260
          %v1266 = vadd.f32 %v1252, %v1262
          %s1267 = sld [smem:[#allocation4 + $0x2e]]
          %v1268 = vstv %s1267
          %v1269 = vmul.f32 %v1268, %v1217
          %v1270 = vmul.f32 %v1268, %v1218
          %1273 = vrot.lane.b32.xlu0 %v1269, 124
          %v1274 = vpop.permute.xlu0 %1273
          %1275 = vrot.lane.b32.xlu0 %v1270, 124
          %v1276 = vpop.permute.xlu0 %1275
          %v1279 = vadd.f32 %v1265, %v1274
          %v1280 = vadd.f32 %v1266, %v1276
          %s1281 = sld [smem:[#allocation4 + $0x2f]]
          %v1282 = vstv %s1281
          %v1283 = vmul.f32 %v1282, %v1217
          %v1284 = vmul.f32 %v1282, %v1218
          %1287 = vrot.lane.b32.xlu0 %v1283, 123
          %v1288 = vpop.permute.xlu0 %1287
          %1289 = vrot.lane.b32.xlu0 %v1284, 123
          %v1290 = vpop.permute.xlu0 %1289
          %v1293 = vadd.f32 %v1279, %v1288
          %v1294 = vadd.f32 %v1280, %v1290
          %s1295 = sld [smem:[#allocation4 + $0x30]]
          %v1296 = vstv %s1295
          %v1297 = vmul.f32 %v1296, %v1217
          %v1298 = vmul.f32 %v1296, %v1218
          %1301 = vrot.lane.b32.xlu0 %v1297, 122
          %v1302 = vpop.permute.xlu0 %1301
          %1303 = vrot.lane.b32.xlu0 %v1298, 122
          %v1304 = vpop.permute.xlu0 %1303
          %v1307 = vadd.f32 %v1293, %v1302
          %v1308 = vadd.f32 %v1294, %v1304
          %s1309 = scalar_lea.vmem %s271, 24
          %v1310 = vld [vmem:[%s1309] sm:$0xff]
          %v1311 = vld [vmem:[%s1309 + $0x8] sm:$0xff]
          %s1312 = sld [smem:[#allocation4 + $0x31]]
          %v1313 = vstv %s1312
          %v1314 = vmul.f32 %v1313, %v1310
          %v1315 = vmul.f32 %v1313, %v1311
          %v1316 = vadd.f32 %v1307, %v1314
          %v1317 = vadd.f32 %v1308, %v1315
          %s1318 = sld [smem:[#allocation4 + $0x32]]
          %v1319 = vstv %s1318
          %v1320 = vmul.f32 %v1319, %v1310
          %v1321 = vmul.f32 %v1319, %v1311
          %1324 = vrot.lane.b32.xlu0 %v1320, 127
          %v1325 = vpop.permute.xlu0 %1324
          %1326 = vrot.lane.b32.xlu0 %v1321, 127
          %v1327 = vpop.permute.xlu0 %1326
          %v1330 = vadd.f32 %v1316, %v1325
          %v1331 = vadd.f32 %v1317, %v1327
          %s1332 = sld [smem:[#allocation4 + $0x33]]
          %v1333 = vstv %s1332
          %v1334 = vmul.f32 %v1333, %v1310
          %v1335 = vmul.f32 %v1333, %v1311
          %1338 = vrot.lane.b32.xlu0 %v1334, 126
          %v1339 = vpop.permute.xlu0 %1338
          %1340 = vrot.lane.b32.xlu0 %v1335, 126
          %v1341 = vpop.permute.xlu0 %1340
          %v1344 = vadd.f32 %v1330, %v1339
          %v1345 = vadd.f32 %v1331, %v1341
          %s1346 = sld [smem:[#allocation4 + $0x34]]
          %v1347 = vstv %s1346
          %v1348 = vmul.f32 %v1347, %v1310
          %v1349 = vmul.f32 %v1347, %v1311
          %1352 = vrot.lane.b32.xlu0 %v1348, 125
          %v1353 = vpop.permute.xlu0 %1352
          %1354 = vrot.lane.b32.xlu0 %v1349, 125
          %v1355 = vpop.permute.xlu0 %1354
          %v1358 = vadd.f32 %v1344, %v1353
          %v1359 = vadd.f32 %v1345, %v1355
          %s1360 = sld [smem:[#allocation4 + $0x35]]
          %v1361 = vstv %s1360
          %v1362 = vmul.f32 %v1361, %v1310
          %v1363 = vmul.f32 %v1361, %v1311
          %1366 = vrot.lane.b32.xlu0 %v1362, 124
          %v1367 = vpop.permute.xlu0 %1366
          %1368 = vrot.lane.b32.xlu0 %v1363, 124
          %v1369 = vpop.permute.xlu0 %1368
          %v1372 = vadd.f32 %v1358, %v1367
          %v1373 = vadd.f32 %v1359, %v1369
          %s1374 = sld [smem:[#allocation4 + $0x36]]
          %v1375 = vstv %s1374
          %v1376 = vmul.f32 %v1375, %v1310
          %v1377 = vmul.f32 %v1375, %v1311
          %1380 = vrot.lane.b32.xlu0 %v1376, 123
          %v1381 = vpop.permute.xlu0 %1380
          %1382 = vrot.lane.b32.xlu0 %v1377, 123
          %v1383 = vpop.permute.xlu0 %1382
          %v1386 = vadd.f32 %v1372, %v1381
          %v1387 = vadd.f32 %v1373, %v1383
          %s1388 = sld [smem:[#allocation4 + $0x37]]
          %v1389 = vstv %s1388
          %v1390 = vmul.f32 %v1389, %v1310
          %v1391 = vmul.f32 %v1389, %v1311
          %1394 = vrot.lane.b32.xlu0 %v1390, 122
          %v1395 = vpop.permute.xlu0 %1394
          %1396 = vrot.lane.b32.xlu0 %v1391, 122
          %v1397 = vpop.permute.xlu0 %1396
          %v1400 = vadd.f32 %v1386, %v1395
          %v1401 = vadd.f32 %v1387, %v1397
          %v1402 = vld [vmem:[%s1309 + $0x1] sm:$0xff]
          %v1403 = vld [vmem:[%s1309 + $0x9] sm:$0xff]
          %s1404 = sld [smem:[#allocation4 + $0x38]]
          %v1405 = vstv %s1404
          %v1406 = vmul.f32 %v1405, %v1402
          %v1407 = vmul.f32 %v1405, %v1403
          %v1408 = vadd.f32 %v1400, %v1406
          %v1409 = vadd.f32 %v1401, %v1407
          %s1410 = sld [smem:[#allocation4 + $0x39]]
          %v1411 = vstv %s1410
          %v1412 = vmul.f32 %v1411, %v1402
          %v1413 = vmul.f32 %v1411, %v1403
          %1416 = vrot.lane.b32.xlu0 %v1412, 127
          %v1417 = vpop.permute.xlu0 %1416
          %1418 = vrot.lane.b32.xlu0 %v1413, 127
          %v1419 = vpop.permute.xlu0 %1418
          %v1422 = vadd.f32 %v1408, %v1417
          %v1423 = vadd.f32 %v1409, %v1419
          %s1424 = sld [smem:[#allocation4 + $0x3a]]
          %v1425 = vstv %s1424
          %v1426 = vmul.f32 %v1425, %v1402
          %v1427 = vmul.f32 %v1425, %v1403
          %1430 = vrot.lane.b32.xlu0 %v1426, 126
          %v1431 = vpop.permute.xlu0 %1430
          %1432 = vrot.lane.b32.xlu0 %v1427, 126
          %v1433 = vpop.permute.xlu0 %1432
          %v1436 = vadd.f32 %v1422, %v1431
          %v1437 = vadd.f32 %v1423, %v1433
          %s1438 = sld [smem:[#allocation4 + $0x3b]]
          %v1439 = vstv %s1438
          %v1440 = vmul.f32 %v1439, %v1402
          %v1441 = vmul.f32 %v1439, %v1403
          %1444 = vrot.lane.b32.xlu0 %v1440, 125
          %v1445 = vpop.permute.xlu0 %1444
          %1446 = vrot.lane.b32.xlu0 %v1441, 125
          %v1447 = vpop.permute.xlu0 %1446
          %v1450 = vadd.f32 %v1436, %v1445
          %v1451 = vadd.f32 %v1437, %v1447
          %s1452 = sld [smem:[#allocation4 + $0x3c]]
          %v1453 = vstv %s1452
          %v1454 = vmul.f32 %v1453, %v1402
          %v1455 = vmul.f32 %v1453, %v1403
          %1458 = vrot.lane.b32.xlu0 %v1454, 124
          %v1459 = vpop.permute.xlu0 %1458
          %1460 = vrot.lane.b32.xlu0 %v1455, 124
          %v1461 = vpop.permute.xlu0 %1460
          %v1464 = vadd.f32 %v1450, %v1459
          %v1465 = vadd.f32 %v1451, %v1461
          %s1466 = sld [smem:[#allocation4 + $0x3d]]
          %v1467 = vstv %s1466
          %v1468 = vmul.f32 %v1467, %v1402
          %v1469 = vmul.f32 %v1467, %v1403
          %1472 = vrot.lane.b32.xlu0 %v1468, 123
          %v1473 = vpop.permute.xlu0 %1472
          %1474 = vrot.lane.b32.xlu0 %v1469, 123
          %v1475 = vpop.permute.xlu0 %1474
          %v1478 = vadd.f32 %v1464, %v1473
          %v1479 = vadd.f32 %v1465, %v1475
          %s1480 = sld [smem:[#allocation4 + $0x3e]]
          %v1481 = vstv %s1480
          %v1482 = vmul.f32 %v1481, %v1402
          %v1483 = vmul.f32 %v1481, %v1403
          %1486 = vrot.lane.b32.xlu0 %v1482, 122
          %v1487 = vpop.permute.xlu0 %1486
          %1488 = vrot.lane.b32.xlu0 %v1483, 122
          %v1489 = vpop.permute.xlu0 %1488
          %v1492 = vadd.f32 %v1478, %v1487
          %v1493 = vadd.f32 %v1479, %v1489
          %v1494 = vld [vmem:[%s1309 + $0x2] sm:$0xff]
          %v1495 = vld [vmem:[%s1309 + $0xa] sm:$0xff]
          %s1496 = sld [smem:[#allocation4 + $0x3f]]
          %v1497 = vstv %s1496
          %v1498 = vmul.f32 %v1497, %v1494
          %v1499 = vmul.f32 %v1497, %v1495
          %v1500 = vadd.f32 %v1492, %v1498
          %v1501 = vadd.f32 %v1493, %v1499
          %s1502 = sld [smem:[#allocation4 + $0x40]]
          %v1503 = vstv %s1502
          %v1504 = vmul.f32 %v1503, %v1494
          %v1505 = vmul.f32 %v1503, %v1495
          %1508 = vrot.lane.b32.xlu0 %v1504, 127
          %v1509 = vpop.permute.xlu0 %1508
          %1510 = vrot.lane.b32.xlu0 %v1505, 127
          %v1511 = vpop.permute.xlu0 %1510
          %v1514 = vadd.f32 %v1500, %v1509
          %v1515 = vadd.f32 %v1501, %v1511
          %s1516 = sld [smem:[#allocation4 + $0x41]]
          %v1517 = vstv %s1516
          %v1518 = vmul.f32 %v1517, %v1494
          %v1519 = vmul.f32 %v1517, %v1495
          %1522 = vrot.lane.b32.xlu0 %v1518, 126
          %v1523 = vpop.permute.xlu0 %1522
          %1524 = vrot.lane.b32.xlu0 %v1519, 126
          %v1525 = vpop.permute.xlu0 %1524
          %v1528 = vadd.f32 %v1514, %v1523
          %v1529 = vadd.f32 %v1515, %v1525
          %s1530 = sld [smem:[#allocation4 + $0x42]]
          %v1531 = vstv %s1530
          %v1532 = vmul.f32 %v1531, %v1494
          %v1533 = vmul.f32 %v1531, %v1495
          %1536 = vrot.lane.b32.xlu0 %v1532, 125
          %v1537 = vpop.permute.xlu0 %1536
          %1538 = vrot.lane.b32.xlu0 %v1533, 125
          %v1539 = vpop.permute.xlu0 %1538
          %v1542 = vadd.f32 %v1528, %v1537
          %v1543 = vadd.f32 %v1529, %v1539
          %s1544 = sld [smem:[#allocation4 + $0x43]]
          %v1545 = vstv %s1544
          %v1546 = vmul.f32 %v1545, %v1494
          %v1547 = vmul.f32 %v1545, %v1495
          %1550 = vrot.lane.b32.xlu0 %v1546, 124
          %v1551 = vpop.permute.xlu0 %1550
          %1552 = vrot.lane.b32.xlu0 %v1547, 124
          %v1553 = vpop.permute.xlu0 %1552
          %v1556 = vadd.f32 %v1542, %v1551
          %v1557 = vadd.f32 %v1543, %v1553
          %s1558 = sld [smem:[#allocation4 + $0x44]]
          %v1559 = vstv %s1558
          %v1560 = vmul.f32 %v1559, %v1494
          %v1561 = vmul.f32 %v1559, %v1495
          %1564 = vrot.lane.b32.xlu0 %v1560, 123
          %v1565 = vpop.permute.xlu0 %1564
          %1566 = vrot.lane.b32.xlu0 %v1561, 123
          %v1567 = vpop.permute.xlu0 %1566
          %v1570 = vadd.f32 %v1556, %v1565
          %v1571 = vadd.f32 %v1557, %v1567
          %s1572 = sld [smem:[#allocation4 + $0x45]]
          %v1573 = vstv %s1572
          %v1574 = vmul.f32 %v1573, %v1494
          %v1575 = vmul.f32 %v1573, %v1495
          %1578 = vrot.lane.b32.xlu0 %v1574, 122
          %v1579 = vpop.permute.xlu0 %1578
          %1580 = vrot.lane.b32.xlu0 %v1575, 122
          %v1581 = vpop.permute.xlu0 %1580
          %v1584 = vadd.f32 %v1570, %v1579
          %v1585 = vadd.f32 %v1571, %v1581
          %v1586 = vld [vmem:[%s1309 + $0x3] sm:$0xff]
          %v1587 = vld [vmem:[%s1309 + $0xb] sm:$0xff]
          %s1588 = sld [smem:[#allocation4 + $0x46]]
          %v1589 = vstv %s1588
          %v1590 = vmul.f32 %v1589, %v1586
          %v1591 = vmul.f32 %v1589, %v1587
          %v1592 = vadd.f32 %v1584, %v1590
          %v1593 = vadd.f32 %v1585, %v1591
          %s1594 = sld [smem:[#allocation4 + $0x47]]
          %v1595 = vstv %s1594
          %v1596 = vmul.f32 %v1595, %v1586
          %v1597 = vmul.f32 %v1595, %v1587
          %1600 = vrot.lane.b32.xlu0 %v1596, 127
          %v1601 = vpop.permute.xlu0 %1600
          %1602 = vrot.lane.b32.xlu0 %v1597, 127
          %v1603 = vpop.permute.xlu0 %1602
          %v1606 = vadd.f32 %v1592, %v1601
          %v1607 = vadd.f32 %v1593, %v1603
          %s1608 = sld [smem:[#allocation4 + $0x48]]
          %v1609 = vstv %s1608
          %v1610 = vmul.f32 %v1609, %v1586
          %v1611 = vmul.f32 %v1609, %v1587
          %1614 = vrot.lane.b32.xlu0 %v1610, 126
          %v1615 = vpop.permute.xlu0 %1614
          %1616 = vrot.lane.b32.xlu0 %v1611, 126
          %v1617 = vpop.permute.xlu0 %1616
          %v1620 = vadd.f32 %v1606, %v1615
          %v1621 = vadd.f32 %v1607, %v1617
          %s1622 = sld [smem:[#allocation4 + $0x49]]
          %v1623 = vstv %s1622
          %v1624 = vmul.f32 %v1623, %v1586
          %v1625 = vmul.f32 %v1623, %v1587
          %1628 = vrot.lane.b32.xlu0 %v1624, 125
          %v1629 = vpop.permute.xlu0 %1628
          %1630 = vrot.lane.b32.xlu0 %v1625, 125
          %v1631 = vpop.permute.xlu0 %1630
          %v1634 = vadd.f32 %v1620, %v1629
          %v1635 = vadd.f32 %v1621, %v1631
          %s1636 = sld [smem:[#allocation4 + $0x4a]]
          %v1637 = vstv %s1636
          %v1638 = vmul.f32 %v1637, %v1586
          %v1639 = vmul.f32 %v1637, %v1587
          %1642 = vrot.lane.b32.xlu0 %v1638, 124
          %v1643 = vpop.permute.xlu0 %1642
          %1644 = vrot.lane.b32.xlu0 %v1639, 124
          %v1645 = vpop.permute.xlu0 %1644
          %v1648 = vadd.f32 %v1634, %v1643
          %v1649 = vadd.f32 %v1635, %v1645
          %s1650 = sld [smem:[#allocation4 + $0x4b]]
          %v1651 = vstv %s1650
          %v1652 = vmul.f32 %v1651, %v1586
          %v1653 = vmul.f32 %v1651, %v1587
          %1656 = vrot.lane.b32.xlu0 %v1652, 123
          %v1657 = vpop.permute.xlu0 %1656
          %1658 = vrot.lane.b32.xlu0 %v1653, 123
          %v1659 = vpop.permute.xlu0 %1658
          %v1662 = vadd.f32 %v1648, %v1657
          %v1663 = vadd.f32 %v1649, %v1659
          %s1664 = sld [smem:[#allocation4 + $0x4c]]
          %v1665 = vstv %s1664
          %v1666 = vmul.f32 %v1665, %v1586
          %v1667 = vmul.f32 %v1665, %v1587
          %1670 = vrot.lane.b32.xlu0 %v1666, 122
          %v1671 = vpop.permute.xlu0 %1670
          %1672 = vrot.lane.b32.xlu0 %v1667, 122
          %v1673 = vpop.permute.xlu0 %1672
          %v1676 = vadd.f32 %v1662, %v1671
          %v1677 = vadd.f32 %v1663, %v1673
          %v1678 = vld [vmem:[%s1309 + $0x4] sm:$0xff]
          %v1679 = vld [vmem:[%s1309 + $0xc] sm:$0xff]
          %s1680 = sld [smem:[#allocation4 + $0x4d]]
          %v1681 = vstv %s1680
          %v1682 = vmul.f32 %v1681, %v1678
          %v1683 = vmul.f32 %v1681, %v1679
          %v1684 = vadd.f32 %v1676, %v1682
          %v1685 = vadd.f32 %v1677, %v1683
          %s1686 = sld [smem:[#allocation4 + $0x4e]]
          %v1687 = vstv %s1686
          %v1688 = vmul.f32 %v1687, %v1678
          %v1689 = vmul.f32 %v1687, %v1679
          %1692 = vrot.lane.b32.xlu0 %v1688, 127
          %v1693 = vpop.permute.xlu0 %1692
          %1694 = vrot.lane.b32.xlu0 %v1689, 127
          %v1695 = vpop.permute.xlu0 %1694
          %v1698 = vadd.f32 %v1684, %v1693
          %v1699 = vadd.f32 %v1685, %v1695
          %s1700 = sld [smem:[#allocation4 + $0x4f]]
          %v1701 = vstv %s1700
          %v1702 = vmul.f32 %v1701, %v1678
          %v1703 = vmul.f32 %v1701, %v1679
          %1706 = vrot.lane.b32.xlu0 %v1702, 126
          %v1707 = vpop.permute.xlu0 %1706
          %1708 = vrot.lane.b32.xlu0 %v1703, 126
          %v1709 = vpop.permute.xlu0 %1708
          %v1712 = vadd.f32 %v1698, %v1707
          %v1713 = vadd.f32 %v1699, %v1709
          %s1714 = sld [smem:[#allocation4 + $0x50]]
          %v1715 = vstv %s1714
          %v1716 = vmul.f32 %v1715, %v1678
          %v1717 = vmul.f32 %v1715, %v1679
          %1720 = vrot.lane.b32.xlu0 %v1716, 125
          %v1721 = vpop.permute.xlu0 %1720
          %1722 = vrot.lane.b32.xlu0 %v1717, 125
          %v1723 = vpop.permute.xlu0 %1722
          %v1726 = vadd.f32 %v1712, %v1721
          %v1727 = vadd.f32 %v1713, %v1723
          %s1728 = sld [smem:[#allocation4 + $0x51]]
          %v1729 = vstv %s1728
          %v1730 = vmul.f32 %v1729, %v1678
          %v1731 = vmul.f32 %v1729, %v1679
          %1734 = vrot.lane.b32.xlu0 %v1730, 124
          %v1735 = vpop.permute.xlu0 %1734
          %1736 = vrot.lane.b32.xlu0 %v1731, 124
          %v1737 = vpop.permute.xlu0 %1736
          %v1740 = vadd.f32 %v1726, %v1735
          %v1741 = vadd.f32 %v1727, %v1737
          %s1742 = sld [smem:[#allocation4 + $0x52]]
          %v1743 = vstv %s1742
          %v1744 = vmul.f32 %v1743, %v1678
          %v1745 = vmul.f32 %v1743, %v1679
          %1748 = vrot.lane.b32.xlu0 %v1744, 123
          %v1749 = vpop.permute.xlu0 %1748
          %1750 = vrot.lane.b32.xlu0 %v1745, 123
          %v1751 = vpop.permute.xlu0 %1750
          %v1754 = vadd.f32 %v1740, %v1749
          %v1755 = vadd.f32 %v1741, %v1751
          %s1756 = sld [smem:[#allocation4 + $0x53]]
          %v1757 = vstv %s1756
          %v1758 = vmul.f32 %v1757, %v1678
          %v1759 = vmul.f32 %v1757, %v1679
          %1762 = vrot.lane.b32.xlu0 %v1758, 122
          %v1763 = vpop.permute.xlu0 %1762
          %1764 = vrot.lane.b32.xlu0 %v1759, 122
          %v1765 = vpop.permute.xlu0 %1764
          %v1768 = vadd.f32 %v1754, %v1763
          %v1769 = vadd.f32 %v1755, %v1765
          %v1770 = vld [vmem:[%s1309 + $0x5] sm:$0xff]
          %v1771 = vld [vmem:[%s1309 + $0xd] sm:$0xff]
          %s1772 = sld [smem:[#allocation4 + $0x54]]
          %v1773 = vstv %s1772
          %v1774 = vmul.f32 %v1773, %v1770
          %v1775 = vmul.f32 %v1773, %v1771
          %v1776 = vadd.f32 %v1768, %v1774
          %v1777 = vadd.f32 %v1769, %v1775
          %s1778 = sld [smem:[#allocation4 + $0x55]]
          %v1779 = vstv %s1778
          %v1780 = vmul.f32 %v1779, %v1770
          %v1781 = vmul.f32 %v1779, %v1771
          %1784 = vrot.lane.b32.xlu0 %v1780, 127
          %v1785 = vpop.permute.xlu0 %1784
          %1786 = vrot.lane.b32.xlu0 %v1781, 127
          %v1787 = vpop.permute.xlu0 %1786
          %v1790 = vadd.f32 %v1776, %v1785
          %v1791 = vadd.f32 %v1777, %v1787
          %s1792 = sld [smem:[#allocation4 + $0x56]]
          %v1793 = vstv %s1792
          %v1794 = vmul.f32 %v1793, %v1770
          %v1795 = vmul.f32 %v1793, %v1771
          %1798 = vrot.lane.b32.xlu0 %v1794, 126
          %v1799 = vpop.permute.xlu0 %1798
          %1800 = vrot.lane.b32.xlu0 %v1795, 126
          %v1801 = vpop.permute.xlu0 %1800
          %v1804 = vadd.f32 %v1790, %v1799
          %v1805 = vadd.f32 %v1791, %v1801
          %s1806 = sld [smem:[#allocation4 + $0x57]]
          %v1807 = vstv %s1806
          %v1808 = vmul.f32 %v1807, %v1770
          %v1809 = vmul.f32 %v1807, %v1771
          %1812 = vrot.lane.b32.xlu0 %v1808, 125
          %v1813 = vpop.permute.xlu0 %1812
          %1814 = vrot.lane.b32.xlu0 %v1809, 125
          %v1815 = vpop.permute.xlu0 %1814
          %v1818 = vadd.f32 %v1804, %v1813
          %v1819 = vadd.f32 %v1805, %v1815
          %s1820 = sld [smem:[#allocation4 + $0x58]]
          %v1821 = vstv %s1820
          %v1822 = vmul.f32 %v1821, %v1770
          %v1823 = vmul.f32 %v1821, %v1771
          %1826 = vrot.lane.b32.xlu0 %v1822, 124
          %v1827 = vpop.permute.xlu0 %1826
          %1828 = vrot.lane.b32.xlu0 %v1823, 124
          %v1829 = vpop.permute.xlu0 %1828
          %v1832 = vadd.f32 %v1818, %v1827
          %v1833 = vadd.f32 %v1819, %v1829
          %s1834 = sld [smem:[#allocation4 + $0x59]]
          %v1835 = vstv %s1834
          %v1836 = vmul.f32 %v1835, %v1770
          %v1837 = vmul.f32 %v1835, %v1771
          %1840 = vrot.lane.b32.xlu0 %v1836, 123
          %v1841 = vpop.permute.xlu0 %1840
          %1842 = vrot.lane.b32.xlu0 %v1837, 123
          %v1843 = vpop.permute.xlu0 %1842
          %v1846 = vadd.f32 %v1832, %v1841
          %v1847 = vadd.f32 %v1833, %v1843
          %s1848 = sld [smem:[#allocation4 + $0x5a]]
          %v1849 = vstv %s1848
          %v1850 = vmul.f32 %v1849, %v1770
          %v1851 = vmul.f32 %v1849, %v1771
          %1854 = vrot.lane.b32.xlu0 %v1850, 122
          %v1855 = vpop.permute.xlu0 %1854
          %1856 = vrot.lane.b32.xlu0 %v1851, 122
          %v1857 = vpop.permute.xlu0 %1856
          %v1860 = vadd.f32 %v1846, %v1855
          %v1861 = vadd.f32 %v1847, %v1857
          %v1862 = vld [vmem:[%s1309 + $0x6] sm:$0xff]
          %v1863 = vld [vmem:[%s1309 + $0xe] sm:$0xff]
          %s1864 = sld [smem:[#allocation4 + $0x5b]]
          %v1865 = vstv %s1864
          %v1866 = vmul.f32 %v1865, %v1862
          %v1867 = vmul.f32 %v1865, %v1863
          %v1868 = vadd.f32 %v1860, %v1866
          %v1869 = vadd.f32 %v1861, %v1867
          %s1870 = sld [smem:[#allocation4 + $0x5c]]
          %v1871 = vstv %s1870
          %v1872 = vmul.f32 %v1871, %v1862
          %v1873 = vmul.f32 %v1871, %v1863
          %1876 = vrot.lane.b32.xlu0 %v1872, 127
          %v1877 = vpop.permute.xlu0 %1876
          %1878 = vrot.lane.b32.xlu0 %v1873, 127
          %v1879 = vpop.permute.xlu0 %1878
          %v1882 = vadd.f32 %v1868, %v1877
          %v1883 = vadd.f32 %v1869, %v1879
          %s1884 = sld [smem:[#allocation4 + $0x5d]]
          %v1885 = vstv %s1884
          %v1886 = vmul.f32 %v1885, %v1862
          %v1887 = vmul.f32 %v1885, %v1863
          %1890 = vrot.lane.b32.xlu0 %v1886, 126
          %v1891 = vpop.permute.xlu0 %1890
          %1892 = vrot.lane.b32.xlu0 %v1887, 126
          %v1893 = vpop.permute.xlu0 %1892
          %v1896 = vadd.f32 %v1882, %v1891
          %v1897 = vadd.f32 %v1883, %v1893
          %s1898 = sld [smem:[#allocation4 + $0x5e]]
          %v1899 = vstv %s1898
          %v1900 = vmul.f32 %v1899, %v1862
          %v1901 = vmul.f32 %v1899, %v1863
          %1904 = vrot.lane.b32.xlu0 %v1900, 125
          %v1905 = vpop.permute.xlu0 %1904
          %1906 = vrot.lane.b32.xlu0 %v1901, 125
          %v1907 = vpop.permute.xlu0 %1906
          %v1910 = vadd.f32 %v1896, %v1905
          %v1911 = vadd.f32 %v1897, %v1907
          %s1912 = sld [smem:[#allocation4 + $0x5f]]
          %v1913 = vstv %s1912
          %v1914 = vmul.f32 %v1913, %v1862
          %v1915 = vmul.f32 %v1913, %v1863
          %1918 = vrot.lane.b32.xlu0 %v1914, 124
          %v1919 = vpop.permute.xlu0 %1918
          %1920 = vrot.lane.b32.xlu0 %v1915, 124
          %v1921 = vpop.permute.xlu0 %1920
          %v1924 = vadd.f32 %v1910, %v1919
          %v1925 = vadd.f32 %v1911, %v1921
          %s1926 = sld [smem:[#allocation4 + $0x60]]
          %v1927 = vstv %s1926
          %v1928 = vmul.f32 %v1927, %v1862
          %v1929 = vmul.f32 %v1927, %v1863
          %1932 = vrot.lane.b32.xlu0 %v1928, 123
          %v1933 = vpop.permute.xlu0 %1932
          %1934 = vrot.lane.b32.xlu0 %v1929, 123
          %v1935 = vpop.permute.xlu0 %1934
          %v1938 = vadd.f32 %v1924, %v1933
          %v1939 = vadd.f32 %v1925, %v1935
          %s1940 = sld [smem:[#allocation4 + $0x61]]
          %v1941 = vstv %s1940
          %v1942 = vmul.f32 %v1941, %v1862
          %v1943 = vmul.f32 %v1941, %v1863
          %1946 = vrot.lane.b32.xlu0 %v1942, 122
          %v1947 = vpop.permute.xlu0 %1946
          %1948 = vrot.lane.b32.xlu0 %v1943, 122
          %v1949 = vpop.permute.xlu0 %1948
          %v1952 = vadd.f32 %v1938, %v1947
          %v1953 = vadd.f32 %v1939, %v1949
          %v1954 = vsub.f32 0.0, %v1952
          %v1955 = vsub.f32 0.0, %v1953
          %v1956 = vmul.f32 %v1954, 1.442695
          %v1957 = vpow.pop %v1956
          %v1958 = vmul.f32 %v1955, 1.442695
          %v1959 = vpow.pop %v1958
          %v1960 = vadd.f32 %v1957, 1.0
          %v1961 = vadd.f32 %v1959, 1.0
          %v1962 = vrcp.pop %v1960
          %v1963 = vmul.f32 1.0, %v1962
          %v1964 = vrcp.pop %v1961
          %v1965 = vmul.f32 1.0, %v1964
          %v1966 = vrsqrt.pop %v1963
          %v1967 = vmul.f32 %v1963, %v1966
          %vm1968 = vcmp.eq.f32.partialorder %v1963, inf
          %v1969 = vsel %vm1968, %v1963, %v1967
          %vm1970 = vcmp.eq.f32.partialorder %v1963, 0.0
          %v1971 = vand.u32 %v1963, 2147483648
          %v1972 = vsel %vm1970, %v1971, %v1969
          %v1973 = vrsqrt.pop %v1965
          %v1974 = vmul.f32 %v1965, %v1973
          %vm1975 = vcmp.eq.f32.partialorder %v1965, inf
          %v1976 = vsel %vm1975, %v1965, %v1974
          %vm1977 = vcmp.eq.f32.partialorder %v1965, 0.0
          %v1978 = vand.u32 %v1965, 2147483648
          %v1979 = vsel %vm1977, %v1978, %v1976
          %v1980 = vlaneseq
          %vm1981 = vcmp.ge.s32.totalorder %v1980, 0
          %vm1982 = vcmp.lt.s32.totalorder %v1980, 16
          %vm1983 = vmand %vm1981, %vm1982
          %1984 = vst.msk [vmem:[#allocation2] sm:$0x1] %vm1983, %v1972
          %v1987 = vunpack.c.l.s4 1966171168
          %v1988 = vunpack.c.0.s8 %v1987
          %v1989 = vlaneseq
          %v1990 = vshrl.u32 %v1989, 7
          %v1991 = vsub.s32 %v1988, %v1990
          %v1992 = vrot.slane %v1972, %v1991
          %v1993 = vcombine.high %v1992, %v1992
          %v1995 = vunpack.c.l.s4 1966171168
          %v1996 = vunpack.c.0.s8 %v1995
          %v1997 = vlaneseq
          %v1998 = vshrl.u32 %v1997, 7
          %v1999 = vsub.s32 %v1996, %v1998
          %v2000 = vrot.slane %v1992, %v1999
          %v2002 = vunpack.c.l.s4 1966171168
          %v2003 = vunpack.c.0.s8 %v2002
          %v2004 = vlaneseq
          %v2005 = vshrl.u32 %v2004, 7
          %v2006 = vsub.s32 %v2003, %v2005
          %v2007 = vrot.slane %v1993, %v2006
          %2008 = vrot.lane.b32.xlu0 %v2007, 16
          %v2009 = vpop.permute.xlu0 %2008
          %vm2011 = vcmp.ge.s32.totalorder %v1980, 16
          %vm2012 = vcmp.lt.s32.totalorder %v1980, 32
          %vm2013 = vmand %vm2011, %vm2012
          %2014 = vst.msk [vmem:[#allocation2] sm:$0x1] %vm2013, %v2009
          %v2015 = vcombine.high %v2000, %v2000
          %2016 = vrot.lane.b32.xlu0 %v2015, 32
          %v2017 = vpop.permute.xlu0 %2016
          %vm2019 = vcmp.ge.s32.totalorder %v1980, 32
          %vm2020 = vcmp.lt.s32.totalorder %v1980, 48
          %vm2021 = vmand %vm2019, %vm2020
          %2022 = vst.msk [vmem:[#allocation2] sm:$0x1] %vm2021, %v2017
          %v2023 = vcombine.high %v2007, %v2007
          %2024 = vrot.lane.b32.xlu0 %v2023, 48
          %v2025 = vpop.permute.xlu0 %2024
          %vm2027 = vcmp.ge.s32.totalorder %v1980, 48
          %vm2028 = vcmp.lt.s32.totalorder %v1980, 64
          %vm2029 = vmand %vm2027, %vm2028
          %2030 = vst.msk [vmem:[#allocation2] sm:$0x1] %vm2029, %v2025
          %v2031 = vcombine.high %v1972, %v1972
          %v2033 = vunpack.c.l.s4 1966171168
          %v2034 = vunpack.c.0.s8 %v2033
          %v2035 = vlaneseq
          %v2036 = vshrl.u32 %v2035, 7
          %v2037 = vsub.s32 %v2034, %v2036
          %v2038 = vrot.slane %v2031, %v2037
          %v2040 = vunpack.c.l.s4 1966171168
          %v2041 = vunpack.c.0.s8 %v2040
          %v2042 = vlaneseq
          %v2043 = vshrl.u32 %v2042, 7
          %v2044 = vsub.s32 %v2041, %v2043
          %v2045 = vrot.slane %v2038, %v2044
          %2046 = vrot.lane.b32.xlu0 %v2045, 64
          %v2047 = vpop.permute.xlu0 %2046
          %vm2049 = vcmp.ge.s32.totalorder %v1980, 64
          %vm2050 = vcmp.lt.s32.totalorder %v1980, 80
          %vm2051 = vmand %vm2049, %vm2050
          %2052 = vst.msk [vmem:[#allocation2] sm:$0x1] %vm2051, %v2047
          %v2053 = vcombine.high %v2038, %v2038
          %v2055 = vunpack.c.l.s4 1966171168
          %v2056 = vunpack.c.0.s8 %v2055
          %v2057 = vlaneseq
          %v2058 = vshrl.u32 %v2057, 7
          %v2059 = vsub.s32 %v2056, %v2058
          %v2060 = vrot.slane %v2053, %v2059
          %2061 = vrot.lane.b32.xlu0 %v2060, 80
          %v2062 = vpop.permute.xlu0 %2061
          %vm2064 = vcmp.ge.s32.totalorder %v1980, 80
          %vm2065 = vcmp.lt.s32.totalorder %v1980, 96
          %vm2066 = vmand %vm2064, %vm2065
          %2067 = vst.msk [vmem:[#allocation2] sm:$0x1] %vm2066, %v2062
          %v2068 = vcombine.high %v2045, %v2045
          %2069 = vrot.lane.b32.xlu0 %v2068, 96
          %v2070 = vpop.permute.xlu0 %2069
          %vm2072 = vcmp.ge.s32.totalorder %v1980, 96
          %vm2073 = vcmp.lt.s32.totalorder %v1980, 112
          %vm2074 = vmand %vm2072, %vm2073
          %2075 = vst.msk [vmem:[#allocation2] sm:$0x1] %vm2074, %v2070
          %v2076 = vcombine.high %v2060, %v2060
          %2077 = vrot.lane.b32.xlu0 %v2076, 112
          %v2078 = vpop.permute.xlu0 %2077
          %vm2080 = vcmp.ge.s32.totalorder %v1980, 112
          %vm2081 = vcmp.lt.s32.totalorder %v1980, 128
          %vm2082 = vmand %vm2080, %vm2081
          %2083 = vst.msk [vmem:[#allocation2] sm:$0x1] %vm2082, %v2078
          %2084 = vst.msk [vmem:[#allocation2 + $0x1] sm:$0x1] %vm1983, %v1979
          %v2087 = vunpack.c.l.s4 1966171168
          %v2088 = vunpack.c.0.s8 %v2087
          %v2089 = vlaneseq
          %v2090 = vshrl.u32 %v2089, 7
          %v2091 = vsub.s32 %v2088, %v2090
          %v2092 = vrot.slane %v1979, %v2091
          %v2093 = vcombine.high %v2092, %v2092
          %v2095 = vunpack.c.l.s4 1966171168
          %v2096 = vunpack.c.0.s8 %v2095
          %v2097 = vlaneseq
          %v2098 = vshrl.u32 %v2097, 7
          %v2099 = vsub.s32 %v2096, %v2098
          %v2100 = vrot.slane %v2092, %v2099
          %v2102 = vunpack.c.l.s4 1966171168
          %v2103 = vunpack.c.0.s8 %v2102
          %v2104 = vlaneseq
          %v2105 = vshrl.u32 %v2104, 7
          %v2106 = vsub.s32 %v2103, %v2105
          %v2107 = vrot.slane %v2093, %v2106
          %2108 = vrot.lane.b32.xlu0 %v2107, 16
          %v2109 = vpop.permute.xlu0 %2108
          %2111 = vst.msk [vmem:[#allocation2 + $0x1] sm:$0x1] %vm2013, %v2109
          %v2112 = vcombine.high %v2100, %v2100
          %2113 = vrot.lane.b32.xlu0 %v2112, 32
          %v2114 = vpop.permute.xlu0 %2113
          %2116 = vst.msk [vmem:[#allocation2 + $0x1] sm:$0x1] %vm2021, %v2114
          %v2117 = vcombine.high %v2107, %v2107
          %2118 = vrot.lane.b32.xlu0 %v2117, 48
          %v2119 = vpop.permute.xlu0 %2118
          %2121 = vst.msk [vmem:[#allocation2 + $0x1] sm:$0x1] %vm2029, %v2119
          %v2122 = vcombine.high %v1979, %v1979
          %v2124 = vunpack.c.l.s4 1966171168
          %v2125 = vunpack.c.0.s8 %v2124
          %v2126 = vlaneseq
          %v2127 = vshrl.u32 %v2126, 7
          %v2128 = vsub.s32 %v2125, %v2127
          %v2129 = vrot.slane %v2122, %v2128
          %v2131 = vunpack.c.l.s4 1966171168
          %v2132 = vunpack.c.0.s8 %v2131
          %v2133 = vlaneseq
          %v2134 = vshrl.u32 %v2133, 7
          %v2135 = vsub.s32 %v2132, %v2134
          %v2136 = vrot.slane %v2129, %v2135
          %2137 = vrot.lane.b32.xlu0 %v2136, 64
          %v2138 = vpop.permute.xlu0 %2137
          %2140 = vst.msk [vmem:[#allocation2 + $0x1] sm:$0x1] %vm2051, %v2138
          %v2141 = vcombine.high %v2129, %v2129
          %v2143 = vunpack.c.l.s4 1966171168
          %v2144 = vunpack.c.0.s8 %v2143
          %v2145 = vlaneseq
          %v2146 = vshrl.u32 %v2145, 7
          %v2147 = vsub.s32 %v2144, %v2146
          %v2148 = vrot.slane %v2141, %v2147
          %2149 = vrot.lane.b32.xlu0 %v2148, 80
          %v2150 = vpop.permute.xlu0 %2149
          %2152 = vst.msk [vmem:[#allocation2 + $0x1] sm:$0x1] %vm2066, %v2150
          %v2153 = vcombine.high %v2136, %v2136
          %2154 = vrot.lane.b32.xlu0 %v2153, 96
          %v2155 = vpop.permute.xlu0 %2154
          %2157 = vst.msk [vmem:[#allocation2 + $0x1] sm:$0x1] %vm2074, %v2155
          %v2158 = vcombine.high %v2148, %v2148
          %2159 = vrot.lane.b32.xlu0 %v2158, 112
          %v2160 = vpop.permute.xlu0 %2159
          %2162 = vst.msk [vmem:[#allocation2 + $0x1] sm:$0x1] %vm2082, %v2160
        $region48: #{cbam_forward.3} parent=39 // pred_fallthru
          _
        %v2163 = vld [vmem:[#allocation3] sm:$0xff]
        %v2164 = vld [vmem:[#allocation3 + $0x8] sm:$0xff]
        %v2165 = vld [vmem:[#allocation3 + $0x10] sm:$0xff]
        %v2166 = vld [vmem:[#allocation3 + $0x18] sm:$0xff]
        %v2167 = vld [vmem:[#allocation3 + $0x20] sm:$0xff]
        %v2168 = vld [vmem:[#allocation3 + $0x28] sm:$0xff]
        %v2169 = vld [vmem:[#allocation3 + $0x30] sm:$0xff]
        %v2170 = vld [vmem:[#allocation3 + $0x38] sm:$0xff]
        %s2171 = smul.u32 %s22, 2
        %s2172 = scalar_lea.vmem [#allocation2], %s2171
        %v2173 = vld [vmem:[%s2172] sm:$0x3]
        %2175 = vset.pattern.permute.xlu0 0
        %2176 = vperm.xlu0 %2175, %v2163
        %v2177 = vpop.permute.xlu0 %2176
        %2180 = vset.pattern.permute.xlu0 0
        %2181 = vperm.xlu0 %2180, %v2164
        %v2182 = vpop.permute.xlu0 %2181
        %2185 = vset.pattern.permute.xlu0 0
        %2186 = vperm.xlu0 %2185, %v2165
        %v2187 = vpop.permute.xlu0 %2186
        %2190 = vset.pattern.permute.xlu0 0
        %2191 = vperm.xlu0 %2190, %v2166
        %v2192 = vpop.permute.xlu0 %2191
        %2195 = vset.pattern.permute.xlu0 0
        %2196 = vperm.xlu0 %2195, %v2167
        %v2197 = vpop.permute.xlu0 %2196
        %2200 = vset.pattern.permute.xlu0 0
        %2201 = vperm.xlu0 %2200, %v2168
        %v2202 = vpop.permute.xlu0 %2201
        %2205 = vset.pattern.permute.xlu0 0
        %2206 = vperm.xlu0 %2205, %v2169
        %v2207 = vpop.permute.xlu0 %2206
        %2210 = vset.pattern.permute.xlu0 0
        %2211 = vperm.xlu0 %2210, %v2170
        %v2212 = vpop.permute.xlu0 %2211
        %v2215 = vlaneseq
        %v2216 = vshrl.u32 %v2215, 7
        %v2217 = vsub.s32 0, %v2216
        %v2218 = vrot.slane %v2173, %v2217
        %v2219 = vlaneseq
        %v2220 = vshrl.u32 %v2219, 7
        %v2221 = vsub.s32 1, %v2220
        %v2222 = vrot.slane %v2173, %v2221
        %v2225 = vmul.f32 %v2177, %v2218
        %v2226 = vmul.f32 %v2177, %v2222
        %v2227 = vmul.f32 %v2182, %v2218
        %v2228 = vmul.f32 %v2182, %v2222
        %v2229 = vmul.f32 %v2187, %v2218
        %v2230 = vmul.f32 %v2187, %v2222
        %v2231 = vmul.f32 %v2192, %v2218
        %v2232 = vmul.f32 %v2192, %v2222
        %v2233 = vmul.f32 %v2197, %v2218
        %v2234 = vmul.f32 %v2197, %v2222
        %v2235 = vmul.f32 %v2202, %v2218
        %v2236 = vmul.f32 %v2202, %v2222
        %v2237 = vmul.f32 %v2207, %v2218
        %v2238 = vmul.f32 %v2207, %v2222
        %v2239 = vmul.f32 %v2212, %v2218
        %v2240 = vmul.f32 %v2212, %v2222
        %v2241 = vmax.f32 %v2225, 1e-06
        %v2242 = vmax.f32 %v2226, 1e-06
        %v2243 = vmax.f32 %v2227, 1e-06
        %v2244 = vmax.f32 %v2228, 1e-06
        %v2245 = vmax.f32 %v2229, 1e-06
        %v2246 = vmax.f32 %v2230, 1e-06
        %v2247 = vmax.f32 %v2231, 1e-06
        %v2248 = vmax.f32 %v2232, 1e-06
        %v2249 = vmax.f32 %v2233, 1e-06
        %v2250 = vmax.f32 %v2234, 1e-06
        %v2251 = vmax.f32 %v2235, 1e-06
        %v2252 = vmax.f32 %v2236, 1e-06
        %v2253 = vmax.f32 %v2237, 1e-06
        %v2254 = vmax.f32 %v2238, 1e-06
        %v2255 = vmax.f32 %v2239, 1e-06
        %v2256 = vmax.f32 %v2240, 1e-06
        %2257 = vst [vmem:[%s280] sm:$0xff] %v2241
        %2258 = vst [vmem:[%s280 + $0x8] sm:$0xff] %v2242
        %2259 = vst [vmem:[%s280 + $0x10] sm:$0xff] %v2243
        %2260 = vst [vmem:[%s280 + $0x18] sm:$0xff] %v2244
        %2261 = vst [vmem:[%s280 + $0x20] sm:$0xff] %v2245
        %2262 = vst [vmem:[%s280 + $0x28] sm:$0xff] %v2246
        %2263 = vst [vmem:[%s280 + $0x30] sm:$0xff] %v2247
        %2264 = vst [vmem:[%s280 + $0x38] sm:$0xff] %v2248
        %2265 = vst [vmem:[%s280 + $0x40] sm:$0xff] %v2249
        %2266 = vst [vmem:[%s280 + $0x48] sm:$0xff] %v2250
        %2267 = vst [vmem:[%s280 + $0x50] sm:$0xff] %v2251
        %2268 = vst [vmem:[%s280 + $0x58] sm:$0xff] %v2252
        %2269 = vst [vmem:[%s280 + $0x60] sm:$0xff] %v2253
        %2270 = vst [vmem:[%s280 + $0x68] sm:$0xff] %v2254
        %2271 = vst [vmem:[%s280 + $0x70] sm:$0xff] %v2255
        %2272 = vst [vmem:[%s280 + $0x78] sm:$0xff] %v2256
        %s2273 = smul.u32 2, %s22
        %p2274 = scmp.lt.s32.totalorder %s21, 1
        %s2275 = scalar_select %p2274, %s21, 1
        %p2276 = scmp.lt.s32.totalorder %s2273, 1
        %s2277 = scalar_select %p2276, %s2273, 1
        %s2278 = smul.addr %s2275, 16
        %s2279 = sadd.s32 %s2277, %s2278
        %s2280 = smul.addr %s2279, 8
        %s2281 = scalar_lea.vmem %s5, %s2280
        // Predicated region
        $region49: #{cbam_forward.3} parent=39 // pred_check
          %p2282 = pneg %p164
        $region50: #{cbam_forward.3} parent=39 // pred_check_branch
          %2284 = sbr.rel (%p2282) target = $region52
        $region51: #{cbam_forward.3} parent=39 // pred_region
          %s2285 = smul.u32 2, %s22
        $region52: #{cbam_forward.3} parent=39 // pred_fallthru
          _
      $region40: #{cbam_forward.3} parent=5 // pred_fallthru
        _
      %p2286 = scmp.le.s32.totalorder 2, %s12
      // Predicated region
      $region53: #{cbam_forward.3} parent=5 // pred_check
        %p2287 = pneg %p2286
      $region54: #{cbam_forward.3} parent=5 // pred_check_branch
        %2289 = sbr.rel (%p2287) target = $region56
      $region55: #{cbam_forward.3} parent=5 // pred_region
        %s2290 = ssub.s32 %s12, 2
        // Predicated region
        $region57: #{cbam_forward.3} parent=55 // pred_check
          %p2291 = pneg %p170
        $region58: #{cbam_forward.3} parent=55 // pred_check_branch
          %2293 = sbr.rel (%p2291) target = $region60
        $region59: #{cbam_forward.3} parent=55 // pred_region
          %s2294 = smul.u32 2, %s24
          %p2295 = scmp.lt.s32.totalorder %s23, 1
          %s2296 = scalar_select %p2295, %s23, 1
          %p2297 = scmp.lt.s32.totalorder %s2294, 1
          %s2298 = scalar_select %p2297, %s2294, 1
          %s2299 = smul.addr %s2296, 16
          %s2300 = sadd.s32 %s2298, %s2299
          %s2301 = smul.addr %s2300, 8
          %s2302 = scalar_lea.vmem %s5, %s2301
        $region60: #{cbam_forward.3} parent=55 // pred_fallthru
          _
      $region56: #{cbam_forward.3} parent=5 // pred_fallthru
        _
    $region6: #{cbam_forward.3} parent=1 // loop_footer
      %s16 = sadd.s32 1, %s12
    $region7: #{cbam_forward.3} parent=1 // loop_footer_branch
      %11 = sbr.rel target = $region3
    $region8: #{cbam_forward.3} parent=1 // loop_exit
      _
    %2303 = vsyncpa [#allocation5], 1
    %s2304 = scalar_lea.sflag [#allocation5], 1
    %2305 = vsyncpa %s2304, 1

</llo_original>
